<compile_context>
chip_gen: v7x
topology: tpu7x:2x2x1
jax: 0.10.0
libtpu: 0.0.40
codegen_flags: <defaults>
</compile_context>

<pallas_src>
import functools

import jax
import jax.numpy as jnp
from jax.experimental import pallas as pl
from jax.experimental.pallas import tpu as pltpu

L = 512   # self.L
D = 128   # self.D
K = 1     # self.K

_NEG_LARGE = -1e30  # "-inf" for the softmax without any inf arithmetic


def _cdiv(a, b):
    return -(-a // b)


def _round_up(x, m):
    return _cdiv(x, m) * m


def _dattention_kernel(n_rows, tile_n, tiles_per_split, n_classes, fused, act,
                       x_ref, w1_ref, b1_ref, wa1_ref, ba1_ref, wa2_ref, ba2_ref,
                       *rest):
    if fused:
        wc_ref, bc_ref, hz_ref, s_ref, m_sc, l_sc, acc_sc = rest
    else:
        m_out, l_out, acc_out, m_sc, l_sc, acc_sc = rest

    i = pl.program_id(0)          # split index (sharded across TensorCores)
    k = pl.program_id(1)          # tile index inside the split (sequential)

    # ---- init running softmax stats at the start of each split -------------
    @pl.when(k == 0)
    def _init():
        m_sc[...] = jnp.full_like(m_sc, _NEG_LARGE)
        l_sc[...] = jnp.zeros_like(l_sc)
        acc_sc[...] = jnp.zeros_like(acc_sc)

    # Logical (unclamped) tile index -> global row ids for the ragged mask.
    tile_idx = i * tiles_per_split + k
    row = tile_idx * tile_n + jax.lax.broadcasted_iota(jnp.int32, (tile_n, 1), 0)
    valid = row < n_rows                                     # (TN, 1) bool

    # ---- feature = act(x @ W1 + b1)  (bf16 MXU inputs, f32 accumulate) -----
    xt = x_ref[...].astype(jnp.bfloat16)                     # cast in-kernel
    feat = jnp.dot(xt, w1_ref[...], preferred_element_type=jnp.float32)
    feat = feat + b1_ref[...]
    if act == "gelu":
        feat = jax.nn.gelu(feat)
    else:
        feat = jnp.maximum(feat, 0.0)
    # Single f32 mask on feat: keeps padded rows (undefined block padding)
    # finite for both the score path and the p*feat accumulation below.
    feat = jnp.where(valid, feat, 0.0)                       # (TN, L) f32

    # ---- attention score a = tanh(feat @ Wa1 + ba1) @ Wa2 + ba2 ------------
    h = jnp.tanh(
        jnp.dot(feat.astype(jnp.bfloat16), wa1_ref[...],
                preferred_element_type=jnp.float32) + ba1_ref[...])   # (TN, D)
    # K=1 output column: VPU multiply + lane reduce; keeps the MXU free
    # (a (TN,D)x(D,1) MXU pass would spend a full weight load on one column).
    a = jnp.sum(h * wa2_ref[...], axis=-1, keepdims=True) + ba2_ref[...]
    a = jnp.where(valid, a, _NEG_LARGE)                      # (TN, 1)

    # ---- online-softmax update of (m, l, acc) -------------------------------
    m_prev = m_sc[...]                                       # (1, 1)
    m_new = jnp.maximum(m_prev, jnp.max(a, axis=0, keepdims=True))
    alpha = jnp.exp(m_prev - m_new)                          # (1, 1)
    p = jnp.exp(a - m_new)                                   # padded rows -> 0
    l_sc[...] = alpha * l_sc[...] + jnp.sum(p, axis=0, keepdims=True)
    # Weighted feature sum stays a VPU multiply + sublane reduce: much cheaper
    # than the main matmul, and an M=1 MXU matmul would need a (TN,1)->(1,TN)
    # relayout.
    acc_sc[...] = alpha * acc_sc[...] + jnp.sum(p * feat, axis=0, keepdims=True)
    m_sc[...] = m_new

    # ---- finalize on the last tile of this split ----------------------------
    @pl.when(k == pl.num_programs(1) - 1)
    def _finalize():
        if fused:
            # Exact normalization (runs exactly once -> approx recip not worth it).
            Mv = acc_sc[...] * (1.0 / l_sc[...])             # (1, L) == attn @ feat
            logits = jnp.dot(Mv, wc_ref[...],
                             preferred_element_type=jnp.float32) + bc_ref[...]
            hz = jax.nn.sigmoid(logits)                      # (1, C)
            hz_ref[...] = hz
            om = 1.0 - hz
            cols = [om[:, 0:1]]
            for j in range(1, n_classes):
                cols.append(cols[-1] * om[:, j:j + 1])
            s_ref[...] = jnp.concatenate(cols, axis=1)       # cumprod(1 - hz)
        else:
            # Emit per-split partial stats; merged with one log-sum-exp rescale
            # (O(L) work) plus the tiny classifier epilogue in plain JAX.
            m_out[...] = m_sc[...].reshape(1, 1, 1)
            l_out[...] = l_sc[...].reshape(1, 1, 1)
            acc_out[...] = acc_sc[...].reshape(1, 1, L)


def _default_tile_n(input_dim):
    # Working-set budget ~40 MiB so one config also fits v7x's 48 MiB scoped
    # VMEM: double-buffered resident weights (W1 dominates) + per-row stream
    # (double-buffered f32 x tile + f32 feat + bf16 feat copy + f32 h).
    fixed = 2 * (2 * input_dim * L + 2 * L * D) + 4 * (2 * L + 2 * D + 4)
    per_row = 2 * 4 * input_dim + 4 * L + 2 * L + 4 * D
    budget = max(40 * 1024 * 1024 - fixed, 0)
    tn = budget // max(per_row, 1)
    return max(128, min(2048, (tn // 128) * 128))


def _choose_tile_n(n_rows, input_dim, requested):
    if requested is None:
        requested = _default_tile_n(input_dim)
    requested = max(8, int(requested))
    if n_rows <= 128:
        return _round_up(n_rows, 8)          # one small tile covers the whole bag
    # MXU-native alignment: multiples of 128 (covers v5e's 128x128 tiles and
    # bf16 sublane packing); large tiles amortize the ~0.35 us per-step cost.
    tn = min(_round_up(requested, 128), 2048)
    tn = min(tn, _round_up(n_rows, 128))
    return max(128, tn)


def _default_num_splits(num_tiles):
    # v7x has 2 TensorCores per chip; split the bag across them when each core
    # gets at least a couple of tiles.  v5e/v6e are single-core -> 1 split and
    # the fully fused in-kernel epilogue.
    try:
        kind = jax.devices()[0].device_kind.lower()
    except Exception:
        kind = ""
    cores = 2 if "v7" in kind else 1
    return cores if (cores > 1 and num_tiles >= 2 * cores) else 1


def _vmem_limit_bytes():
    try:
        cap = pltpu.get_tpu_info().vmem_capacity_bytes
        return int(min(64 * 1024 * 1024, cap * 3 // 4))
    except Exception:
        return 48 * 1024 * 1024


def dattention_forward(x, params, *, tile_n=None, num_splits=None, act="relu"):
    """Fused DAttention forward. x: (N, input_dim) -> (hazards, S), each (1, n_classes)."""
    n_rows, input_dim = x.shape
    w1, b1 = params["w1"], params["b1"]
    wa1, ba1 = params["wa1"], params["ba1"]
    wa2, ba2 = params["wa2"], params["ba2"]
    wc, bc = params["wc"], params["bc"]
    n_classes = wc.shape[1]

    # Small weights go to the MXU in bf16 (f32 accumulation).  x itself is
    # streamed in its incoming dtype (f32 or bf16) and cast per-tile inside the
    # kernel, avoiding an un-hidden wrapper-side HBM pass over the whole bag.
    w1_bf = w1.astype(jnp.bfloat16)
    wa1_bf = wa1.astype(jnp.bfloat16)
    wa2_row = wa2.reshape(1, D).astype(jnp.float32)   # row layout for the VPU dot

    tile_n = _choose_tile_n(n_rows, input_dim, tile_n)
    num_tiles = _cdiv(n_rows, tile_n)
    if num_splits is None:
        num_splits = _default_num_splits(num_tiles)
    num_splits = max(1, min(int(num_splits), num_tiles))
    tiles_per_split = _cdiv(num_tiles, num_splits)
    grid = (num_splits, tiles_per_split)
    fused = (num_splits == 1)

    def _x_index(i, k):
        # Trailing splits may run a fully out-of-range tile whose rows are all
        # masked; clamp so the DMA stays inside the array.
        return (jnp.minimum(i * tiles_per_split + k, num_tiles - 1), 0)

    def _const_spec(arr):
        nd = arr.ndim
        # Constant index_map -> DMA'd once, kept resident across all tiles.
        return pl.BlockSpec(arr.shape, lambda i, k, _nd=nd: (0,) * _nd)

    kernel = functools.partial(_dattention_kernel, n_rows, tile_n,
                               tiles_per_split, n_classes, fused, act)

    in_arrays = [x, w1_bf, b1, wa1_bf, ba1, wa2_row, ba2]
    in_specs = [pl.BlockSpec((tile_n, input_dim), _x_index),  # x: streamed & double-buffered
                _const_spec(w1_bf), _const_spec(b1),
                _const_spec(wa1_bf), _const_spec(ba1),
                _const_spec(wa2_row), _const_spec(ba2)]

    if fused:
        in_arrays += [wc, bc]
        in_specs += [_const_spec(wc), _const_spec(bc)]
        out_shape = (jax.ShapeDtypeStruct((1, n_classes), jnp.float32),
                     jax.ShapeDtypeStruct((1, n_classes), jnp.float32))
        out_specs = (pl.BlockSpec((1, n_classes), lambda i, k: (0, 0)),
                     pl.BlockSpec((1, n_classes), lambda i, k: (0, 0)))
        out_bytes = 4 * 2 * n_classes
    else:
        out_shape = (jax.ShapeDtypeStruct((num_splits, 1, 1), jnp.float32),
                     jax.ShapeDtypeStruct((num_splits, 1, 1), jnp.float32),
                     jax.ShapeDtypeStruct((num_splits, 1, L), jnp.float32))
        out_specs = (pl.BlockSpec((1, 1, 1), lambda i, k: (i, 0, 0)),
                     pl.BlockSpec((1, 1, 1), lambda i, k: (i, 0, 0)),
                     pl.BlockSpec((1, 1, L), lambda i, k: (i, 0, 0)))
        out_bytes = 4 * num_splits * (L + 2)

    x_bytes = x.size * x.dtype.itemsize
    flops = (2 * n_rows * input_dim * L + 2 * n_rows * L * D
             + 2 * n_rows * D + 2 * L * n_classes)
    transcendentals = n_rows * D + n_rows + n_classes
    bytes_accessed = (x_bytes + 2 * (w1_bf.size + wa1_bf.size)
                      + 4 * (b1.size + ba1.size + wa2_row.size + ba2.size)
                      + (4 * (wc.size + bc.size) if fused else 0)
                      + out_bytes)

    outs = pl.pallas_call(
        kernel,
        grid=grid,
        in_specs=in_specs,
        out_specs=out_specs,
        out_shape=out_shape,
        scratch_shapes=[pltpu.VMEM((1, 1), jnp.float32),    # running max m
                        pltpu.VMEM((1, 1), jnp.float32),    # running denom l
                        pltpu.VMEM((1, L), jnp.float32)],   # running acc = sum(exp(a-m)*feat)
        compiler_params=pltpu.CompilerParams(
            dimension_semantics=("parallel" if num_splits > 1 else "arbitrary",
                                 "arbitrary"),
            vmem_limit_bytes=_vmem_limit_bytes()),
        cost_estimate=pl.CostEstimate(flops=flops,
                                      transcendentals=transcendentals,
                                      bytes_accessed=bytes_accessed),
    )(*in_arrays)

    if fused:
        hazards, S = outs
        return hazards, S

    # Merge the per-split partial online-softmax stats (log-sum-exp rescale)
    # and run the tiny classifier epilogue in plain JAX.
    part_m, part_l, part_acc = outs
    pm = part_m[:, 0, 0]                                     # (num_splits,)
    plv = part_l[:, 0, 0]                                    # (num_splits,)
    pacc = part_acc[:, 0, :]                                 # (num_splits, L)
    m_glob = jnp.max(pm)
    scale = jnp.exp(pm - m_glob)                             # empty splits underflow to 0
    l_tot = jnp.sum(plv * scale)
    acc = jnp.sum(pacc * scale[:, None], axis=0, keepdims=True)   # (1, L)
    Mv = acc / l_tot
    logits = Mv @ wc + bc                                    # (1, C)
    hazards = jax.nn.sigmoid(logits)
    S = jnp.cumprod(1.0 - hazards, axis=1)
    return hazards, S


def init_params(key, input_dim, n_classes):
    # xavier_normal_ for Linear weights, zero biases (initialize_weights).
    def xavier(k, fan_in, fan_out):
        std = (2.0 / (fan_in + fan_out)) ** 0.5
        return std * jax.random.normal(k, (fan_in, fan_out), dtype=jnp.float32)

    k1, k2, k3, k4 = jax.random.split(key, 4)
    return dict(
        w1=xavier(k1, input_dim, L), b1=jnp.zeros((1, L), jnp.float32),
        wa1=xavier(k2, L, D),        ba1=jnp.zeros((1, D), jnp.float32),
        wa2=xavier(k3, D, K),        ba2=jnp.zeros((1, K), jnp.float32),
        wc=xavier(k4, L * K, n_classes), bc=jnp.zeros((1, n_classes), jnp.float32),
    )


def dattention_ref(x, p):
    # pure-JAX f32 reference of the same forward (sanity check)
    feat = jnp.maximum(x @ p["w1"] + p["b1"], 0.0)
    a = jnp.tanh(feat @ p["wa1"] + p["ba1"]) @ p["wa2"] + p["ba2"]
    attn = jax.nn.softmax(a.T, axis=-1)
    M = attn @ feat
    logits = M @ p["wc"] + p["bc"]
    hz = jax.nn.sigmoid(logits)
    S = jnp.cumprod(1.0 - hz, axis=1)
    return hz, S


if __name__ == "__main__":
    key = jax.random.PRNGKey(0)
    k_x, k_p = jax.random.split(key)

    # Small but non-trivial: 200 instances, 64-dim features, 4 survival bins.
    N, input_dim, n_classes = 200, 64, 4
    x = jax.random.normal(k_x, (N, input_dim), dtype=jnp.float32)
    params = init_params(k_p, input_dim, n_classes)
    hz_ref, S_ref = dattention_ref(x, params)

    def _check(hz, S, tag):
        assert hz.shape == (1, n_classes) and S.shape == (1, n_classes), tag
        # bf16 MXU inputs (f32 accumulation) -> loosened tolerance vs f32 ref.
        assert jnp.allclose(hz, hz_ref, rtol=4e-2, atol=3e-3), \
            (tag, float(jnp.max(jnp.abs(hz - hz_ref))))
        assert jnp.allclose(S, S_ref, rtol=4e-2, atol=3e-3), \
            (tag, float(jnp.max(jnp.abs(S - S_ref))))

    # 1) default config (auto tile size / split count).
    hz1, S1 = jax.jit(dattention_forward)(x, params)
    jax.block_until_ready((hz1, S1))
    _check(hz1, S1, "default")

    # 2) multi-tile online-softmax accumulation + ragged tail, fused epilogue.
    fwd2 = jax.jit(functools.partial(dattention_forward, tile_n=128, num_splits=1))
    hz2, S2 = fwd2(x, params)
    jax.block_until_ready((hz2, S2))
    _check(hz2, S2, "tiled")

    # 3) 2-way split (v7x dual-TensorCore path; sequential on 1-core chips)
    #    with the partial-stat merge done in plain JAX.
    fwd3 = jax.jit(functools.partial(dattention_forward, tile_n=128, num_splits=2))
    hz3, S3 = fwd3(x, params)
    jax.block_until_ready((hz3, S3))
    _check(hz3, S3, "split2")

    print("KERNEL_OK")
</pallas_src>

<mosaic_0001>
module attributes {stable_mosaic.version = 11 : i64} {
  func.func @_dattention_kernel(%arg0: i32, %arg1: i32, %arg2: memref<256x64xf32, #tpu.memory_space<vmem>>, %arg3: memref<64x512xbf16, #tpu.memory_space<vmem>>, %arg4: memref<1x512xf32, #tpu.memory_space<vmem>>, %arg5: memref<512x128xbf16, #tpu.memory_space<vmem>>, %arg6: memref<1x128xf32, #tpu.memory_space<vmem>>, %arg7: memref<1x128xf32, #tpu.memory_space<vmem>>, %arg8: memref<1x1xf32, #tpu.memory_space<vmem>>, %arg9: memref<512x4xf32, #tpu.memory_space<vmem>>, %arg10: memref<1x4xf32, #tpu.memory_space<vmem>>, %arg11: memref<1x4xf32, #tpu.memory_space<vmem>>, %arg12: memref<1x4xf32, #tpu.memory_space<vmem>>, %arg13: memref<1x1xf32, #tpu.memory_space<vmem>>, %arg14: memref<1x1xf32, #tpu.memory_space<vmem>>, %arg15: memref<1x512xf32, #tpu.memory_space<vmem>>) attributes {dimension_semantics = [#tpu.dimension_semantics<arbitrary>, #tpu.dimension_semantics<arbitrary>], iteration_bounds = array<i64: 1, 1>, scalar_prefetch = 0 : i64, scratch_operands = 3 : i64, tpu.core_type = #tpu.core_type<tc>, window_params = [{transform_indices = @transform_0, window_bounds = array<i64: 256, 64>}, {pipeline_mode = #tpu.pipeline_mode<synchronous>, transform_indices = @transform_1, window_bounds = array<i64: 64, 512>}, {pipeline_mode = #tpu.pipeline_mode<synchronous>, transform_indices = @transform_2, window_bounds = array<i64: 1, 512>}, {pipeline_mode = #tpu.pipeline_mode<synchronous>, transform_indices = @transform_3, window_bounds = array<i64: 512, 128>}, {pipeline_mode = #tpu.pipeline_mode<synchronous>, transform_indices = @transform_4, window_bounds = array<i64: 1, 128>}, {pipeline_mode = #tpu.pipeline_mode<synchronous>, transform_indices = @transform_5, window_bounds = array<i64: 1, 128>}, {pipeline_mode = #tpu.pipeline_mode<synchronous>, transform_indices = @transform_6, window_bounds = array<i64: 1, 1>}, {pipeline_mode = #tpu.pipeline_mode<synchronous>, transform_indices = @transform_7, window_bounds = array<i64: 512, 4>}, {pipeline_mode = #tpu.pipeline_mode<synchronous>, transform_indices = @transform_8, window_bounds = array<i64: 1, 4>}, {pipeline_mode = #tpu.pipeline_mode<synchronous>, transform_indices = @transform_9, window_bounds = array<i64: 1, 4>}, {pipeline_mode = #tpu.pipeline_mode<synchronous>, transform_indices = @transform_10, window_bounds = array<i64: 1, 4>}]} {
    %c0_i32 = arith.constant 0 : i32
    %0 = arith.cmpi eq, %arg1, %c0_i32 : i32
    %1 = arith.extui %0 : i1 to i32
    %c0_i32_0 = arith.constant 0 : i32
    %2 = arith.cmpi ne, %1, %c0_i32_0 : i32
    scf.if %2 {
      %cst_36 = arith.constant -1.000000e+30 : f32
      %69 = vector.broadcast %cst_36 : f32 to vector<1x1xf32>
      %c0_37 = arith.constant 0 : index
      %c0_38 = arith.constant 0 : index
      %70 = vector.load %arg13[%c0_37, %c0_38] : memref<1x1xf32, #tpu.memory_space<vmem>>, vector<1x1xf32>
      tpu.vector_store %arg13[%c0_37, %c0_38], %69 {strides = array<i32>} : memref<1x1xf32, #tpu.memory_space<vmem>>, vector<1x1xf32>,
      %cst_39 = arith.constant 0.000000e+00 : f32
      %71 = vector.broadcast %cst_39 : f32 to vector<1x1xf32>
      %c0_40 = arith.constant 0 : index
      %c0_41 = arith.constant 0 : index
      %72 = vector.load %arg14[%c0_40, %c0_41] : memref<1x1xf32, #tpu.memory_space<vmem>>, vector<1x1xf32>
      tpu.vector_store %arg14[%c0_40, %c0_41], %71 {strides = array<i32>} : memref<1x1xf32, #tpu.memory_space<vmem>>, vector<1x1xf32>,
      %cst_42 = arith.constant 0.000000e+00 : f32
      %73 = vector.broadcast %cst_42 : f32 to vector<1x512xf32>
      %c0_43 = arith.constant 0 : index
      %c0_44 = arith.constant 0 : index
      %74 = vector.load %arg15[%c0_43, %c0_44] : memref<1x512xf32, #tpu.memory_space<vmem>>, vector<1x512xf32>
      tpu.vector_store %arg15[%c0_43, %c0_44], %73 {strides = array<i32>} : memref<1x512xf32, #tpu.memory_space<vmem>>, vector<1x512xf32>,
    } else {
    }
    %c1_i32 = arith.constant 1 : i32
    %3 = arith.muli %arg0, %c1_i32 : i32
    %4 = arith.addi %3, %arg1 : i32
    %c256_i32 = arith.constant 256 : i32
    %5 = arith.muli %4, %c256_i32 : i32
    %6 = tpu.iota {dimensions = array<i32: 0>} : vector<256x1xi32>
    %7 = vector.broadcast %5 : i32 to vector<256x1xi32>
    %8 = arith.addi %7, %6 : vector<256x1xi32>
    %c200_i32 = arith.constant 200 : i32
    %9 = vector.broadcast %c200_i32 : i32 to vector<256x1xi32>
    %10 = arith.cmpi slt, %8, %9 : vector<256x1xi32>
    %c0 = arith.constant 0 : index
    %c0_1 = arith.constant 0 : index
    %11 = vector.load %arg2[%c0, %c0_1] : memref<256x64xf32, #tpu.memory_space<vmem>>, vector<256x64xf32>
    %12 = arith.truncf %11 : vector<256x64xf32> to vector<256x64xbf16>
    %c0_2 = arith.constant 0 : index
    %c0_3 = arith.constant 0 : index
    %13 = vector.load %arg3[%c0_2, %c0_3] : memref<64x512xbf16, #tpu.memory_space<vmem>>, vector<64x512xbf16>
    %cst = arith.constant dense<0.000000e+00> : vector<256x512xf32>
    %14 = tpu.matmul %12, %13, %cst {dimension_numbers = #tpu.dot_dimension_numbers<[1], [0], [0], [1], [0, 0, 1, 1], [], []>} : vector<256x64xbf16>, vector<64x512xbf16>, vector<256x512xf32> -> vector<256x512xf32>
    %c0_4 = arith.constant 0 : index
    %c0_5 = arith.constant 0 : index
    %15 = vector.load %arg4[%c0_4, %c0_5] : memref<1x512xf32, #tpu.memory_space<vmem>>, vector<1x512xf32>
    %16 = vector.broadcast %15 : vector<1x512xf32> to vector<256x512xf32>
    %17 = arith.addf %14, %16 : vector<256x512xf32>
    %cst_6 = arith.constant 0.000000e+00 : f32
    %18 = vector.broadcast %cst_6 : f32 to vector<256x512xf32>
    %19 = arith.maximumf %17, %18 : vector<256x512xf32>
    %cst_7 = arith.constant 0.000000e+00 : f32
    %20 = vector.shape_cast %10 : vector<256x1xi1> to vector<256x1xi1>
    %21 = vector.broadcast %20 : vector<256x1xi1> to vector<256x512xi1>
    %22 = vector.broadcast %cst_7 : f32 to vector<256x512xf32>
    %23 = arith.select %21, %19, %22 : vector<256x512xi1>, vector<256x512xf32>
    %24 = arith.truncf %23 : vector<256x512xf32> to vector<256x512xbf16>
    %c0_8 = arith.constant 0 : index
    %c0_9 = arith.constant 0 : index
    %25 = vector.load %arg5[%c0_8, %c0_9] : memref<512x128xbf16, #tpu.memory_space<vmem>>, vector<512x128xbf16>
    %cst_10 = arith.constant dense<0.000000e+00> : vector<256x128xf32>
    %26 = tpu.matmul %24, %25, %cst_10 {dimension_numbers = #tpu.dot_dimension_numbers<[1], [0], [0], [1], [0, 0, 1, 1], [], []>} : vector<256x512xbf16>, vector<512x128xbf16>, vector<256x128xf32> -> vector<256x128xf32>
    %c0_11 = arith.constant 0 : index
    %c0_12 = arith.constant 0 : index
    %27 = vector.load %arg6[%c0_11, %c0_12] : memref<1x128xf32, #tpu.memory_space<vmem>>, vector<1x128xf32>
    %28 = vector.broadcast %27 : vector<1x128xf32> to vector<256x128xf32>
    %29 = arith.addf %26, %28 : vector<256x128xf32>
    %30 = math.tanh %29 : vector<256x128xf32>
    %c0_13 = arith.constant 0 : index
    %c0_14 = arith.constant 0 : index
    %31 = vector.load %arg7[%c0_13, %c0_14] : memref<1x128xf32, #tpu.memory_space<vmem>>, vector<1x128xf32>
    %32 = vector.broadcast %31 : vector<1x128xf32> to vector<256x128xf32>
    %33 = arith.mulf %30, %32 : vector<256x128xf32>
    %cst_15 = arith.constant dense<0.000000e+00> : vector<256xf32>
    %34 = vector.multi_reduction <add>, %33, %cst_15 [1] : vector<256x128xf32> to vector<256xf32>
    %35 = vector.shape_cast %34 : vector<256xf32> to vector<256x1xf32>
    %c0_16 = arith.constant 0 : index
    %c0_17 = arith.constant 0 : index
    %36 = vector.load %arg8[%c0_16, %c0_17] : memref<1x1xf32, #tpu.memory_space<vmem>>, vector<1x1xf32>
    %37 = vector.broadcast %36 : vector<1x1xf32> to vector<256x1xf32>
    %38 = arith.addf %35, %37 : vector<256x1xf32>
    %cst_18 = arith.constant -1.000000e+30 : f32
    %39 = vector.broadcast %cst_18 : f32 to vector<256x1xf32>
    %40 = arith.select %10, %38, %39 : vector<256x1xi1>, vector<256x1xf32>
    %c0_19 = arith.constant 0 : index
    %c0_20 = arith.constant 0 : index
    %41 = vector.load %arg13[%c0_19, %c0_20] : memref<1x1xf32, #tpu.memory_space<vmem>>, vector<1x1xf32>
    %cst_21 = arith.constant dense<0xFF800000> : vector<1xf32>
    %42 = vector.multi_reduction <maximumf>, %40, %cst_21 [0] : vector<256x1xf32> to vector<1xf32>
    %43 = vector.shape_cast %42 : vector<1xf32> to vector<1x1xf32>
    %44 = arith.maximumf %41, %43 : vector<1x1xf32>
    %45 = arith.subf %41, %44 : vector<1x1xf32>
    %46 = math.exp %45 : vector<1x1xf32>
    %47 = vector.broadcast %44 : vector<1x1xf32> to vector<256x1xf32>
    %48 = arith.subf %40, %47 : vector<256x1xf32>
    %49 = math.exp %48 : vector<256x1xf32>
    %c0_22 = arith.constant 0 : index
    %c0_23 = arith.constant 0 : index
    %50 = vector.load %arg14[%c0_22, %c0_23] : memref<1x1xf32, #tpu.memory_space<vmem>>, vector<1x1xf32>
    %51 = arith.mulf %46, %50 : vector<1x1xf32>
    %cst_24 = arith.constant dense<0.000000e+00> : vector<1xf32>
    %52 = vector.multi_reduction <add>, %49, %cst_24 [0] : vector<256x1xf32> to vector<1xf32>
    %53 = vector.shape_cast %52 : vector<1xf32> to vector<1x1xf32>
    %54 = arith.addf %51, %53 : vector<1x1xf32>
    %c0_25 = arith.constant 0 : index
    %c0_26 = arith.constant 0 : index
    %55 = vector.load %arg14[%c0_25, %c0_26] : memref<1x1xf32, #tpu.memory_space<vmem>>, vector<1x1xf32>
    tpu.vector_store %arg14[%c0_25, %c0_26], %54 {strides = array<i32>} : memref<1x1xf32, #tpu.memory_space<vmem>>, vector<1x1xf32>,
    %c0_27 = arith.constant 0 : index
    %c0_28 = arith.constant 0 : index
    %56 = vector.load %arg15[%c0_27, %c0_28] : memref<1x512xf32, #tpu.memory_space<vmem>>, vector<1x512xf32>
    %57 = vector.broadcast %46 : vector<1x1xf32> to vector<1x512xf32>
    %58 = arith.mulf %57, %56 : vector<1x512xf32>
    %59 = vector.broadcast %49 : vector<256x1xf32> to vector<256x512xf32>
    %60 = arith.mulf %59, %23 : vector<256x512xf32>
    %cst_29 = arith.constant dense<0.000000e+00> : vector<512xf32>
    %61 = vector.multi_reduction <add>, %60, %cst_29 [0] : vector<256x512xf32> to vector<512xf32>
    %62 = vector.shape_cast %61 : vector<512xf32> to vector<1x512xf32>
    %63 = arith.addf %58, %62 : vector<1x512xf32>
    %c0_30 = arith.constant 0 : index
    %c0_31 = arith.constant 0 : index
    %64 = vector.load %arg15[%c0_30, %c0_31] : memref<1x512xf32, #tpu.memory_space<vmem>>, vector<1x512xf32>
    tpu.vector_store %arg15[%c0_30, %c0_31], %63 {strides = array<i32>} : memref<1x512xf32, #tpu.memory_space<vmem>>, vector<1x512xf32>,
    %c0_32 = arith.constant 0 : index
    %c0_33 = arith.constant 0 : index
    %65 = vector.load %arg13[%c0_32, %c0_33] : memref<1x1xf32, #tpu.memory_space<vmem>>, vector<1x1xf32>
    tpu.vector_store %arg13[%c0_32, %c0_33], %44 {strides = array<i32>} : memref<1x1xf32, #tpu.memory_space<vmem>>, vector<1x1xf32>,
    %c0_i32_34 = arith.constant 0 : i32
    %66 = arith.cmpi eq, %arg1, %c0_i32_34 : i32
    %67 = arith.extui %66 : i1 to i32
    %c0_i32_35 = arith.constant 0 : i32
    %68 = arith.cmpi ne, %67, %c0_i32_35 : i32
    scf.if %68 {
      %c0_36 = arith.constant 0 : index
      %c0_37 = arith.constant 0 : index
      %69 = vector.load %arg15[%c0_36, %c0_37] : memref<1x512xf32, #tpu.memory_space<vmem>>, vector<1x512xf32>
      %c0_38 = arith.constant 0 : index
      %c0_39 = arith.constant 0 : index
      %70 = vector.load %arg14[%c0_38, %c0_39] : memref<1x1xf32, #tpu.memory_space<vmem>>, vector<1x1xf32>
      %cst_40 = arith.constant 1.000000e+00 : f32
      %71 = vector.broadcast %cst_40 : f32 to vector<1x1xf32>
      %72 = arith.divf %71, %70 : vector<1x1xf32>
      %73 = vector.broadcast %72 : vector<1x1xf32> to vector<1x512xf32>
      %74 = arith.mulf %69, %73 : vector<1x512xf32>
      %c0_41 = arith.constant 0 : index
      %c0_42 = arith.constant 0 : index
      %75 = vector.load %arg9[%c0_41, %c0_42] : memref<512x4xf32, #tpu.memory_space<vmem>>, vector<512x4xf32>
      %cst_43 = arith.constant dense<0.000000e+00> : vector<1x4xf32>
      %76 = tpu.matmul %74, %75, %cst_43 {dimension_numbers = #tpu.dot_dimension_numbers<[1], [0], [0], [1], [0, 0, 1, 1], [], []>} : vector<1x512xf32>, vector<512x4xf32>, vector<1x4xf32> -> vector<1x4xf32>
      %c0_44 = arith.constant 0 : index
      %c0_45 = arith.constant 0 : index
      %77 = vector.load %arg10[%c0_44, %c0_45] : memref<1x4xf32, #tpu.memory_space<vmem>>, vector<1x4xf32>
      %78 = arith.addf %76, %77 : vector<1x4xf32>
      %79 = arith.negf %78 : vector<1x4xf32>
      %80 = math.exp %79 : vector<1x4xf32>
      %cst_46 = arith.constant 1.000000e+00 : f32
      %81 = vector.broadcast %cst_46 : f32 to vector<1x4xf32>
      %82 = arith.addf %81, %80 : vector<1x4xf32>
      %83 = arith.divf %81, %82 : vector<1x4xf32>
      %c0_47 = arith.constant 0 : index
      %c0_48 = arith.constant 0 : index
      %84 = vector.load %arg11[%c0_47, %c0_48] : memref<1x4xf32, #tpu.memory_space<vmem>>, vector<1x4xf32>
      tpu.vector_store %arg11[%c0_47, %c0_48], %83 {strides = array<i32>} : memref<1x4xf32, #tpu.memory_space<vmem>>, vector<1x4xf32>,
      %cst_49 = arith.constant 1.000000e+00 : f32
      %85 = vector.broadcast %cst_49 : f32 to vector<1x4xf32>
      %86 = arith.subf %85, %83 : vector<1x4xf32>
      %87 = vector.extract_strided_slice %86 {offsets = [0, 0], sizes = [1, 1], strides = [1, 1]} : vector<1x4xf32> to vector<1x1xf32>
      %88 = vector.extract_strided_slice %86 {offsets = [0, 1], sizes = [1, 1], strides = [1, 1]} : vector<1x4xf32> to vector<1x1xf32>
      %89 = arith.mulf %87, %88 : vector<1x1xf32>
      %90 = vector.extract_strided_slice %86 {offsets = [0, 2], sizes = [1, 1], strides = [1, 1]} : vector<1x4xf32> to vector<1x1xf32>
      %91 = arith.mulf %89, %90 : vector<1x1xf32>
      %92 = vector.extract_strided_slice %86 {offsets = [0, 3], sizes = [1, 1], strides = [1, 1]} : vector<1x4xf32> to vector<1x1xf32>
      %93 = arith.mulf %91, %92 : vector<1x1xf32>
      %94 = tpu.concatenate %87, %89, %91, %93 in 1 : vector<1x1xf32>, vector<1x1xf32>, vector<1x1xf32>, vector<1x1xf32> -> vector<1x4xf32>
      %c0_50 = arith.constant 0 : index
      %c0_51 = arith.constant 0 : index
      %95 = vector.load %arg12[%c0_50, %c0_51] : memref<1x4xf32, #tpu.memory_space<vmem>>, vector<1x4xf32>
      tpu.vector_store %arg12[%c0_50, %c0_51], %94 {strides = array<i32>} : memref<1x4xf32, #tpu.memory_space<vmem>>, vector<1x4xf32>,
    } else {
    }
    return
  }
  func.func @transform_0(%arg0: i32, %arg1: i32) -> (i32, i32) {
    %c1_i32 = arith.constant 1 : i32
    %0 = arith.muli %arg0, %c1_i32 : i32
    %1 = arith.addi %0, %arg1 : i32
    %c0_i32 = arith.constant 0 : i32
    %2 = arith.minsi %1, %c0_i32 : i32
    %c0_i32_0 = arith.constant 0 : i32
    %c0_i32_1 = arith.constant 0 : i32
    return %2, %c0_i32_0 : i32, i32
  }
  func.func @transform_1(%arg0: i32, %arg1: i32) -> (i32, i32) {
    %c0_i32 = arith.constant 0 : i32
    %c0_i32_0 = arith.constant 0 : i32
    %c0_i32_1 = arith.constant 0 : i32
    return %c0_i32, %c0_i32_0 : i32, i32
  }
  func.func @transform_2(%arg0: i32, %arg1: i32) -> (i32, i32) {
    %c0_i32 = arith.constant 0 : i32
    %c0_i32_0 = arith.constant 0 : i32
    %c0_i32_1 = arith.constant 0 : i32
    return %c0_i32, %c0_i32_0 : i32, i32
  }
  func.func @transform_3(%arg0: i32, %arg1: i32) -> (i32, i32) {
    %c0_i32 = arith.constant 0 : i32
    %c0_i32_0 = arith.constant 0 : i32
    %c0_i32_1 = arith.constant 0 : i32
    return %c0_i32, %c0_i32_0 : i32, i32
  }
  func.func @transform_4(%arg0: i32, %arg1: i32) -> (i32, i32) {
    %c0_i32 = arith.constant 0 : i32
    %c0_i32_0 = arith.constant 0 : i32
    %c0_i32_1 = arith.constant 0 : i32
    return %c0_i32, %c0_i32_0 : i32, i32
  }
  func.func @transform_5(%arg0: i32, %arg1: i32) -> (i32, i32) {
    %c0_i32 = arith.constant 0 : i32
    %c0_i32_0 = arith.constant 0 : i32
    %c0_i32_1 = arith.constant 0 : i32
    return %c0_i32, %c0_i32_0 : i32, i32
  }
  func.func @transform_6(%arg0: i32, %arg1: i32) -> (i32, i32) {
    %c0_i32 = arith.constant 0 : i32
    %c0_i32_0 = arith.constant 0 : i32
    %c0_i32_1 = arith.constant 0 : i32
    return %c0_i32, %c0_i32_0 : i32, i32
  }
  func.func @transform_7(%arg0: i32, %arg1: i32) -> (i32, i32) {
    %c0_i32 = arith.constant 0 : i32
    %c0_i32_0 = arith.constant 0 : i32
    %c0_i32_1 = arith.constant 0 : i32
    return %c0_i32, %c0_i32_0 : i32, i32
  }
  func.func @transform_8(%arg0: i32, %arg1: i32) -> (i32, i32) {
    %c0_i32 = arith.constant 0 : i32
    %c0_i32_0 = arith.constant 0 : i32
    %c0_i32_1 = arith.constant 0 : i32
    return %c0_i32, %c0_i32_0 : i32, i32
  }
  func.func @transform_9(%arg0: i32, %arg1: i32) -> (i32, i32) {
    %c0_i32 = arith.constant 0 : i32
    %c0_i32_0 = arith.constant 0 : i32
    %c0_i32_1 = arith.constant 0 : i32
    return %c0_i32, %c0_i32_0 : i32, i32
  }
  func.func @transform_10(%arg0: i32, %arg1: i32) -> (i32, i32) {
    %c0_i32 = arith.constant 0 : i32
    %c0_i32_0 = arith.constant 0 : i32
    %c0_i32_1 = arith.constant 0 : i32
    return %c0_i32, %c0_i32_0 : i32, i32
  }
}

</mosaic_0001>

<llo_original>
// kernel: dattention_forward.1
$region0: #{dattention_forward.1}
  #allocation0 [shape = 'u32[]', space=smem, size = 0x4, offset = 0x4, fixed_abs, tag = 'smem constant byte address 0x4 - core index']
  #allocation1 [shape = 'u32[144,128]{1,0:T(1,128)}', space=vmem, size = 0x12000, scoped, tag = 'internal scratch']
  #allocation2 [shape = 'f32[1,1]{1,0:T(1,128)}', space=vmem, size = 0x200, scoped, tag = 'scratch operand']
  #allocation3 [shape = 'f32[1,1]{1,0:T(1,128)}', space=vmem, size = 0x200, scoped, tag = 'scratch operand']
  #allocation4 [shape = 'f32[1,512]{1,0:T(1,128)}', space=vmem, size = 0x800, scoped, tag = 'scratch operand']
  #allocation5 [shape = 'f32[1,1]{1,0:T(1,128)S(1)}', space=vmem, size = 0x200, scoped, tag = 'scoped memory for dattention_forward.1']
  %s0 = inlined_call_operand.vmem [shape: f32[200,64], index: 0, kind: input, shape index: {}]
  %s1 = inlined_call_operand.vmem [shape: bf16[64,512], index: 1, kind: input, shape index: {}]
  %s2 = inlined_call_operand.vmem [shape: f32[1,512], index: 2, kind: input, shape index: {}]
  %s3 = inlined_call_operand.vmem [shape: bf16[512,128], index: 3, kind: input, shape index: {}]
  %s4 = inlined_call_operand.vmem [shape: f32[1,128], index: 4, kind: input, shape index: {}]
  %s5 = inlined_call_operand.vmem [shape: f32[1,128], index: 5, kind: input, shape index: {}]
  %s6 = inlined_call_operand.<no memory space> [shape: f32[1,1], index: 6, kind: input, shape index: {}]
  %s7 = inlined_call_operand.vmem [shape: f32[512,4], index: 7, kind: input, shape index: {}]
  %s8 = inlined_call_operand.vmem [shape: f32[1,4], index: 8, kind: input, shape index: {}]
  %s9 = inlined_call_operand.hbm [shape: f32[1,4], index: 9, kind: output, shape index: {0}]
  %s10 = inlined_call_operand.hbm [shape: f32[1,4], index: 10, kind: output, shape index: {1}]
  %11 = xla_tuple %s9, %s10
  %s12 = sld [smem:[#allocation0]]
  $region62: #{dattention_forward.1} parent=0
    _
  %s14 = ssub.s32 1, %s12
  %s15 = scalar_select 0, %s14, %s12
  %v16 = vstv %s6
  %17 = vst [vmem:[#allocation5] sm:$0x1] %v16
  $region1: #{dattention_forward.1} parent=0
    #allocation6 [shape = 'u8[512]{0}', space=vmem, size = 0x400, scoped, tag = 'output window, operand 0, single buffered']
    #allocation7 [shape = 's32[1]{0}', space=sflag, size = 0x4, scoped, tag = 'scoped memory for dattention_forward.1']
    #allocation8 [shape = 'u8[512]{0}', space=vmem, size = 0x400, scoped, tag = 'output window, operand 1, single buffered']
    #allocation9 [shape = 's32[1]{0}', space=sflag, size = 0x4, scoped, tag = 'scoped memory for dattention_forward.1']
    %18 = vsyncpa [#allocation7], 0
    %19 = vsyncpa [#allocation9], 0
    // Predicated region
    $region2: #{dattention_forward.1} parent=1 // pred_check
      _
    $region3: #{dattention_forward.1} parent=1 // pred_check_branch
      %21 = sbr.rel (0) target = $region5
    $region4: #{dattention_forward.1} parent=1 // pred_region
      %s22 = sadd.s32 0, 0
      %p23 = scmp.lt.s32.totalorder %s22, 0
      %s24 = scalar_select %p23, %s22, 0
      %s25 = smul.u32 32, %s24
      %s26 = ssub.s32 25, %s25
      %s27 = smul.u32 128, %s26
      %p28 = scmp.lt.s32.totalorder %s25, 24
      %s29 = scalar_select %p28, %s25, 24
      %s30 = smul.addr %s29, 8
      %s31 = scalar_lea.vmem %s0, %s30
      %s32 = sadd.s32 0, 0
      %p33 = scmp.lt.s32.totalorder %s32, 0
      %s34 = scalar_select %p33, %s32, 0
      %s35 = smul.u32 32, %s34
      %s36 = ssub.s32 25, %s35
      %s37 = smul.u32 128, %s36
    $region5: #{dattention_forward.1} parent=1 // pred_fallthru
      _
    // Predicated region
    $region6: #{dattention_forward.1} parent=1 // pred_check
      _
    $region7: #{dattention_forward.1} parent=1 // pred_check_branch
      %39 = sbr.rel (0) target = $region9
    $region8: #{dattention_forward.1} parent=1 // pred_region
      _
    $region9: #{dattention_forward.1} parent=1 // pred_fallthru
      _
    // Predicated region
    $region10: #{dattention_forward.1} parent=1 // pred_check
      _
    $region11: #{dattention_forward.1} parent=1 // pred_check_branch
      %41 = sbr.rel (0) target = $region13
    $region12: #{dattention_forward.1} parent=1 // pred_region
      _
    $region13: #{dattention_forward.1} parent=1 // pred_fallthru
      _
    // Predicated region
    $region14: #{dattention_forward.1} parent=1 // pred_check
      _
    $region15: #{dattention_forward.1} parent=1 // pred_check_branch
      %43 = sbr.rel (0) target = $region17
    $region16: #{dattention_forward.1} parent=1 // pred_region
      _
    $region17: #{dattention_forward.1} parent=1 // pred_fallthru
      _
    // Predicated region
    $region18: #{dattention_forward.1} parent=1 // pred_check
      _
    $region19: #{dattention_forward.1} parent=1 // pred_check_branch
      %45 = sbr.rel (0) target = $region21
    $region20: #{dattention_forward.1} parent=1 // pred_region
      _
    $region21: #{dattention_forward.1} parent=1 // pred_fallthru
      _
    // Predicated region
    $region22: #{dattention_forward.1} parent=1 // pred_check
      _
    $region23: #{dattention_forward.1} parent=1 // pred_check_branch
      %47 = sbr.rel (0) target = $region25
    $region24: #{dattention_forward.1} parent=1 // pred_region
      _
    $region25: #{dattention_forward.1} parent=1 // pred_fallthru
      _
    // Predicated region
    $region26: #{dattention_forward.1} parent=1 // pred_check
      _
    $region27: #{dattention_forward.1} parent=1 // pred_check_branch
      %49 = sbr.rel (0) target = $region29
    $region28: #{dattention_forward.1} parent=1 // pred_region
      _
    $region29: #{dattention_forward.1} parent=1 // pred_fallthru
      _
    // Predicated region
    $region30: #{dattention_forward.1} parent=1 // pred_check
      _
    $region31: #{dattention_forward.1} parent=1 // pred_check_branch
      %51 = sbr.rel (0) target = $region33
    $region32: #{dattention_forward.1} parent=1 // pred_region
      _
    $region33: #{dattention_forward.1} parent=1 // pred_fallthru
      _
    // Predicated region
    $region34: #{dattention_forward.1} parent=1 // pred_check
      _
    $region35: #{dattention_forward.1} parent=1 // pred_check_branch
      %53 = sbr.rel (0) target = $region37
    $region36: #{dattention_forward.1} parent=1 // pred_region
      _
    $region37: #{dattention_forward.1} parent=1 // pred_fallthru
      _
    %s54 = sadd.s32 0, 0
    %p55 = scmp.lt.s32.totalorder %s54, 0
    %s56 = scalar_select %p55, %s54, 0
    %s57 = smul.u32 32, %s56
    %s58 = ssub.s32 25, %s57
    %s59 = smul.u32 128, %s58
    %p60 = scmp.lt.s32.totalorder %s57, 24
    %s61 = scalar_select %p60, %s57, 24
    %s62 = smul.addr %s61, 8
    %s63 = scalar_lea.vmem %s0, %s62
    %s64 = sadd.s32 0, 0
    %p65 = scmp.lt.s32.totalorder %s64, 0
    %s66 = scalar_select %p65, %s64, 0
    %s67 = smul.u32 32, %s66
    %s68 = ssub.s32 25, %s67
    %s69 = smul.u32 128, %s68
    %p70 = scmp.lt.s32.totalorder %s67, 24
    %s71 = scalar_select %p70, %s67, 24
    %s72 = smul.addr %s71, 8
    %s73 = scalar_lea.vmem %s0, %s72
    %s74 = sadd.s32 0, 0
    %p75 = scmp.lt.s32.totalorder %s74, 0
    %s76 = scalar_select %p75, %s74, 0
    %s77 = smul.u32 32, %s76
    %s78 = ssub.s32 25, %s77
    %s79 = smul.u32 128, %s78
    %p81 = scmp.eq.s32.totalorder 0, 0
    // Predicated region
    $region38: #{dattention_forward.1} parent=1 // pred_check
      %p82 = pneg %p81
    $region39: #{dattention_forward.1} parent=1 // pred_check_branch
      %84 = sbr.rel (%p82) target = $region41
    $region40: #{dattention_forward.1} parent=1 // pred_region
      %vm85 = vcmask 0
      %86 = vst.msk [vmem:[#allocation2] sm:$0x1] %vm85, -1e+30
      %87 = vst.msk [vmem:[#allocation3] sm:$0x1] %vm85, 0.0
      %v88 = vlaneseq
      %vm89 = vcmp.ge.s32.totalorder %v88, 0
      %vm90 = vcmp.lt.s32.totalorder %v88, 512
      %vm91 = vmand %vm89, %vm90
      %92 = vst.msk [vmem:[#allocation4] sm:$0xf] %vm91, 0.0
    $region41: #{dattention_forward.1} parent=1 // pred_fallthru
      _
    %s93 = sadd.s32 0, 0
    %s94 = smul.u32 %s93, 256
    %v95 = vlaneseq
    %v96 = vshrl.u32 %v95, 7
    %v97 = vadd.s32 %v96, 8
    %v98 = vadd.s32 %v96, 16
    %v99 = vadd.s32 %v96, 24
    %v100 = vadd.s32 %v96, 32
    %v101 = vadd.s32 %v96, 40
    %v102 = vadd.s32 %v96, 48
    %v103 = vadd.s32 %v96, 56
    %v104 = vadd.s32 %v96, 64
    %v105 = vadd.s32 %v96, 72
    %v106 = vadd.s32 %v96, 80
    %v107 = vadd.s32 %v96, 88
    %v108 = vadd.s32 %v96, 96
    %v109 = vadd.s32 %v96, 104
    %v110 = vadd.s32 %v96, 112
    %v111 = vadd.s32 %v96, 120
    %v112 = vadd.s32 %v96, 128
    %v113 = vadd.s32 %v96, 136
    %v114 = vadd.s32 %v96, 144
    %v115 = vadd.s32 %v96, 152
    %v116 = vadd.s32 %v96, 160
    %v117 = vadd.s32 %v96, 168
    %v118 = vadd.s32 %v96, 176
    %v119 = vadd.s32 %v96, 184
    %v120 = vadd.s32 %v96, 192
    %v121 = vadd.s32 %v96, 200
    %v122 = vadd.s32 %v96, 208
    %v123 = vadd.s32 %v96, 216
    %v124 = vadd.s32 %v96, 224
    %v125 = vadd.s32 %v96, 232
    %v126 = vadd.s32 %v96, 240
    %v127 = vadd.s32 %v96, 248
    %v128 = vstv %s94
    %v129 = vadd.s32 %v128, %v96
    %v130 = vadd.s32 %v128, %v97
    %v131 = vadd.s32 %v128, %v98
    %v132 = vadd.s32 %v128, %v99
    %v133 = vadd.s32 %v128, %v100
    %v134 = vadd.s32 %v128, %v101
    %v135 = vadd.s32 %v128, %v102
    %v136 = vadd.s32 %v128, %v103
    %v137 = vadd.s32 %v128, %v104
    %v138 = vadd.s32 %v128, %v105
    %v139 = vadd.s32 %v128, %v106
    %v140 = vadd.s32 %v128, %v107
    %v141 = vadd.s32 %v128, %v108
    %v142 = vadd.s32 %v128, %v109
    %v143 = vadd.s32 %v128, %v110
    %v144 = vadd.s32 %v128, %v111
    %v145 = vadd.s32 %v128, %v112
    %v146 = vadd.s32 %v128, %v113
    %v147 = vadd.s32 %v128, %v114
    %v148 = vadd.s32 %v128, %v115
    %v149 = vadd.s32 %v128, %v116
    %v150 = vadd.s32 %v128, %v117
    %v151 = vadd.s32 %v128, %v118
    %v152 = vadd.s32 %v128, %v119
    %v153 = vadd.s32 %v128, %v120
    %v154 = vadd.s32 %v128, %v121
    %v155 = vadd.s32 %v128, %v122
    %v156 = vadd.s32 %v128, %v123
    %v157 = vadd.s32 %v128, %v124
    %v158 = vadd.s32 %v128, %v125
    %v159 = vadd.s32 %v128, %v126
    %v160 = vadd.s32 %v128, %v127
    %vm161 = vcmp.lt.s32.totalorder %v129, 200
    %vm162 = vcmp.lt.s32.totalorder %v130, 200
    %vm163 = vcmp.lt.s32.totalorder %v131, 200
    %vm164 = vcmp.lt.s32.totalorder %v132, 200
    %vm165 = vcmp.lt.s32.totalorder %v133, 200
    %vm166 = vcmp.lt.s32.totalorder %v134, 200
    %vm167 = vcmp.lt.s32.totalorder %v135, 200
    %vm168 = vcmp.lt.s32.totalorder %v136, 200
    %vm169 = vcmp.lt.s32.totalorder %v137, 200
    %vm170 = vcmp.lt.s32.totalorder %v138, 200
    %vm171 = vcmp.lt.s32.totalorder %v139, 200
    %vm172 = vcmp.lt.s32.totalorder %v140, 200
    %vm173 = vcmp.lt.s32.totalorder %v141, 200
    %vm174 = vcmp.lt.s32.totalorder %v142, 200
    %vm175 = vcmp.lt.s32.totalorder %v143, 200
    %vm176 = vcmp.lt.s32.totalorder %v144, 200
    %vm177 = vcmp.lt.s32.totalorder %v145, 200
    %vm178 = vcmp.lt.s32.totalorder %v146, 200
    %vm179 = vcmp.lt.s32.totalorder %v147, 200
    %vm180 = vcmp.lt.s32.totalorder %v148, 200
    %vm181 = vcmp.lt.s32.totalorder %v149, 200
    %vm182 = vcmp.lt.s32.totalorder %v150, 200
    %vm183 = vcmp.lt.s32.totalorder %v151, 200
    %vm184 = vcmp.lt.s32.totalorder %v152, 200
    %vm185 = vcmp.lt.s32.totalorder %v153, 200
    %vm186 = vcmp.lt.s32.totalorder %v154, 200
    %vm187 = vcmp.lt.s32.totalorder %v155, 200
    %vm188 = vcmp.lt.s32.totalorder %v156, 200
    %vm189 = vcmp.lt.s32.totalorder %v157, 200
    %vm190 = vcmp.lt.s32.totalorder %v158, 200
    %vm191 = vcmp.lt.s32.totalorder %v159, 200
    %vm192 = vcmp.lt.s32.totalorder %v160, 200
    %v193 = vld [vmem:[%s73] sm:$0xff]
    %v194 = vld [vmem:[%s73 + $0x8] sm:$0xff]
    %v195 = vld [vmem:[%s73 + $0x10] sm:$0xff]
    %v196 = vld [vmem:[%s73 + $0x18] sm:$0xff]
    %v197 = vld [vmem:[%s73 + $0x20] sm:$0xff]
    %v198 = vld [vmem:[%s73 + $0x28] sm:$0xff]
    %v199 = vld [vmem:[%s73 + $0x30] sm:$0xff]
    %v200 = vld [vmem:[%s73 + $0x38] sm:$0xff]
    %v201 = vld [vmem:[%s73 + $0x40] sm:$0xff]
    %v202 = vld [vmem:[%s73 + $0x48] sm:$0xff]
    %v203 = vld [vmem:[%s73 + $0x50] sm:$0xff]
    %v204 = vld [vmem:[%s73 + $0x58] sm:$0xff]
    %v205 = vld [vmem:[%s73 + $0x60] sm:$0xff]
    %v206 = vld [vmem:[%s73 + $0x68] sm:$0xff]
    %v207 = vld [vmem:[%s73 + $0x70] sm:$0xff]
    %v208 = vld [vmem:[%s73 + $0x78] sm:$0xff]
    %v209 = vld [vmem:[%s73 + $0x80] sm:$0xff]
    %v210 = vld [vmem:[%s73 + $0x88] sm:$0xff]
    %v211 = vld [vmem:[%s73 + $0x90] sm:$0xff]
    %v212 = vld [vmem:[%s73 + $0x98] sm:$0xff]
    %v213 = vld [vmem:[%s73 + $0xa0] sm:$0xff]
    %v214 = vld [vmem:[%s73 + $0xa8] sm:$0xff]
    %v215 = vld [vmem:[%s73 + $0xb0] sm:$0xff]
    %v216 = vld [vmem:[%s73 + $0xb8] sm:$0xff]
    %v217 = vld [vmem:[%s73 + $0xc0] sm:$0xff]
    %v218 = vld [vmem:[%s73 + $0xc8] sm:$0xff]
    %v219 = vld [vmem:[%s73 + $0xd0] sm:$0xff]
    %v220 = vld [vmem:[%s73 + $0xd8] sm:$0xff]
    %v221 = vld [vmem:[%s73 + $0xe0] sm:$0xff]
    %v222 = vld [vmem:[%s73 + $0xe8] sm:$0xff]
    %v223 = vld [vmem:[%s73 + $0xf0] sm:$0xff]
    %v224 = vld [vmem:[%s73 + $0xf8] sm:$0xff]
    %v225 = vpack.c.bf16 %v194, %v193
    %v226 = vpack.c.bf16 %v196, %v195
    %v227 = vpack.c.bf16 %v198, %v197
    %v228 = vpack.c.bf16 %v200, %v199
    %v229 = vpack.c.bf16 %v202, %v201
    %v230 = vpack.c.bf16 %v204, %v203
    %v231 = vpack.c.bf16 %v206, %v205
    %v232 = vpack.c.bf16 %v208, %v207
    %v233 = vpack.c.bf16 %v210, %v209
    %v234 = vpack.c.bf16 %v212, %v211
    %v235 = vpack.c.bf16 %v214, %v213
    %v236 = vpack.c.bf16 %v216, %v215
    %v237 = vpack.c.bf16 %v218, %v217
    %v238 = vpack.c.bf16 %v220, %v219
    %v239 = vpack.c.bf16 %v222, %v221
    %v240 = vpack.c.bf16 %v224, %v223
    %v241 = vld [vmem:[%s1] sm:$0xff]
    %v242 = vld [vmem:[%s1 + $0x8] sm:$0xff]
    %v243 = vld [vmem:[%s1 + $0x10] sm:$0xff]
    %v244 = vld [vmem:[%s1 + $0x18] sm:$0xff]
    %v245 = vld [vmem:[%s1 + $0x20] sm:$0xff]
    %v246 = vld [vmem:[%s1 + $0x28] sm:$0xff]
    %v247 = vld [vmem:[%s1 + $0x30] sm:$0xff]
    %v248 = vld [vmem:[%s1 + $0x38] sm:$0xff]
    %v249 = vld [vmem:[%s1 + $0x40] sm:$0xff]
    %v250 = vld [vmem:[%s1 + $0x48] sm:$0xff]
    %v251 = vld [vmem:[%s1 + $0x50] sm:$0xff]
    %v252 = vld [vmem:[%s1 + $0x58] sm:$0xff]
    %v253 = vld [vmem:[%s1 + $0x60] sm:$0xff]
    %v254 = vld [vmem:[%s1 + $0x68] sm:$0xff]
    %v255 = vld [vmem:[%s1 + $0x70] sm:$0xff]
    %v256 = vld [vmem:[%s1 + $0x78] sm:$0xff]
    %v257 = vld [vmem:[%s2] sm:$0xf]
    %v259 = vlaneseq
    %v260 = vshrl.u32 %v259, 7
    %v261 = vsub.s32 0, %v260
    %v262 = vrot.slane %v257, %v261
    %v263 = vlaneseq
    %v264 = vshrl.u32 %v263, 7
    %v265 = vsub.s32 1, %v264
    %v266 = vrot.slane %v257, %v265
    %v267 = vlaneseq
    %v268 = vshrl.u32 %v267, 7
    %v269 = vsub.s32 2, %v268
    %v270 = vrot.slane %v257, %v269
    %v271 = vlaneseq
    %v272 = vshrl.u32 %v271, 7
    %v273 = vsub.s32 3, %v272
    %v274 = vrot.slane %v257, %v273
    %v295 = vunpack.c.l.b16 %v241
    %v296 = vunpack.c.h.b16 %v241
    %v297 = vunpack.c.l.b16 %v242
    %v298 = vunpack.c.h.b16 %v242
    %v299 = vunpack.c.l.b16 %v243
    %v300 = vunpack.c.h.b16 %v243
    %v301 = vunpack.c.l.b16 %v244
    %v302 = vunpack.c.h.b16 %v244
    %v303 = vunpack.c.l.b16 %v245
    %v304 = vunpack.c.h.b16 %v245
    %v305 = vunpack.c.l.b16 %v246
    %v306 = vunpack.c.h.b16 %v246
    %v307 = vunpack.c.l.b16 %v247
    %v308 = vunpack.c.h.b16 %v247
    %v309 = vunpack.c.l.b16 %v248
    %v310 = vunpack.c.h.b16 %v248
    %v311 = vunpack.c.l.b16 %v249
    %v312 = vunpack.c.h.b16 %v249
    %v313 = vunpack.c.l.b16 %v250
    %v314 = vunpack.c.h.b16 %v250
    %v315 = vunpack.c.l.b16 %v251
    %v316 = vunpack.c.h.b16 %v251
    %v317 = vunpack.c.l.b16 %v252
    %v318 = vunpack.c.h.b16 %v252
    %v319 = vunpack.c.l.b16 %v253
    %v320 = vunpack.c.h.b16 %v253
    %v321 = vunpack.c.l.b16 %v254
    %v322 = vunpack.c.h.b16 %v254
    %v323 = vunpack.c.l.b16 %v255
    %v324 = vunpack.c.h.b16 %v255
    %v325 = vunpack.c.l.b16 %v256
    %v326 = vunpack.c.h.b16 %v256
    %v327 = vpack.c.b16 %v299, %v295
    %v328 = vpack.c.b16 %v300, %v296
    %v329 = vpack.c.b16 %v301, %v297
    %v330 = vpack.c.b16 %v302, %v298
    %v331 = vpack.c.b16 %v307, %v303
    %v332 = vpack.c.b16 %v308, %v304
    %v333 = vpack.c.b16 %v309, %v305
    %v334 = vpack.c.b16 %v310, %v306
    %v335 = vpack.c.b16 %v315, %v311
    %v336 = vpack.c.b16 %v316, %v312
    %v337 = vpack.c.b16 %v317, %v313
    %v338 = vpack.c.b16 %v318, %v314
    %v339 = vpack.c.b16 %v323, %v319
    %v340 = vpack.c.b16 %v324, %v320
    %v341 = vpack.c.b16 %v325, %v321
    %v342 = vpack.c.b16 %v326, %v322
    %vm359 = vcmask 523264
    %v361 = vsel %vm359, %v225, 0
    %v364 = vsel %vm359, %v226, 0
    %v367 = vsel %vm359, %v227, 0
    %v370 = vsel %vm359, %v228, 0
    %v373 = vsel %vm359, %v229, 0
    %v376 = vsel %vm359, %v230, 0
    %v379 = vsel %vm359, %v231, 0
    %v382 = vsel %vm359, %v232, 0
    %v385 = vsel %vm359, %v233, 0
    %v388 = vsel %vm359, %v234, 0
    %v391 = vsel %vm359, %v235, 0
    %v394 = vsel %vm359, %v236, 0
    %v397 = vsel %vm359, %v237, 0
    %v400 = vsel %vm359, %v238, 0
    %v403 = vsel %vm359, %v239, 0
    %v406 = vsel %vm359, %v240, 0
    %408 = vmatprep.subr.bf16.mxu0 %v328
    %409 = vmatpush1.bf16.msra.mxu0 %v327
    %410 = vmatprep.subr.bf16.mxu0 %v332
    %411 = vmatpush1.bf16.msra.mxu0 %v331
    %412 = vmatprep.subr.bf16.mxu0 %v336
    %413 = vmatpush1.bf16.msra.mxu0 %v335
    %414 = vmatprep.subr.bf16.mxu0 %v340
    %415 = vmatpush1.bf16.msra.mxu0 %v339
    %416 = vmatprep.subr.bf16.mxu0 0
    %417 = vmatpush1.bf16.msra.mxu0 0
    %418 = vmatprep.subr.bf16.mxu0 0
    %419 = vmatpush1.bf16.msra.mxu0 0
    %420 = vmatprep.subr.bf16.mxu0 0
    %421 = vmatpush1.bf16.msra.mxu0 0
    %422 = vmatprep.subr.bf16.mxu0 0
    %423 = vmatpush1.bf16.msra.mxu0 0
    %424 = vmatprep.subr.bf16.mxu0 0
    %425 = vmatpush1.bf16.msra.mxu0 0
    %426 = vmatprep.subr.bf16.mxu0 0
    %427 = vmatpush1.bf16.msra.mxu0 0
    %428 = vmatprep.subr.bf16.mxu0 0
    %429 = vmatpush1.bf16.msra.mxu0 0
    %430 = vmatprep.subr.bf16.mxu0 0
    %431 = vmatpush1.bf16.msra.mxu0 0
    %432 = vmatprep.subr.bf16.mxu0 0
    %433 = vmatpush1.bf16.msra.mxu0 0
    %434 = vmatprep.subr.bf16.mxu0 0
    %435 = vmatpush1.bf16.msra.mxu0 0
    %436 = vmatprep.subr.bf16.mxu0 0
    %437 = vmatpush1.bf16.msra.mxu0 0
    %438 = vmatprep.subr.bf16.mxu0 0
    %439 = vmatpush1.bf16.msra.mxu0 0
    %440 = vmatprep.mubr.bf16.mxu0 0
    %441 = vmatmul.mubr.bf16.gmra.mrb[0].mxu0 %v361
    %v442 = vpop.f32.mrb[0].mxu0
    %v443 = vadd.f32 %v262, %v442
    %v444 = vpop.f32.mrb[0].mxu0
    %v445 = vadd.f32 %v266, %v444
    %v446 = vpop.f32.mrb[0].mxu0
    %v447 = vadd.f32 %v262, %v446
    %v448 = vpop.f32.mrb[0].mxu0
    %v449 = vadd.f32 %v266, %v448
    %450 = vmatprep.mubr.bf16.mxu0 0
    %451 = vmatmul.mubr.bf16.gmra.mrb[0].mxu0 %v364
    %v452 = vpop.f32.mrb[0].mxu0
    %v453 = vadd.f32 %v262, %v452
    %v454 = vpop.f32.mrb[0].mxu0
    %v455 = vadd.f32 %v266, %v454
    %v456 = vpop.f32.mrb[0].mxu0
    %v457 = vadd.f32 %v262, %v456
    %v458 = vpop.f32.mrb[0].mxu0
    %v459 = vadd.f32 %v266, %v458
    %460 = vmatprep.mubr.bf16.mxu0 0
    %461 = vmatmul.mubr.bf16.gmra.mrb[0].mxu0 %v367
    %v462 = vpop.f32.mrb[0].mxu0
    %v463 = vadd.f32 %v262, %v462
    %v464 = vpop.f32.mrb[0].mxu0
    %v465 = vadd.f32 %v266, %v464
    %v466 = vpop.f32.mrb[0].mxu0
    %v467 = vadd.f32 %v262, %v466
    %v468 = vpop.f32.mrb[0].mxu0
    %v469 = vadd.f32 %v266, %v468
    %470 = vmatprep.mubr.bf16.mxu0 0
    %471 = vmatmul.mubr.bf16.gmra.mrb[0].mxu0 %v370
    %v472 = vpop.f32.mrb[0].mxu0
    %v473 = vadd.f32 %v262, %v472
    %v474 = vpop.f32.mrb[0].mxu0
    %v475 = vadd.f32 %v266, %v474
    %v476 = vpop.f32.mrb[0].mxu0
    %v477 = vadd.f32 %v262, %v476
    %v478 = vpop.f32.mrb[0].mxu0
    %v479 = vadd.f32 %v266, %v478
    %480 = vmatprep.mubr.bf16.mxu0 0
    %481 = vmatmul.mubr.bf16.gmra.mrb[0].mxu0 %v373
    %v482 = vpop.f32.mrb[0].mxu0
    %v483 = vadd.f32 %v262, %v482
    %v484 = vpop.f32.mrb[0].mxu0
    %v485 = vadd.f32 %v266, %v484
    %v486 = vpop.f32.mrb[0].mxu0
    %v487 = vadd.f32 %v262, %v486
    %v488 = vpop.f32.mrb[0].mxu0
    %v489 = vadd.f32 %v266, %v488
    %490 = vmatprep.mubr.bf16.mxu0 0
    %491 = vmatmul.mubr.bf16.gmra.mrb[0].mxu0 %v376
    %v492 = vpop.f32.mrb[0].mxu0
    %v493 = vadd.f32 %v262, %v492
    %v494 = vpop.f32.mrb[0].mxu0
    %v495 = vadd.f32 %v266, %v494
    %v496 = vpop.f32.mrb[0].mxu0
    %v497 = vadd.f32 %v262, %v496
    %v498 = vpop.f32.mrb[0].mxu0
    %v499 = vadd.f32 %v266, %v498
    %500 = vmatprep.mubr.bf16.mxu0 0
    %501 = vmatmul.mubr.bf16.gmra.mrb[0].mxu0 %v379
    %v502 = vpop.f32.mrb[0].mxu0
    %v503 = vadd.f32 %v262, %v502
    %v504 = vpop.f32.mrb[0].mxu0
    %v505 = vadd.f32 %v266, %v504
    %v506 = vpop.f32.mrb[0].mxu0
    %v507 = vadd.f32 %v262, %v506
    %v508 = vpop.f32.mrb[0].mxu0
    %v509 = vadd.f32 %v266, %v508
    %510 = vmatprep.mubr.bf16.mxu0 0
    %511 = vmatmul.mubr.bf16.gmra.mrb[0].mxu0 %v382
    %v512 = vpop.f32.mrb[0].mxu0
    %v513 = vadd.f32 %v262, %v512
    %v514 = vpop.f32.mrb[0].mxu0
    %v515 = vadd.f32 %v266, %v514
    %v516 = vpop.f32.mrb[0].mxu0
    %v517 = vadd.f32 %v262, %v516
    %v518 = vpop.f32.mrb[0].mxu0
    %v519 = vadd.f32 %v266, %v518
    %520 = vmatprep.mubr.bf16.mxu0 0
    %521 = vmatmul.mubr.bf16.gmra.mrb[0].mxu0 %v385
    %v522 = vpop.f32.mrb[0].mxu0
    %v523 = vadd.f32 %v262, %v522
    %v524 = vpop.f32.mrb[0].mxu0
    %v525 = vadd.f32 %v266, %v524
    %v526 = vpop.f32.mrb[0].mxu0
    %v527 = vadd.f32 %v262, %v526
    %v528 = vpop.f32.mrb[0].mxu0
    %v529 = vadd.f32 %v266, %v528
    %530 = vmatprep.mubr.bf16.mxu0 0
    %531 = vmatmul.mubr.bf16.gmra.mrb[0].mxu0 %v388
    %v532 = vpop.f32.mrb[0].mxu0
    %v533 = vadd.f32 %v262, %v532
    %v534 = vpop.f32.mrb[0].mxu0
    %v535 = vadd.f32 %v266, %v534
    %v536 = vpop.f32.mrb[0].mxu0
    %v537 = vadd.f32 %v262, %v536
    %v538 = vpop.f32.mrb[0].mxu0
    %v539 = vadd.f32 %v266, %v538
    %540 = vmatprep.mubr.bf16.mxu0 0
    %541 = vmatmul.mubr.bf16.gmra.mrb[0].mxu0 %v391
    %v542 = vpop.f32.mrb[0].mxu0
    %v543 = vadd.f32 %v262, %v542
    %v544 = vpop.f32.mrb[0].mxu0
    %v545 = vadd.f32 %v266, %v544
    %v546 = vpop.f32.mrb[0].mxu0
    %v547 = vadd.f32 %v262, %v546
    %v548 = vpop.f32.mrb[0].mxu0
    %v549 = vadd.f32 %v266, %v548
    %550 = vmatprep.mubr.bf16.mxu0 0
    %551 = vmatmul.mubr.bf16.gmra.mrb[0].mxu0 %v394
    %v552 = vpop.f32.mrb[0].mxu0
    %v553 = vadd.f32 %v262, %v552
    %v554 = vpop.f32.mrb[0].mxu0
    %v555 = vadd.f32 %v266, %v554
    %v556 = vpop.f32.mrb[0].mxu0
    %v557 = vadd.f32 %v262, %v556
    %v558 = vpop.f32.mrb[0].mxu0
    %v559 = vadd.f32 %v266, %v558
    %560 = vmatprep.mubr.bf16.mxu0 0
    %561 = vmatmul.mubr.bf16.gmra.mrb[0].mxu0 %v397
    %v562 = vpop.f32.mrb[0].mxu0
    %v563 = vadd.f32 %v262, %v562
    %v564 = vpop.f32.mrb[0].mxu0
    %v565 = vadd.f32 %v266, %v564
    %v566 = vpop.f32.mrb[0].mxu0
    %v567 = vadd.f32 %v262, %v566
    %v568 = vpop.f32.mrb[0].mxu0
    %v569 = vadd.f32 %v266, %v568
    %570 = vmatprep.mubr.bf16.mxu0 0
    %571 = vmatmul.mubr.bf16.gmra.mrb[0].mxu0 %v400
    %v572 = vpop.f32.mrb[0].mxu0
    %v573 = vadd.f32 %v262, %v572
    %v574 = vpop.f32.mrb[0].mxu0
    %v575 = vadd.f32 %v266, %v574
    %v576 = vpop.f32.mrb[0].mxu0
    %v577 = vadd.f32 %v262, %v576
    %v578 = vpop.f32.mrb[0].mxu0
    %v579 = vadd.f32 %v266, %v578
    %580 = vmatprep.mubr.bf16.mxu0 0
    %581 = vmatmul.mubr.bf16.gmra.mrb[0].mxu0 %v403
    %v582 = vpop.f32.mrb[0].mxu0
    %v583 = vadd.f32 %v262, %v582
    %v584 = vpop.f32.mrb[0].mxu0
    %v585 = vadd.f32 %v266, %v584
    %v586 = vpop.f32.mrb[0].mxu0
    %v587 = vadd.f32 %v262, %v586
    %v588 = vpop.f32.mrb[0].mxu0
    %v589 = vadd.f32 %v266, %v588
    %590 = vmatprep.mubr.bf16.mxu0 0
    %591 = vmatmul.mubr.bf16.gmra.mrb[0].mxu0 %v406
    %v592 = vpop.f32.mrb[0].mxu0
    %v593 = vadd.f32 %v262, %v592
    %v594 = vpop.f32.mrb[0].mxu0
    %v595 = vadd.f32 %v266, %v594
    %v596 = vpop.f32.mrb[0].mxu0
    %v597 = vadd.f32 %v262, %v596
    %v598 = vpop.f32.mrb[0].mxu0
    %v599 = vadd.f32 %v266, %v598
    %600 = vdwg.mxu0
    %601 = vmatprep.subr.bf16.mxu0 %v330
    %602 = vmatpush1.bf16.msra.mxu0 %v329
    %603 = vmatprep.subr.bf16.mxu0 %v334
    %604 = vmatpush1.bf16.msra.mxu0 %v333
    %605 = vmatprep.subr.bf16.mxu0 %v338
    %606 = vmatpush1.bf16.msra.mxu0 %v337
    %607 = vmatprep.subr.bf16.mxu0 %v342
    %608 = vmatpush1.bf16.msra.mxu0 %v341
    %609 = vmatprep.subr.bf16.mxu0 0
    %610 = vmatpush1.bf16.msra.mxu0 0
    %611 = vmatprep.subr.bf16.mxu0 0
    %612 = vmatpush1.bf16.msra.mxu0 0
    %613 = vmatprep.subr.bf16.mxu0 0
    %614 = vmatpush1.bf16.msra.mxu0 0
    %615 = vmatprep.subr.bf16.mxu0 0
    %616 = vmatpush1.bf16.msra.mxu0 0
    %617 = vmatprep.subr.bf16.mxu0 0
    %618 = vmatpush1.bf16.msra.mxu0 0
    %619 = vmatprep.subr.bf16.mxu0 0
    %620 = vmatpush1.bf16.msra.mxu0 0
    %621 = vmatprep.subr.bf16.mxu0 0
    %622 = vmatpush1.bf16.msra.mxu0 0
    %623 = vmatprep.subr.bf16.mxu0 0
    %624 = vmatpush1.bf16.msra.mxu0 0
    %625 = vmatprep.subr.bf16.mxu0 0
    %626 = vmatpush1.bf16.msra.mxu0 0
    %627 = vmatprep.subr.bf16.mxu0 0
    %628 = vmatpush1.bf16.msra.mxu0 0
    %629 = vmatprep.subr.bf16.mxu0 0
    %630 = vmatpush1.bf16.msra.mxu0 0
    %631 = vmatprep.subr.bf16.mxu0 0
    %632 = vmatpush1.bf16.msra.mxu0 0
    %633 = vmatprep.mubr.bf16.mxu0 0
    %634 = vmatmul.mubr.bf16.gmra.mrb[0].mxu0 %v361
    %v635 = vpop.f32.mrb[0].mxu0
    %v636 = vadd.f32 %v270, %v635
    %v637 = vpop.f32.mrb[0].mxu0
    %v638 = vadd.f32 %v274, %v637
    %v639 = vpop.f32.mrb[0].mxu0
    %v640 = vadd.f32 %v270, %v639
    %v641 = vpop.f32.mrb[0].mxu0
    %v642 = vadd.f32 %v274, %v641
    %643 = vmatprep.mubr.bf16.mxu0 0
    %644 = vmatmul.mubr.bf16.gmra.mrb[0].mxu0 %v364
    %v645 = vpop.f32.mrb[0].mxu0
    %v646 = vadd.f32 %v270, %v645
    %v647 = vpop.f32.mrb[0].mxu0
    %v648 = vadd.f32 %v274, %v647
    %v649 = vpop.f32.mrb[0].mxu0
    %v650 = vadd.f32 %v270, %v649
    %v651 = vpop.f32.mrb[0].mxu0
    %v652 = vadd.f32 %v274, %v651
    %653 = vmatprep.mubr.bf16.mxu0 0
    %654 = vmatmul.mubr.bf16.gmra.mrb[0].mxu0 %v367
    %v655 = vpop.f32.mrb[0].mxu0
    %v656 = vadd.f32 %v270, %v655
    %v657 = vpop.f32.mrb[0].mxu0
    %v658 = vadd.f32 %v274, %v657
    %v659 = vpop.f32.mrb[0].mxu0
    %v660 = vadd.f32 %v270, %v659
    %v661 = vpop.f32.mrb[0].mxu0
    %v662 = vadd.f32 %v274, %v661
    %663 = vmatprep.mubr.bf16.mxu0 0
    %664 = vmatmul.mubr.bf16.gmra.mrb[0].mxu0 %v370
    %v665 = vpop.f32.mrb[0].mxu0
    %v666 = vadd.f32 %v270, %v665
    %v667 = vpop.f32.mrb[0].mxu0
    %v668 = vadd.f32 %v274, %v667
    %v669 = vpop.f32.mrb[0].mxu0
    %v670 = vadd.f32 %v270, %v669
    %v671 = vpop.f32.mrb[0].mxu0
    %v672 = vadd.f32 %v274, %v671
    %673 = vmatprep.mubr.bf16.mxu0 0
    %674 = vmatmul.mubr.bf16.gmra.mrb[0].mxu0 %v373
    %v675 = vpop.f32.mrb[0].mxu0
    %v676 = vadd.f32 %v270, %v675
    %v677 = vpop.f32.mrb[0].mxu0
    %v678 = vadd.f32 %v274, %v677
    %v679 = vpop.f32.mrb[0].mxu0
    %v680 = vadd.f32 %v270, %v679
    %v681 = vpop.f32.mrb[0].mxu0
    %v682 = vadd.f32 %v274, %v681
    %683 = vmatprep.mubr.bf16.mxu0 0
    %684 = vmatmul.mubr.bf16.gmra.mrb[0].mxu0 %v376
    %v685 = vpop.f32.mrb[0].mxu0
    %v686 = vadd.f32 %v270, %v685
    %v687 = vpop.f32.mrb[0].mxu0
    %v688 = vadd.f32 %v274, %v687
    %v689 = vpop.f32.mrb[0].mxu0
    %v690 = vadd.f32 %v270, %v689
    %v691 = vpop.f32.mrb[0].mxu0
    %v692 = vadd.f32 %v274, %v691
    %693 = vmatprep.mubr.bf16.mxu0 0
    %694 = vmatmul.mubr.bf16.gmra.mrb[0].mxu0 %v379
    %v695 = vpop.f32.mrb[0].mxu0
    %v696 = vadd.f32 %v270, %v695
    %v697 = vpop.f32.mrb[0].mxu0
    %v698 = vadd.f32 %v274, %v697
    %v699 = vpop.f32.mrb[0].mxu0
    %v700 = vadd.f32 %v270, %v699
    %v701 = vpop.f32.mrb[0].mxu0
    %v702 = vadd.f32 %v274, %v701
    %703 = vmatprep.mubr.bf16.mxu0 0
    %704 = vmatmul.mubr.bf16.gmra.mrb[0].mxu0 %v382
    %v705 = vpop.f32.mrb[0].mxu0
    %v706 = vadd.f32 %v270, %v705
    %v707 = vpop.f32.mrb[0].mxu0
    %v708 = vadd.f32 %v274, %v707
    %v709 = vpop.f32.mrb[0].mxu0
    %v710 = vadd.f32 %v270, %v709
    %v711 = vpop.f32.mrb[0].mxu0
    %v712 = vadd.f32 %v274, %v711
    %713 = vmatprep.mubr.bf16.mxu0 0
    %714 = vmatmul.mubr.bf16.gmra.mrb[0].mxu0 %v385
    %v715 = vpop.f32.mrb[0].mxu0
    %v716 = vadd.f32 %v270, %v715
    %v717 = vpop.f32.mrb[0].mxu0
    %v718 = vadd.f32 %v274, %v717
    %v719 = vpop.f32.mrb[0].mxu0
    %v720 = vadd.f32 %v270, %v719
    %v721 = vpop.f32.mrb[0].mxu0
    %v722 = vadd.f32 %v274, %v721
    %723 = vmatprep.mubr.bf16.mxu0 0
    %724 = vmatmul.mubr.bf16.gmra.mrb[0].mxu0 %v388
    %v725 = vpop.f32.mrb[0].mxu0
    %v726 = vadd.f32 %v270, %v725
    %v727 = vpop.f32.mrb[0].mxu0
    %v728 = vadd.f32 %v274, %v727
    %v729 = vpop.f32.mrb[0].mxu0
    %v730 = vadd.f32 %v270, %v729
    %v731 = vpop.f32.mrb[0].mxu0
    %v732 = vadd.f32 %v274, %v731
    %733 = vmatprep.mubr.bf16.mxu0 0
    %734 = vmatmul.mubr.bf16.gmra.mrb[0].mxu0 %v391
    %v735 = vpop.f32.mrb[0].mxu0
    %v736 = vadd.f32 %v270, %v735
    %v737 = vpop.f32.mrb[0].mxu0
    %v738 = vadd.f32 %v274, %v737
    %v739 = vpop.f32.mrb[0].mxu0
    %v740 = vadd.f32 %v270, %v739
    %v741 = vpop.f32.mrb[0].mxu0
    %v742 = vadd.f32 %v274, %v741
    %743 = vmatprep.mubr.bf16.mxu0 0
    %744 = vmatmul.mubr.bf16.gmra.mrb[0].mxu0 %v394
    %v745 = vpop.f32.mrb[0].mxu0
    %v746 = vadd.f32 %v270, %v745
    %v747 = vpop.f32.mrb[0].mxu0
    %v748 = vadd.f32 %v274, %v747
    %v749 = vpop.f32.mrb[0].mxu0
    %v750 = vadd.f32 %v270, %v749
    %v751 = vpop.f32.mrb[0].mxu0
    %v752 = vadd.f32 %v274, %v751
    %753 = vmatprep.mubr.bf16.mxu0 0
    %754 = vmatmul.mubr.bf16.gmra.mrb[0].mxu0 %v397
    %v755 = vpop.f32.mrb[0].mxu0
    %v756 = vadd.f32 %v270, %v755
    %v757 = vpop.f32.mrb[0].mxu0
    %v758 = vadd.f32 %v274, %v757
    %v759 = vpop.f32.mrb[0].mxu0
    %v760 = vadd.f32 %v270, %v759
    %v761 = vpop.f32.mrb[0].mxu0
    %v762 = vadd.f32 %v274, %v761
    %763 = vmatprep.mubr.bf16.mxu0 0
    %764 = vmatmul.mubr.bf16.gmra.mrb[0].mxu0 %v400
    %v765 = vpop.f32.mrb[0].mxu0
    %v766 = vadd.f32 %v270, %v765
    %v767 = vpop.f32.mrb[0].mxu0
    %v768 = vadd.f32 %v274, %v767
    %v769 = vpop.f32.mrb[0].mxu0
    %v770 = vadd.f32 %v270, %v769
    %v771 = vpop.f32.mrb[0].mxu0
    %v772 = vadd.f32 %v274, %v771
    %773 = vmatprep.mubr.bf16.mxu0 0
    %774 = vmatmul.mubr.bf16.gmra.mrb[0].mxu0 %v403
    %v775 = vpop.f32.mrb[0].mxu0
    %v776 = vadd.f32 %v270, %v775
    %v777 = vpop.f32.mrb[0].mxu0
    %v778 = vadd.f32 %v274, %v777
    %v779 = vpop.f32.mrb[0].mxu0
    %v780 = vadd.f32 %v270, %v779
    %v781 = vpop.f32.mrb[0].mxu0
    %v782 = vadd.f32 %v274, %v781
    %783 = vmatprep.mubr.bf16.mxu0 0
    %784 = vmatmul.mubr.bf16.gmra.mrb[0].mxu0 %v406
    %v785 = vpop.f32.mrb[0].mxu0
    %v786 = vadd.f32 %v270, %v785
    %v787 = vpop.f32.mrb[0].mxu0
    %v788 = vadd.f32 %v274, %v787
    %v789 = vpop.f32.mrb[0].mxu0
    %v790 = vadd.f32 %v270, %v789
    %v791 = vpop.f32.mrb[0].mxu0
    %v792 = vadd.f32 %v274, %v791
    %793 = vdwg.mxu0
    %v794 = vmax.f32 %v443, 0.0
    %v795 = vmax.f32 %v445, 0.0
    %v796 = vmax.f32 %v636, 0.0
    %v797 = vmax.f32 %v638, 0.0
    %v798 = vmax.f32 %v447, 0.0
    %v799 = vmax.f32 %v449, 0.0
    %v800 = vmax.f32 %v640, 0.0
    %v801 = vmax.f32 %v642, 0.0
    %v802 = vmax.f32 %v453, 0.0
    %v803 = vmax.f32 %v455, 0.0
    %v804 = vmax.f32 %v646, 0.0
    %v805 = vmax.f32 %v648, 0.0
    %v806 = vmax.f32 %v457, 0.0
    %v807 = vmax.f32 %v459, 0.0
    %v808 = vmax.f32 %v650, 0.0
    %v809 = vmax.f32 %v652, 0.0
    %v810 = vmax.f32 %v463, 0.0
    %v811 = vmax.f32 %v465, 0.0
    %v812 = vmax.f32 %v656, 0.0
    %v813 = vmax.f32 %v658, 0.0
    %v814 = vmax.f32 %v467, 0.0
    %v815 = vmax.f32 %v469, 0.0
    %v816 = vmax.f32 %v660, 0.0
    %v817 = vmax.f32 %v662, 0.0
    %v818 = vmax.f32 %v473, 0.0
    %v819 = vmax.f32 %v475, 0.0
    %v820 = vmax.f32 %v666, 0.0
    %v821 = vmax.f32 %v668, 0.0
    %v822 = vmax.f32 %v477, 0.0
    %v823 = vmax.f32 %v479, 0.0
    %v824 = vmax.f32 %v670, 0.0
    %v825 = vmax.f32 %v672, 0.0
    %v826 = vmax.f32 %v483, 0.0
    %v827 = vmax.f32 %v485, 0.0
    %v828 = vmax.f32 %v676, 0.0
    %v829 = vmax.f32 %v678, 0.0
    %v830 = vmax.f32 %v487, 0.0
    %v831 = vmax.f32 %v489, 0.0
    %v832 = vmax.f32 %v680, 0.0
    %v833 = vmax.f32 %v682, 0.0
    %v834 = vmax.f32 %v493, 0.0
    %v835 = vmax.f32 %v495, 0.0
    %v836 = vmax.f32 %v686, 0.0
    %v837 = vmax.f32 %v688, 0.0
    %v838 = vmax.f32 %v497, 0.0
    %v839 = vmax.f32 %v499, 0.0
    %v840 = vmax.f32 %v690, 0.0
    %v841 = vmax.f32 %v692, 0.0
    %v842 = vmax.f32 %v503, 0.0
    %v843 = vmax.f32 %v505, 0.0
    %v844 = vmax.f32 %v696, 0.0
    %v845 = vmax.f32 %v698, 0.0
    %v846 = vmax.f32 %v507, 0.0
    %v847 = vmax.f32 %v509, 0.0
    %v848 = vmax.f32 %v700, 0.0
    %v849 = vmax.f32 %v702, 0.0
    %v850 = vmax.f32 %v513, 0.0
    %v851 = vmax.f32 %v515, 0.0
    %v852 = vmax.f32 %v706, 0.0
    %v853 = vmax.f32 %v708, 0.0
    %v854 = vmax.f32 %v517, 0.0
    %v855 = vmax.f32 %v519, 0.0
    %v856 = vmax.f32 %v710, 0.0
    %v857 = vmax.f32 %v712, 0.0
    %v858 = vmax.f32 %v523, 0.0
    %v859 = vmax.f32 %v525, 0.0
    %v860 = vmax.f32 %v716, 0.0
    %v861 = vmax.f32 %v718, 0.0
    %v862 = vmax.f32 %v527, 0.0
    %v863 = vmax.f32 %v529, 0.0
    %v864 = vmax.f32 %v720, 0.0
    %v865 = vmax.f32 %v722, 0.0
    %v866 = vmax.f32 %v533, 0.0
    %v867 = vmax.f32 %v535, 0.0
    %v868 = vmax.f32 %v726, 0.0
    %v869 = vmax.f32 %v728, 0.0
    %v870 = vmax.f32 %v537, 0.0
    %v871 = vmax.f32 %v539, 0.0
    %v872 = vmax.f32 %v730, 0.0
    %v873 = vmax.f32 %v732, 0.0
    %v874 = vmax.f32 %v543, 0.0
    %v875 = vmax.f32 %v545, 0.0
    %v876 = vmax.f32 %v736, 0.0
    %v877 = vmax.f32 %v738, 0.0
    %v878 = vmax.f32 %v547, 0.0
    %v879 = vmax.f32 %v549, 0.0
    %v880 = vmax.f32 %v740, 0.0
    %v881 = vmax.f32 %v742, 0.0
    %v882 = vmax.f32 %v553, 0.0
    %v883 = vmax.f32 %v555, 0.0
    %v884 = vmax.f32 %v746, 0.0
    %v885 = vmax.f32 %v748, 0.0
    %v886 = vmax.f32 %v557, 0.0
    %v887 = vmax.f32 %v559, 0.0
    %v888 = vmax.f32 %v750, 0.0
    %v889 = vmax.f32 %v752, 0.0
    %v890 = vmax.f32 %v563, 0.0
    %v891 = vmax.f32 %v565, 0.0
    %v892 = vmax.f32 %v756, 0.0
    %v893 = vmax.f32 %v758, 0.0
    %v894 = vmax.f32 %v567, 0.0
    %v895 = vmax.f32 %v569, 0.0
    %v896 = vmax.f32 %v760, 0.0
    %v897 = vmax.f32 %v762, 0.0
    %v898 = vmax.f32 %v573, 0.0
    %v899 = vmax.f32 %v575, 0.0
    %v900 = vmax.f32 %v766, 0.0
    %v901 = vmax.f32 %v768, 0.0
    %v902 = vmax.f32 %v577, 0.0
    %v903 = vmax.f32 %v579, 0.0
    %v904 = vmax.f32 %v770, 0.0
    %v905 = vmax.f32 %v772, 0.0
    %v906 = vmax.f32 %v583, 0.0
    %v907 = vmax.f32 %v585, 0.0
    %v908 = vmax.f32 %v776, 0.0
    %v909 = vmax.f32 %v778, 0.0
    %v910 = vmax.f32 %v587, 0.0
    %v911 = vmax.f32 %v589, 0.0
    %v912 = vmax.f32 %v780, 0.0
    %v913 = vmax.f32 %v782, 0.0
    %v914 = vmax.f32 %v593, 0.0
    %v915 = vmax.f32 %v595, 0.0
    %v916 = vmax.f32 %v786, 0.0
    %v917 = vmax.f32 %v788, 0.0
    %v918 = vmax.f32 %v597, 0.0
    %v919 = vmax.f32 %v599, 0.0
    %v920 = vmax.f32 %v790, 0.0
    %v921 = vmax.f32 %v792, 0.0
    %v922 = vsel %vm161, 1, 0
    %v923 = vsel %vm162, 1, 0
    %v924 = vsel %vm163, 1, 0
    %v925 = vsel %vm164, 1, 0
    %v926 = vsel %vm165, 1, 0
    %v927 = vsel %vm166, 1, 0
    %v928 = vsel %vm167, 1, 0
    %v929 = vsel %vm168, 1, 0
    %v930 = vsel %vm169, 1, 0
    %v931 = vsel %vm170, 1, 0
    %v932 = vsel %vm171, 1, 0
    %v933 = vsel %vm172, 1, 0
    %v934 = vsel %vm173, 1, 0
    %v935 = vsel %vm174, 1, 0
    %v936 = vsel %vm175, 1, 0
    %v937 = vsel %vm176, 1, 0
    %v938 = vsel %vm177, 1, 0
    %v939 = vsel %vm178, 1, 0
    %v940 = vsel %vm179, 1, 0
    %v941 = vsel %vm180, 1, 0
    %v942 = vsel %vm181, 1, 0
    %v943 = vsel %vm182, 1, 0
    %v944 = vsel %vm183, 1, 0
    %v945 = vsel %vm184, 1, 0
    %v946 = vsel %vm185, 1, 0
    %v947 = vsel %vm186, 1, 0
    %v948 = vsel %vm187, 1, 0
    %v949 = vsel %vm188, 1, 0
    %v950 = vsel %vm189, 1, 0
    %v951 = vsel %vm190, 1, 0
    %v952 = vsel %vm191, 1, 0
    %v953 = vsel %vm192, 1, 0
    %vm954 = vcmp.eq.s32.totalorder %v922, 1
    %vm955 = vcmp.eq.s32.totalorder %v923, 1
    %vm956 = vcmp.eq.s32.totalorder %v924, 1
    %vm957 = vcmp.eq.s32.totalorder %v925, 1
    %vm958 = vcmp.eq.s32.totalorder %v926, 1
    %vm959 = vcmp.eq.s32.totalorder %v927, 1
    %vm960 = vcmp.eq.s32.totalorder %v928, 1
    %vm961 = vcmp.eq.s32.totalorder %v929, 1
    %vm962 = vcmp.eq.s32.totalorder %v930, 1
    %vm963 = vcmp.eq.s32.totalorder %v931, 1
    %vm964 = vcmp.eq.s32.totalorder %v932, 1
    %vm965 = vcmp.eq.s32.totalorder %v933, 1
    %vm966 = vcmp.eq.s32.totalorder %v934, 1
    %vm967 = vcmp.eq.s32.totalorder %v935, 1
    %vm968 = vcmp.eq.s32.totalorder %v936, 1
    %vm969 = vcmp.eq.s32.totalorder %v937, 1
    %vm970 = vcmp.eq.s32.totalorder %v938, 1
    %vm971 = vcmp.eq.s32.totalorder %v939, 1
    %vm972 = vcmp.eq.s32.totalorder %v940, 1
    %vm973 = vcmp.eq.s32.totalorder %v941, 1
    %vm974 = vcmp.eq.s32.totalorder %v942, 1
    %vm975 = vcmp.eq.s32.totalorder %v943, 1
    %vm976 = vcmp.eq.s32.totalorder %v944, 1
    %vm977 = vcmp.eq.s32.totalorder %v945, 1
    %vm978 = vcmp.eq.s32.totalorder %v946, 1
    %vm979 = vcmp.eq.s32.totalorder %v947, 1
    %vm980 = vcmp.eq.s32.totalorder %v948, 1
    %vm981 = vcmp.eq.s32.totalorder %v949, 1
    %vm982 = vcmp.eq.s32.totalorder %v950, 1
    %vm983 = vcmp.eq.s32.totalorder %v951, 1
    %vm984 = vcmp.eq.s32.totalorder %v952, 1
    %vm985 = vcmp.eq.s32.totalorder %v953, 1
    %v986 = vsel %vm954, %v794, 0.0
    %v987 = vsel %vm954, %v795, 0.0
    %v988 = vsel %vm954, %v796, 0.0
    %v989 = vsel %vm954, %v797, 0.0
    %v990 = vsel %vm955, %v798, 0.0
    %v991 = vsel %vm955, %v799, 0.0
    %v992 = vsel %vm955, %v800, 0.0
    %v993 = vsel %vm955, %v801, 0.0
    %v994 = vsel %vm956, %v802, 0.0
    %v995 = vsel %vm956, %v803, 0.0
    %v996 = vsel %vm956, %v804, 0.0
    %v997 = vsel %vm956, %v805, 0.0
    %v998 = vsel %vm957, %v806, 0.0
    %v999 = vsel %vm957, %v807, 0.0
    %v1000 = vsel %vm957, %v808, 0.0
    %v1001 = vsel %vm957, %v809, 0.0
    %v1002 = vsel %vm958, %v810, 0.0
    %v1003 = vsel %vm958, %v811, 0.0
    %v1004 = vsel %vm958, %v812, 0.0
    %v1005 = vsel %vm958, %v813, 0.0
    %v1006 = vsel %vm959, %v814, 0.0
    %v1007 = vsel %vm959, %v815, 0.0
    %v1008 = vsel %vm959, %v816, 0.0
    %v1009 = vsel %vm959, %v817, 0.0
    %v1010 = vsel %vm960, %v818, 0.0
    %v1011 = vsel %vm960, %v819, 0.0
    %v1012 = vsel %vm960, %v820, 0.0
    %v1013 = vsel %vm960, %v821, 0.0
    %v1014 = vsel %vm961, %v822, 0.0
    %v1015 = vsel %vm961, %v823, 0.0
    %v1016 = vsel %vm961, %v824, 0.0
    %v1017 = vsel %vm961, %v825, 0.0
    %v1018 = vsel %vm962, %v826, 0.0
    %v1019 = vsel %vm962, %v827, 0.0
    %v1020 = vsel %vm962, %v828, 0.0
    %v1021 = vsel %vm962, %v829, 0.0
    %v1022 = vsel %vm963, %v830, 0.0
    %v1023 = vsel %vm963, %v831, 0.0
    %v1024 = vsel %vm963, %v832, 0.0
    %v1025 = vsel %vm963, %v833, 0.0
    %v1026 = vsel %vm964, %v834, 0.0
    %v1027 = vsel %vm964, %v835, 0.0
    %v1028 = vsel %vm964, %v836, 0.0
    %v1029 = vsel %vm964, %v837, 0.0
    %v1030 = vsel %vm965, %v838, 0.0
    %v1031 = vsel %vm965, %v839, 0.0
    %v1032 = vsel %vm965, %v840, 0.0
    %v1033 = vsel %vm965, %v841, 0.0
    %v1034 = vsel %vm966, %v842, 0.0
    %v1035 = vsel %vm966, %v843, 0.0
    %v1036 = vsel %vm966, %v844, 0.0
    %v1037 = vsel %vm966, %v845, 0.0
    %v1038 = vsel %vm967, %v846, 0.0
    %v1039 = vsel %vm967, %v847, 0.0
    %v1040 = vsel %vm967, %v848, 0.0
    %v1041 = vsel %vm967, %v849, 0.0
    %v1042 = vsel %vm968, %v850, 0.0
    %v1043 = vsel %vm968, %v851, 0.0
    %v1044 = vsel %vm968, %v852, 0.0
    %v1045 = vsel %vm968, %v853, 0.0
    %v1046 = vsel %vm969, %v854, 0.0
    %v1047 = vsel %vm969, %v855, 0.0
    %v1048 = vsel %vm969, %v856, 0.0
    %v1049 = vsel %vm969, %v857, 0.0
    %v1050 = vsel %vm970, %v858, 0.0
    %v1051 = vsel %vm970, %v859, 0.0
    %v1052 = vsel %vm970, %v860, 0.0
    %v1053 = vsel %vm970, %v861, 0.0
    %v1054 = vsel %vm971, %v862, 0.0
    %v1055 = vsel %vm971, %v863, 0.0
    %v1056 = vsel %vm971, %v864, 0.0
    %v1057 = vsel %vm971, %v865, 0.0
    %v1058 = vsel %vm972, %v866, 0.0
    %v1059 = vsel %vm972, %v867, 0.0
    %v1060 = vsel %vm972, %v868, 0.0
    %v1061 = vsel %vm972, %v869, 0.0
    %v1062 = vsel %vm973, %v870, 0.0
    %v1063 = vsel %vm973, %v871, 0.0
    %v1064 = vsel %vm973, %v872, 0.0
    %v1065 = vsel %vm973, %v873, 0.0
    %v1066 = vsel %vm974, %v874, 0.0
    %v1067 = vsel %vm974, %v875, 0.0
    %v1068 = vsel %vm974, %v876, 0.0
    %v1069 = vsel %vm974, %v877, 0.0
    %v1070 = vsel %vm975, %v878, 0.0
    %v1071 = vsel %vm975, %v879, 0.0
    %v1072 = vsel %vm975, %v880, 0.0
    %v1073 = vsel %vm975, %v881, 0.0
    %v1074 = vsel %vm976, %v882, 0.0
    %v1075 = vsel %vm976, %v883, 0.0
    %v1076 = vsel %vm976, %v884, 0.0
    %v1077 = vsel %vm976, %v885, 0.0
    %v1078 = vsel %vm977, %v886, 0.0
    %v1079 = vsel %vm977, %v887, 0.0
    %v1080 = vsel %vm977, %v888, 0.0
    %v1081 = vsel %vm977, %v889, 0.0
    %v1082 = vsel %vm978, %v890, 0.0
    %v1083 = vsel %vm978, %v891, 0.0
    %v1084 = vsel %vm978, %v892, 0.0
    %v1085 = vsel %vm978, %v893, 0.0
    %v1086 = vsel %vm979, %v894, 0.0
    %v1087 = vsel %vm979, %v895, 0.0
    %v1088 = vsel %vm979, %v896, 0.0
    %v1089 = vsel %vm979, %v897, 0.0
    %v1090 = vsel %vm980, %v898, 0.0
    %v1091 = vsel %vm980, %v899, 0.0
    %v1092 = vsel %vm980, %v900, 0.0
    %v1093 = vsel %vm980, %v901, 0.0
    %v1094 = vsel %vm981, %v902, 0.0
    %v1095 = vsel %vm981, %v903, 0.0
    %v1096 = vsel %vm981, %v904, 0.0
    %v1097 = vsel %vm981, %v905, 0.0
    %v1098 = vsel %vm982, %v906, 0.0
    %v1099 = vsel %vm982, %v907, 0.0
    %v1100 = vsel %vm982, %v908, 0.0
    %v1101 = vsel %vm982, %v909, 0.0
    %v1102 = vsel %vm983, %v910, 0.0
    %v1103 = vsel %vm983, %v911, 0.0
    %v1104 = vsel %vm983, %v912, 0.0
    %v1105 = vsel %vm983, %v913, 0.0
    %v1106 = vsel %vm984, %v914, 0.0
    %v1107 = vsel %vm984, %v915, 0.0
    %v1108 = vsel %vm984, %v916, 0.0
    %v1109 = vsel %vm984, %v917, 0.0
    %v1110 = vsel %vm985, %v918, 0.0
    %v1111 = vsel %vm985, %v919, 0.0
    %v1112 = vsel %vm985, %v920, 0.0
    %v1113 = vsel %vm985, %v921, 0.0
    %v1114 = vpack.c.bf16 %v990, %v986
    %v1115 = vpack.c.bf16 %v991, %v987
    %v1116 = vpack.c.bf16 %v992, %v988
    %v1117 = vpack.c.bf16 %v993, %v989
    %v1118 = vpack.c.bf16 %v998, %v994
    %v1119 = vpack.c.bf16 %v999, %v995
    %v1120 = vpack.c.bf16 %v1000, %v996
    %v1121 = vpack.c.bf16 %v1001, %v997
    %v1122 = vpack.c.bf16 %v1006, %v1002
    %v1123 = vpack.c.bf16 %v1007, %v1003
    %v1124 = vpack.c.bf16 %v1008, %v1004
    %v1125 = vpack.c.bf16 %v1009, %v1005
    %v1126 = vpack.c.bf16 %v1014, %v1010
    %v1127 = vpack.c.bf16 %v1015, %v1011
    %v1128 = vpack.c.bf16 %v1016, %v1012
    %v1129 = vpack.c.bf16 %v1017, %v1013
    %v1130 = vpack.c.bf16 %v1022, %v1018
    %v1131 = vpack.c.bf16 %v1023, %v1019
    %v1132 = vpack.c.bf16 %v1024, %v1020
    %v1133 = vpack.c.bf16 %v1025, %v1021
    %v1134 = vpack.c.bf16 %v1030, %v1026
    %v1135 = vpack.c.bf16 %v1031, %v1027
    %v1136 = vpack.c.bf16 %v1032, %v1028
    %v1137 = vpack.c.bf16 %v1033, %v1029
    %v1138 = vpack.c.bf16 %v1038, %v1034
    %v1139 = vpack.c.bf16 %v1039, %v1035
    %v1140 = vpack.c.bf16 %v1040, %v1036
    %v1141 = vpack.c.bf16 %v1041, %v1037
    %v1142 = vpack.c.bf16 %v1046, %v1042
    %v1143 = vpack.c.bf16 %v1047, %v1043
    %v1144 = vpack.c.bf16 %v1048, %v1044
    %v1145 = vpack.c.bf16 %v1049, %v1045
    %v1146 = vpack.c.bf16 %v1054, %v1050
    %v1147 = vpack.c.bf16 %v1055, %v1051
    %v1148 = vpack.c.bf16 %v1056, %v1052
    %v1149 = vpack.c.bf16 %v1057, %v1053
    %v1150 = vpack.c.bf16 %v1062, %v1058
    %v1151 = vpack.c.bf16 %v1063, %v1059
    %v1152 = vpack.c.bf16 %v1064, %v1060
    %v1153 = vpack.c.bf16 %v1065, %v1061
    %v1154 = vpack.c.bf16 %v1070, %v1066
    %v1155 = vpack.c.bf16 %v1071, %v1067
    %v1156 = vpack.c.bf16 %v1072, %v1068
    %v1157 = vpack.c.bf16 %v1073, %v1069
    %v1158 = vpack.c.bf16 %v1078, %v1074
    %v1159 = vpack.c.bf16 %v1079, %v1075
    %v1160 = vpack.c.bf16 %v1080, %v1076
    %v1161 = vpack.c.bf16 %v1081, %v1077
    %v1162 = vpack.c.bf16 %v1086, %v1082
    %v1163 = vpack.c.bf16 %v1087, %v1083
    %v1164 = vpack.c.bf16 %v1088, %v1084
    %v1165 = vpack.c.bf16 %v1089, %v1085
    %v1166 = vpack.c.bf16 %v1094, %v1090
    %v1167 = vpack.c.bf16 %v1095, %v1091
    %v1168 = vpack.c.bf16 %v1096, %v1092
    %v1169 = vpack.c.bf16 %v1097, %v1093
    %v1170 = vpack.c.bf16 %v1102, %v1098
    %v1171 = vpack.c.bf16 %v1103, %v1099
    %v1172 = vpack.c.bf16 %v1104, %v1100
    %v1173 = vpack.c.bf16 %v1105, %v1101
    %v1174 = vpack.c.bf16 %v1110, %v1106
    %v1175 = vpack.c.bf16 %v1111, %v1107
    %v1176 = vpack.c.bf16 %v1112, %v1108
    %v1177 = vpack.c.bf16 %v1113, %v1109
    %v1178 = vld [vmem:[%s3] sm:$0xf]
    %v1179 = vld [vmem:[%s3 + $0x4] sm:$0xf]
    %v1180 = vld [vmem:[%s3 + $0x8] sm:$0xf]
    %v1181 = vld [vmem:[%s3 + $0xc] sm:$0xf]
    %v1182 = vld [vmem:[%s3 + $0x10] sm:$0xf]
    %v1183 = vld [vmem:[%s3 + $0x14] sm:$0xf]
    %v1184 = vld [vmem:[%s3 + $0x18] sm:$0xf]
    %v1185 = vld [vmem:[%s3 + $0x1c] sm:$0xf]
    %v1186 = vld [vmem:[%s3 + $0x20] sm:$0xf]
    %v1187 = vld [vmem:[%s3 + $0x24] sm:$0xf]
    %v1188 = vld [vmem:[%s3 + $0x28] sm:$0xf]
    %v1189 = vld [vmem:[%s3 + $0x2c] sm:$0xf]
    %v1190 = vld [vmem:[%s3 + $0x30] sm:$0xf]
    %v1191 = vld [vmem:[%s3 + $0x34] sm:$0xf]
    %v1192 = vld [vmem:[%s3 + $0x38] sm:$0xf]
    %v1193 = vld [vmem:[%s3 + $0x3c] sm:$0xf]
    %v1194 = vld [vmem:[%s3 + $0x40] sm:$0xf]
    %v1195 = vld [vmem:[%s3 + $0x44] sm:$0xf]
    %v1196 = vld [vmem:[%s3 + $0x48] sm:$0xf]
    %v1197 = vld [vmem:[%s3 + $0x4c] sm:$0xf]
    %v1198 = vld [vmem:[%s3 + $0x50] sm:$0xf]
    %v1199 = vld [vmem:[%s3 + $0x54] sm:$0xf]
    %v1200 = vld [vmem:[%s3 + $0x58] sm:$0xf]
    %v1201 = vld [vmem:[%s3 + $0x5c] sm:$0xf]
    %v1202 = vld [vmem:[%s3 + $0x60] sm:$0xf]
    %v1203 = vld [vmem:[%s3 + $0x64] sm:$0xf]
    %v1204 = vld [vmem:[%s3 + $0x68] sm:$0xf]
    %v1205 = vld [vmem:[%s3 + $0x6c] sm:$0xf]
    %v1206 = vld [vmem:[%s3 + $0x70] sm:$0xf]
    %v1207 = vld [vmem:[%s3 + $0x74] sm:$0xf]
    %v1208 = vld [vmem:[%s3 + $0x78] sm:$0xf]
    %v1209 = vld [vmem:[%s3 + $0x7c] sm:$0xf]
    %v1210 = vld [vmem:[%s3 + $0x80] sm:$0xf]
    %v1211 = vld [vmem:[%s3 + $0x84] sm:$0xf]
    %v1212 = vld [vmem:[%s3 + $0x88] sm:$0xf]
    %v1213 = vld [vmem:[%s3 + $0x8c] sm:$0xf]
    %v1214 = vld [vmem:[%s3 + $0x90] sm:$0xf]
    %v1215 = vld [vmem:[%s3 + $0x94] sm:$0xf]
    %v1216 = vld [vmem:[%s3 + $0x98] sm:$0xf]
    %v1217 = vld [vmem:[%s3 + $0x9c] sm:$0xf]
    %v1218 = vld [vmem:[%s3 + $0xa0] sm:$0xf]
    %v1219 = vld [vmem:[%s3 + $0xa4] sm:$0xf]
    %v1220 = vld [vmem:[%s3 + $0xa8] sm:$0xf]
    %v1221 = vld [vmem:[%s3 + $0xac] sm:$0xf]
    %v1222 = vld [vmem:[%s3 + $0xb0] sm:$0xf]
    %v1223 = vld [vmem:[%s3 + $0xb4] sm:$0xf]
    %v1224 = vld [vmem:[%s3 + $0xb8] sm:$0xf]
    %v1225 = vld [vmem:[%s3 + $0xbc] sm:$0xf]
    %v1226 = vld [vmem:[%s3 + $0xc0] sm:$0xf]
    %v1227 = vld [vmem:[%s3 + $0xc4] sm:$0xf]
    %v1228 = vld [vmem:[%s3 + $0xc8] sm:$0xf]
    %v1229 = vld [vmem:[%s3 + $0xcc] sm:$0xf]
    %v1230 = vld [vmem:[%s3 + $0xd0] sm:$0xf]
    %v1231 = vld [vmem:[%s3 + $0xd4] sm:$0xf]
    %v1232 = vld [vmem:[%s3 + $0xd8] sm:$0xf]
    %v1233 = vld [vmem:[%s3 + $0xdc] sm:$0xf]
    %v1234 = vld [vmem:[%s3 + $0xe0] sm:$0xf]
    %v1235 = vld [vmem:[%s3 + $0xe4] sm:$0xf]
    %v1236 = vld [vmem:[%s3 + $0xe8] sm:$0xf]
    %v1237 = vld [vmem:[%s3 + $0xec] sm:$0xf]
    %v1238 = vld [vmem:[%s3 + $0xf0] sm:$0xf]
    %v1239 = vld [vmem:[%s3 + $0xf4] sm:$0xf]
    %v1240 = vld [vmem:[%s3 + $0xf8] sm:$0xf]
    %v1241 = vld [vmem:[%s3 + $0xfc] sm:$0xf]
    %v1242 = vld [vmem:[%s4] sm:$0x1]
    %v1244 = vlaneseq
    %v1245 = vshrl.u32 %v1244, 7
    %v1246 = vsub.s32 0, %v1245
    %v1247 = vrot.slane %v1242, %v1246
    %v1313 = vunpack.c.l.b16 %v1178
    %v1314 = vunpack.c.l.b16 %v1179
    %v1315 = vunpack.c.l.b16 %v1180
    %v1316 = vunpack.c.l.b16 %v1181
    %v1317 = vunpack.c.l.b16 %v1182
    %v1318 = vunpack.c.l.b16 %v1183
    %v1319 = vunpack.c.l.b16 %v1184
    %v1320 = vunpack.c.l.b16 %v1185
    %v1321 = vunpack.c.l.b16 %v1186
    %v1322 = vunpack.c.l.b16 %v1187
    %v1323 = vunpack.c.l.b16 %v1188
    %v1324 = vunpack.c.l.b16 %v1189
    %v1325 = vunpack.c.l.b16 %v1190
    %v1326 = vunpack.c.l.b16 %v1191
    %v1327 = vunpack.c.l.b16 %v1192
    %v1328 = vunpack.c.l.b16 %v1193
    %v1329 = vunpack.c.l.b16 %v1194
    %v1330 = vunpack.c.l.b16 %v1195
    %v1331 = vunpack.c.l.b16 %v1196
    %v1332 = vunpack.c.l.b16 %v1197
    %v1333 = vunpack.c.l.b16 %v1198
    %v1334 = vunpack.c.l.b16 %v1199
    %v1335 = vunpack.c.l.b16 %v1200
    %v1336 = vunpack.c.l.b16 %v1201
    %v1337 = vunpack.c.l.b16 %v1202
    %v1338 = vunpack.c.l.b16 %v1203
    %v1339 = vunpack.c.l.b16 %v1204
    %v1340 = vunpack.c.l.b16 %v1205
    %v1341 = vunpack.c.l.b16 %v1206
    %v1342 = vunpack.c.l.b16 %v1207
    %v1343 = vunpack.c.l.b16 %v1208
    %v1344 = vunpack.c.l.b16 %v1209
    %v1345 = vunpack.c.l.b16 %v1210
    %v1346 = vunpack.c.l.b16 %v1211
    %v1347 = vunpack.c.l.b16 %v1212
    %v1348 = vunpack.c.l.b16 %v1213
    %v1349 = vunpack.c.l.b16 %v1214
    %v1350 = vunpack.c.l.b16 %v1215
    %v1351 = vunpack.c.l.b16 %v1216
    %v1352 = vunpack.c.l.b16 %v1217
    %v1353 = vunpack.c.l.b16 %v1218
    %v1354 = vunpack.c.l.b16 %v1219
    %v1355 = vunpack.c.l.b16 %v1220
    %v1356 = vunpack.c.l.b16 %v1221
    %v1357 = vunpack.c.l.b16 %v1222
    %v1358 = vunpack.c.l.b16 %v1223
    %v1359 = vunpack.c.l.b16 %v1224
    %v1360 = vunpack.c.l.b16 %v1225
    %v1361 = vunpack.c.l.b16 %v1226
    %v1362 = vunpack.c.l.b16 %v1227
    %v1363 = vunpack.c.l.b16 %v1228
    %v1364 = vunpack.c.l.b16 %v1229
    %v1365 = vunpack.c.l.b16 %v1230
    %v1366 = vunpack.c.l.b16 %v1231
    %v1367 = vunpack.c.l.b16 %v1232
    %v1368 = vunpack.c.l.b16 %v1233
    %v1369 = vunpack.c.l.b16 %v1234
    %v1370 = vunpack.c.l.b16 %v1235
    %v1371 = vunpack.c.l.b16 %v1236
    %v1372 = vunpack.c.l.b16 %v1237
    %v1373 = vunpack.c.l.b16 %v1238
    %v1374 = vunpack.c.l.b16 %v1239
    %v1375 = vunpack.c.l.b16 %v1240
    %v1376 = vunpack.c.l.b16 %v1241
    %v1377 = vpack.c.b16 %v1314, %v1313
    %v1378 = vpack.c.b16 %v1316, %v1315
    %v1379 = vpack.c.b16 %v1318, %v1317
    %v1380 = vpack.c.b16 %v1320, %v1319
    %v1381 = vpack.c.b16 %v1322, %v1321
    %v1382 = vpack.c.b16 %v1324, %v1323
    %v1383 = vpack.c.b16 %v1326, %v1325
    %v1384 = vpack.c.b16 %v1328, %v1327
    %v1385 = vpack.c.b16 %v1330, %v1329
    %v1386 = vpack.c.b16 %v1332, %v1331
    %v1387 = vpack.c.b16 %v1334, %v1333
    %v1388 = vpack.c.b16 %v1336, %v1335
    %v1389 = vpack.c.b16 %v1338, %v1337
    %v1390 = vpack.c.b16 %v1340, %v1339
    %v1391 = vpack.c.b16 %v1342, %v1341
    %v1392 = vpack.c.b16 %v1344, %v1343
    %v1393 = vpack.c.b16 %v1346, %v1345
    %v1394 = vpack.c.b16 %v1348, %v1347
    %v1395 = vpack.c.b16 %v1350, %v1349
    %v1396 = vpack.c.b16 %v1352, %v1351
    %v1397 = vpack.c.b16 %v1354, %v1353
    %v1398 = vpack.c.b16 %v1356, %v1355
    %v1399 = vpack.c.b16 %v1358, %v1357
    %v1400 = vpack.c.b16 %v1360, %v1359
    %v1401 = vpack.c.b16 %v1362, %v1361
    %v1402 = vpack.c.b16 %v1364, %v1363
    %v1403 = vpack.c.b16 %v1366, %v1365
    %v1404 = vpack.c.b16 %v1368, %v1367
    %v1405 = vpack.c.b16 %v1370, %v1369
    %v1406 = vpack.c.b16 %v1372, %v1371
    %v1407 = vpack.c.b16 %v1374, %v1373
    %v1408 = vpack.c.b16 %v1376, %v1375
    %1441 = vmatprep.subr.bf16.mxu0 0
    %1442 = vmatpush1.bf16.msra.mxu0 %v1377
    %1443 = vmatprep.subr.bf16.mxu0 0
    %1444 = vmatpush1.bf16.msra.mxu0 %v1378
    %1445 = vmatprep.subr.bf16.mxu0 0
    %1446 = vmatpush1.bf16.msra.mxu0 %v1379
    %1447 = vmatprep.subr.bf16.mxu0 0
    %1448 = vmatpush1.bf16.msra.mxu0 %v1380
    %1449 = vmatprep.subr.bf16.mxu0 0
    %1450 = vmatpush1.bf16.msra.mxu0 %v1381
    %1451 = vmatprep.subr.bf16.mxu0 0
    %1452 = vmatpush1.bf16.msra.mxu0 %v1382
    %1453 = vmatprep.subr.bf16.mxu0 0
    %1454 = vmatpush1.bf16.msra.mxu0 %v1383
    %1455 = vmatprep.subr.bf16.mxu0 0
    %1456 = vmatpush1.bf16.msra.mxu0 %v1384
    %1457 = vmatprep.subr.bf16.mxu0 0
    %1458 = vmatpush1.bf16.msra.mxu0 %v1385
    %1459 = vmatprep.subr.bf16.mxu0 0
    %1460 = vmatpush1.bf16.msra.mxu0 %v1386
    %1461 = vmatprep.subr.bf16.mxu0 0
    %1462 = vmatpush1.bf16.msra.mxu0 %v1387
    %1463 = vmatprep.subr.bf16.mxu0 0
    %1464 = vmatpush1.bf16.msra.mxu0 %v1388
    %1465 = vmatprep.subr.bf16.mxu0 0
    %1466 = vmatpush1.bf16.msra.mxu0 %v1389
    %1467 = vmatprep.subr.bf16.mxu0 0
    %1468 = vmatpush1.bf16.msra.mxu0 %v1390
    %1469 = vmatprep.subr.bf16.mxu0 0
    %1470 = vmatpush1.bf16.msra.mxu0 %v1391
    %1471 = vmatprep.subr.bf16.mxu0 0
    %1472 = vmatpush1.bf16.msra.mxu0 %v1392
    %1473 = vmatprep.mubr.bf16.mxu0 %v1115
    %1474 = vmatmul.mubr.bf16.gmra.mrb[0].mxu0 %v1114
    %v1475 = vpop.f32.mrb[0].mxu0
    %v1476 = vadd.f32 %v1247, %v1475
    %v1477 = vpop.f32.mrb[0].mxu0
    %v1478 = vpop.f32.mrb[0].mxu0
    %v1479 = vadd.f32 %v1247, %v1478
    %v1480 = vpop.f32.mrb[0].mxu0
    %1481 = vmatprep.mubr.bf16.mxu0 %v1119
    %1482 = vmatmul.mubr.bf16.gmra.mrb[0].mxu0 %v1118
    %v1483 = vpop.f32.mrb[0].mxu0
    %v1484 = vadd.f32 %v1247, %v1483
    %v1485 = vpop.f32.mrb[0].mxu0
    %v1486 = vpop.f32.mrb[0].mxu0
    %v1487 = vadd.f32 %v1247, %v1486
    %v1488 = vpop.f32.mrb[0].mxu0
    %1489 = vmatprep.mubr.bf16.mxu0 %v1123
    %1490 = vmatmul.mubr.bf16.gmra.mrb[0].mxu0 %v1122
    %v1491 = vpop.f32.mrb[0].mxu0
    %v1492 = vadd.f32 %v1247, %v1491
    %v1493 = vpop.f32.mrb[0].mxu0
    %v1494 = vpop.f32.mrb[0].mxu0
    %v1495 = vadd.f32 %v1247, %v1494
    %v1496 = vpop.f32.mrb[0].mxu0
    %1497 = vmatprep.mubr.bf16.mxu0 %v1127
    %1498 = vmatmul.mubr.bf16.gmra.mrb[0].mxu0 %v1126
    %v1499 = vpop.f32.mrb[0].mxu0
    %v1500 = vadd.f32 %v1247, %v1499
    %v1501 = vpop.f32.mrb[0].mxu0
    %v1502 = vpop.f32.mrb[0].mxu0
    %v1503 = vadd.f32 %v1247, %v1502
    %v1504 = vpop.f32.mrb[0].mxu0
    %1505 = vmatprep.mubr.bf16.mxu0 %v1131
    %1506 = vmatmul.mubr.bf16.gmra.mrb[0].mxu0 %v1130
    %v1507 = vpop.f32.mrb[0].mxu0
    %v1508 = vadd.f32 %v1247, %v1507
    %v1509 = vpop.f32.mrb[0].mxu0
    %v1510 = vpop.f32.mrb[0].mxu0
    %v1511 = vadd.f32 %v1247, %v1510
    %v1512 = vpop.f32.mrb[0].mxu0
    %1513 = vmatprep.mubr.bf16.mxu0 %v1135
    %1514 = vmatmul.mubr.bf16.gmra.mrb[0].mxu0 %v1134
    %v1515 = vpop.f32.mrb[0].mxu0
    %v1516 = vadd.f32 %v1247, %v1515
    %v1517 = vpop.f32.mrb[0].mxu0
    %v1518 = vpop.f32.mrb[0].mxu0
    %v1519 = vadd.f32 %v1247, %v1518
    %v1520 = vpop.f32.mrb[0].mxu0
    %1521 = vmatprep.mubr.bf16.mxu0 %v1139
    %1522 = vmatmul.mubr.bf16.gmra.mrb[0].mxu0 %v1138
    %v1523 = vpop.f32.mrb[0].mxu0
    %v1524 = vadd.f32 %v1247, %v1523
    %v1525 = vpop.f32.mrb[0].mxu0
    %v1526 = vpop.f32.mrb[0].mxu0
    %v1527 = vadd.f32 %v1247, %v1526
    %v1528 = vpop.f32.mrb[0].mxu0
    %1529 = vmatprep.mubr.bf16.mxu0 %v1143
    %1530 = vmatmul.mubr.bf16.gmra.mrb[0].mxu0 %v1142
    %v1531 = vpop.f32.mrb[0].mxu0
    %v1532 = vadd.f32 %v1247, %v1531
    %v1533 = vpop.f32.mrb[0].mxu0
    %v1534 = vpop.f32.mrb[0].mxu0
    %v1535 = vadd.f32 %v1247, %v1534
    %v1536 = vpop.f32.mrb[0].mxu0
    %1537 = vmatprep.mubr.bf16.mxu0 %v1147
    %1538 = vmatmul.mubr.bf16.gmra.mrb[0].mxu0 %v1146
    %v1539 = vpop.f32.mrb[0].mxu0
    %v1540 = vadd.f32 %v1247, %v1539
    %v1541 = vpop.f32.mrb[0].mxu0
    %v1542 = vpop.f32.mrb[0].mxu0
    %v1543 = vadd.f32 %v1247, %v1542
    %v1544 = vpop.f32.mrb[0].mxu0
    %1545 = vmatprep.mubr.bf16.mxu0 %v1151
    %1546 = vmatmul.mubr.bf16.gmra.mrb[0].mxu0 %v1150
    %v1547 = vpop.f32.mrb[0].mxu0
    %v1548 = vadd.f32 %v1247, %v1547
    %v1549 = vpop.f32.mrb[0].mxu0
    %v1550 = vpop.f32.mrb[0].mxu0
    %v1551 = vadd.f32 %v1247, %v1550
    %v1552 = vpop.f32.mrb[0].mxu0
    %1553 = vmatprep.mubr.bf16.mxu0 %v1155
    %1554 = vmatmul.mubr.bf16.gmra.mrb[0].mxu0 %v1154
    %v1555 = vpop.f32.mrb[0].mxu0
    %v1556 = vadd.f32 %v1247, %v1555
    %v1557 = vpop.f32.mrb[0].mxu0
    %v1558 = vpop.f32.mrb[0].mxu0
    %v1559 = vadd.f32 %v1247, %v1558
    %v1560 = vpop.f32.mrb[0].mxu0
    %1561 = vmatprep.mubr.bf16.mxu0 %v1159
    %1562 = vmatmul.mubr.bf16.gmra.mrb[0].mxu0 %v1158
    %v1563 = vpop.f32.mrb[0].mxu0
    %v1564 = vadd.f32 %v1247, %v1563
    %v1565 = vpop.f32.mrb[0].mxu0
    %v1566 = vpop.f32.mrb[0].mxu0
    %v1567 = vadd.f32 %v1247, %v1566
    %v1568 = vpop.f32.mrb[0].mxu0
    %1569 = vmatprep.mubr.bf16.mxu0 %v1163
    %1570 = vmatmul.mubr.bf16.gmra.mrb[0].mxu0 %v1162
    %v1571 = vpop.f32.mrb[0].mxu0
    %v1572 = vadd.f32 %v1247, %v1571
    %v1573 = vpop.f32.mrb[0].mxu0
    %v1574 = vpop.f32.mrb[0].mxu0
    %v1575 = vadd.f32 %v1247, %v1574
    %v1576 = vpop.f32.mrb[0].mxu0
    %1577 = vmatprep.mubr.bf16.mxu0 %v1167
    %1578 = vmatmul.mubr.bf16.gmra.mrb[0].mxu0 %v1166
    %v1579 = vpop.f32.mrb[0].mxu0
    %v1580 = vadd.f32 %v1247, %v1579
    %v1581 = vpop.f32.mrb[0].mxu0
    %v1582 = vpop.f32.mrb[0].mxu0
    %v1583 = vadd.f32 %v1247, %v1582
    %v1584 = vpop.f32.mrb[0].mxu0
    %1585 = vmatprep.mubr.bf16.mxu0 %v1171
    %1586 = vmatmul.mubr.bf16.gmra.mrb[0].mxu0 %v1170
    %v1587 = vpop.f32.mrb[0].mxu0
    %v1588 = vadd.f32 %v1247, %v1587
    %v1589 = vpop.f32.mrb[0].mxu0
    %v1590 = vpop.f32.mrb[0].mxu0
    %v1591 = vadd.f32 %v1247, %v1590
    %v1592 = vpop.f32.mrb[0].mxu0
    %1593 = vmatprep.mubr.bf16.mxu0 %v1175
    %1594 = vmatmul.mubr.bf16.gmra.mrb[0].mxu0 %v1174
    %v1595 = vpop.f32.mrb[0].mxu0
    %v1596 = vadd.f32 %v1247, %v1595
    %v1597 = vpop.f32.mrb[0].mxu0
    %v1598 = vpop.f32.mrb[0].mxu0
    %v1599 = vadd.f32 %v1247, %v1598
    %v1600 = vpop.f32.mrb[0].mxu0
    %1601 = vdwg.mxu0
    %1602 = vmatprep.subr.bf16.mxu0 0
    %1603 = vmatpush1.bf16.msra.mxu0 %v1393
    %1604 = vmatprep.subr.bf16.mxu0 0
    %1605 = vmatpush1.bf16.msra.mxu0 %v1394
    %1606 = vmatprep.subr.bf16.mxu0 0
    %1607 = vmatpush1.bf16.msra.mxu0 %v1395
    %1608 = vmatprep.subr.bf16.mxu0 0
    %1609 = vmatpush1.bf16.msra.mxu0 %v1396
    %1610 = vmatprep.subr.bf16.mxu0 0
    %1611 = vmatpush1.bf16.msra.mxu0 %v1397
    %1612 = vmatprep.subr.bf16.mxu0 0
    %1613 = vmatpush1.bf16.msra.mxu0 %v1398
    %1614 = vmatprep.subr.bf16.mxu0 0
    %1615 = vmatpush1.bf16.msra.mxu0 %v1399
    %1616 = vmatprep.subr.bf16.mxu0 0
    %1617 = vmatpush1.bf16.msra.mxu0 %v1400
    %1618 = vmatprep.subr.bf16.mxu0 0
    %1619 = vmatpush1.bf16.msra.mxu0 %v1401
    %1620 = vmatprep.subr.bf16.mxu0 0
    %1621 = vmatpush1.bf16.msra.mxu0 %v1402
    %1622 = vmatprep.subr.bf16.mxu0 0
    %1623 = vmatpush1.bf16.msra.mxu0 %v1403
    %1624 = vmatprep.subr.bf16.mxu0 0
    %1625 = vmatpush1.bf16.msra.mxu0 %v1404
    %1626 = vmatprep.subr.bf16.mxu0 0
    %1627 = vmatpush1.bf16.msra.mxu0 %v1405
    %1628 = vmatprep.subr.bf16.mxu0 0
    %1629 = vmatpush1.bf16.msra.mxu0 %v1406
    %1630 = vmatprep.subr.bf16.mxu0 0
    %1631 = vmatpush1.bf16.msra.mxu0 %v1407
    %1632 = vmatprep.subr.bf16.mxu0 0
    %1633 = vmatpush1.bf16.msra.mxu0 %v1408
    %1634 = vmatprep.mubr.bf16.mxu0 %v1117
    %1635 = vmatmul.mubr.bf16.gmra.mrb[0].mxu0 %v1116
    %v1636 = vpop.f32.mrb[0].mxu0
    %v1637 = vadd.f32 %v1476, %v1636
    %v1638 = vpop.f32.mrb[0].mxu0
    %v1639 = vpop.f32.mrb[0].mxu0
    %v1640 = vadd.f32 %v1479, %v1639
    %v1641 = vpop.f32.mrb[0].mxu0
    %1642 = vmatprep.mubr.bf16.mxu0 %v1121
    %1643 = vmatmul.mubr.bf16.gmra.mrb[0].mxu0 %v1120
    %v1644 = vpop.f32.mrb[0].mxu0
    %v1645 = vadd.f32 %v1484, %v1644
    %v1646 = vpop.f32.mrb[0].mxu0
    %v1647 = vpop.f32.mrb[0].mxu0
    %v1648 = vadd.f32 %v1487, %v1647
    %v1649 = vpop.f32.mrb[0].mxu0
    %1650 = vmatprep.mubr.bf16.mxu0 %v1125
    %1651 = vmatmul.mubr.bf16.gmra.mrb[0].mxu0 %v1124
    %v1652 = vpop.f32.mrb[0].mxu0
    %v1653 = vadd.f32 %v1492, %v1652
    %v1654 = vpop.f32.mrb[0].mxu0
    %v1655 = vpop.f32.mrb[0].mxu0
    %v1656 = vadd.f32 %v1495, %v1655
    %v1657 = vpop.f32.mrb[0].mxu0
    %1658 = vmatprep.mubr.bf16.mxu0 %v1129
    %1659 = vmatmul.mubr.bf16.gmra.mrb[0].mxu0 %v1128
    %v1660 = vpop.f32.mrb[0].mxu0
    %v1661 = vadd.f32 %v1500, %v1660
    %v1662 = vpop.f32.mrb[0].mxu0
    %v1663 = vpop.f32.mrb[0].mxu0
    %v1664 = vadd.f32 %v1503, %v1663
    %v1665 = vpop.f32.mrb[0].mxu0
    %1666 = vmatprep.mubr.bf16.mxu0 %v1133
    %1667 = vmatmul.mubr.bf16.gmra.mrb[0].mxu0 %v1132
    %v1668 = vpop.f32.mrb[0].mxu0
    %v1669 = vadd.f32 %v1508, %v1668
    %v1670 = vpop.f32.mrb[0].mxu0
    %v1671 = vpop.f32.mrb[0].mxu0
    %v1672 = vadd.f32 %v1511, %v1671
    %v1673 = vpop.f32.mrb[0].mxu0
    %1674 = vmatprep.mubr.bf16.mxu0 %v1137
    %1675 = vmatmul.mubr.bf16.gmra.mrb[0].mxu0 %v1136
    %v1676 = vpop.f32.mrb[0].mxu0
    %v1677 = vadd.f32 %v1516, %v1676
    %v1678 = vpop.f32.mrb[0].mxu0
    %v1679 = vpop.f32.mrb[0].mxu0
    %v1680 = vadd.f32 %v1519, %v1679
    %v1681 = vpop.f32.mrb[0].mxu0
    %1682 = vmatprep.mubr.bf16.mxu0 %v1141
    %1683 = vmatmul.mubr.bf16.gmra.mrb[0].mxu0 %v1140
    %v1684 = vpop.f32.mrb[0].mxu0
    %v1685 = vadd.f32 %v1524, %v1684
    %v1686 = vpop.f32.mrb[0].mxu0
    %v1687 = vpop.f32.mrb[0].mxu0
    %v1688 = vadd.f32 %v1527, %v1687
    %v1689 = vpop.f32.mrb[0].mxu0
    %1690 = vmatprep.mubr.bf16.mxu0 %v1145
    %1691 = vmatmul.mubr.bf16.gmra.mrb[0].mxu0 %v1144
    %v1692 = vpop.f32.mrb[0].mxu0
    %v1693 = vadd.f32 %v1532, %v1692
    %v1694 = vpop.f32.mrb[0].mxu0
    %v1695 = vpop.f32.mrb[0].mxu0
    %v1696 = vadd.f32 %v1535, %v1695
    %v1697 = vpop.f32.mrb[0].mxu0
    %1698 = vmatprep.mubr.bf16.mxu0 %v1149
    %1699 = vmatmul.mubr.bf16.gmra.mrb[0].mxu0 %v1148
    %v1700 = vpop.f32.mrb[0].mxu0
    %v1701 = vadd.f32 %v1540, %v1700
    %v1702 = vpop.f32.mrb[0].mxu0
    %v1703 = vpop.f32.mrb[0].mxu0
    %v1704 = vadd.f32 %v1543, %v1703
    %v1705 = vpop.f32.mrb[0].mxu0
    %1706 = vmatprep.mubr.bf16.mxu0 %v1153
    %1707 = vmatmul.mubr.bf16.gmra.mrb[0].mxu0 %v1152
    %v1708 = vpop.f32.mrb[0].mxu0
    %v1709 = vadd.f32 %v1548, %v1708
    %v1710 = vpop.f32.mrb[0].mxu0
    %v1711 = vpop.f32.mrb[0].mxu0
    %v1712 = vadd.f32 %v1551, %v1711
    %v1713 = vpop.f32.mrb[0].mxu0
    %1714 = vmatprep.mubr.bf16.mxu0 %v1157
    %1715 = vmatmul.mubr.bf16.gmra.mrb[0].mxu0 %v1156
    %v1716 = vpop.f32.mrb[0].mxu0
    %v1717 = vadd.f32 %v1556, %v1716
    %v1718 = vpop.f32.mrb[0].mxu0
    %v1719 = vpop.f32.mrb[0].mxu0
    %v1720 = vadd.f32 %v1559, %v1719
    %v1721 = vpop.f32.mrb[0].mxu0
    %1722 = vmatprep.mubr.bf16.mxu0 %v1161
    %1723 = vmatmul.mubr.bf16.gmra.mrb[0].mxu0 %v1160
    %v1724 = vpop.f32.mrb[0].mxu0
    %v1725 = vadd.f32 %v1564, %v1724
    %v1726 = vpop.f32.mrb[0].mxu0
    %v1727 = vpop.f32.mrb[0].mxu0
    %v1728 = vadd.f32 %v1567, %v1727
    %v1729 = vpop.f32.mrb[0].mxu0
    %1730 = vmatprep.mubr.bf16.mxu0 %v1165
    %1731 = vmatmul.mubr.bf16.gmra.mrb[0].mxu0 %v1164
    %v1732 = vpop.f32.mrb[0].mxu0
    %v1733 = vadd.f32 %v1572, %v1732
    %v1734 = vpop.f32.mrb[0].mxu0
    %v1735 = vpop.f32.mrb[0].mxu0
    %v1736 = vadd.f32 %v1575, %v1735
    %v1737 = vpop.f32.mrb[0].mxu0
    %1738 = vmatprep.mubr.bf16.mxu0 %v1169
    %1739 = vmatmul.mubr.bf16.gmra.mrb[0].mxu0 %v1168
    %v1740 = vpop.f32.mrb[0].mxu0
    %v1741 = vadd.f32 %v1580, %v1740
    %v1742 = vpop.f32.mrb[0].mxu0
    %v1743 = vpop.f32.mrb[0].mxu0
    %v1744 = vadd.f32 %v1583, %v1743
    %v1745 = vpop.f32.mrb[0].mxu0
    %1746 = vmatprep.mubr.bf16.mxu0 %v1173
    %1747 = vmatmul.mubr.bf16.gmra.mrb[0].mxu0 %v1172
    %v1748 = vpop.f32.mrb[0].mxu0
    %v1749 = vadd.f32 %v1588, %v1748
    %v1750 = vpop.f32.mrb[0].mxu0
    %v1751 = vpop.f32.mrb[0].mxu0
    %v1752 = vadd.f32 %v1591, %v1751
    %v1753 = vpop.f32.mrb[0].mxu0
    %1754 = vmatprep.mubr.bf16.mxu0 %v1177
    %1755 = vmatmul.mubr.bf16.gmra.mrb[0].mxu0 %v1176
    %v1756 = vpop.f32.mrb[0].mxu0
    %v1757 = vadd.f32 %v1596, %v1756
    %v1758 = vpop.f32.mrb[0].mxu0
    %v1759 = vpop.f32.mrb[0].mxu0
    %v1760 = vadd.f32 %v1599, %v1759
    %v1761 = vpop.f32.mrb[0].mxu0
    %1762 = vdwg.mxu0
    %v1763 = vtanh.pop %v1637
    %v1764 = vtanh.pop %v1640
    %v1765 = vtanh.pop %v1645
    %v1766 = vtanh.pop %v1648
    %v1767 = vtanh.pop %v1653
    %v1768 = vtanh.pop %v1656
    %v1769 = vtanh.pop %v1661
    %v1770 = vtanh.pop %v1664
    %v1771 = vtanh.pop %v1669
    %v1772 = vtanh.pop %v1672
    %v1773 = vtanh.pop %v1677
    %v1774 = vtanh.pop %v1680
    %v1775 = vtanh.pop %v1685
    %v1776 = vtanh.pop %v1688
    %v1777 = vtanh.pop %v1693
    %v1778 = vtanh.pop %v1696
    %v1779 = vtanh.pop %v1701
    %v1780 = vtanh.pop %v1704
    %v1781 = vtanh.pop %v1709
    %v1782 = vtanh.pop %v1712
    %v1783 = vtanh.pop %v1717
    %v1784 = vtanh.pop %v1720
    %v1785 = vtanh.pop %v1725
    %v1786 = vtanh.pop %v1728
    %v1787 = vtanh.pop %v1733
    %v1788 = vtanh.pop %v1736
    %v1789 = vtanh.pop %v1741
    %v1790 = vtanh.pop %v1744
    %v1791 = vtanh.pop %v1749
    %v1792 = vtanh.pop %v1752
    %v1793 = vtanh.pop %v1757
    %v1794 = vtanh.pop %v1760
    %v1795 = vld [vmem:[%s5] sm:$0x1]
    %v1797 = vlaneseq
    %v1798 = vshrl.u32 %v1797, 7
    %v1799 = vsub.s32 0, %v1798
    %v1800 = vrot.slane %v1795, %v1799
    %v1802 = vmul.f32 %v1763, %v1800
    %v1803 = vmul.f32 %v1764, %v1800
    %v1804 = vmul.f32 %v1765, %v1800
    %v1805 = vmul.f32 %v1766, %v1800
    %v1806 = vmul.f32 %v1767, %v1800
    %v1807 = vmul.f32 %v1768, %v1800
    %v1808 = vmul.f32 %v1769, %v1800
    %v1809 = vmul.f32 %v1770, %v1800
    %v1810 = vmul.f32 %v1771, %v1800
    %v1811 = vmul.f32 %v1772, %v1800
    %v1812 = vmul.f32 %v1773, %v1800
    %v1813 = vmul.f32 %v1774, %v1800
    %v1814 = vmul.f32 %v1775, %v1800
    %v1815 = vmul.f32 %v1776, %v1800
    %v1816 = vmul.f32 %v1777, %v1800
    %v1817 = vmul.f32 %v1778, %v1800
    %v1818 = vmul.f32 %v1779, %v1800
    %v1819 = vmul.f32 %v1780, %v1800
    %v1820 = vmul.f32 %v1781, %v1800
    %v1821 = vmul.f32 %v1782, %v1800
    %v1822 = vmul.f32 %v1783, %v1800
    %v1823 = vmul.f32 %v1784, %v1800
    %v1824 = vmul.f32 %v1785, %v1800
    %v1825 = vmul.f32 %v1786, %v1800
    %v1826 = vmul.f32 %v1787, %v1800
    %v1827 = vmul.f32 %v1788, %v1800
    %v1828 = vmul.f32 %v1789, %v1800
    %v1829 = vmul.f32 %v1790, %v1800
    %v1830 = vmul.f32 %v1791, %v1800
    %v1831 = vmul.f32 %v1792, %v1800
    %v1832 = vmul.f32 %v1793, %v1800
    %v1833 = vmul.f32 %v1794, %v1800
    %1834 = vadd.xlane.f32.xlu0 %v1802
    %v1835 = vpop.xlane.xlu0 %1834
    %1836 = vadd.xlane.f32.xlu0 %v1803
    %v1837 = vpop.xlane.xlu0 %1836
    %1838 = vadd.xlane.f32.xlu0 %v1804
    %v1839 = vpop.xlane.xlu0 %1838
    %1840 = vadd.xlane.f32.xlu0 %v1805
    %v1841 = vpop.xlane.xlu0 %1840
    %1842 = vadd.xlane.f32.xlu0 %v1806
    %v1843 = vpop.xlane.xlu0 %1842
    %1844 = vadd.xlane.f32.xlu0 %v1807
    %v1845 = vpop.xlane.xlu0 %1844
    %1846 = vadd.xlane.f32.xlu0 %v1808
    %v1847 = vpop.xlane.xlu0 %1846
    %1848 = vadd.xlane.f32.xlu0 %v1809
    %v1849 = vpop.xlane.xlu0 %1848
    %1850 = vadd.xlane.f32.xlu0 %v1810
    %v1851 = vpop.xlane.xlu0 %1850
    %1852 = vadd.xlane.f32.xlu0 %v1811
    %v1853 = vpop.xlane.xlu0 %1852
    %1854 = vadd.xlane.f32.xlu0 %v1812
    %v1855 = vpop.xlane.xlu0 %1854
    %1856 = vadd.xlane.f32.xlu0 %v1813
    %v1857 = vpop.xlane.xlu0 %1856
    %1858 = vadd.xlane.f32.xlu0 %v1814
    %v1859 = vpop.xlane.xlu0 %1858
    %1860 = vadd.xlane.f32.xlu0 %v1815
    %v1861 = vpop.xlane.xlu0 %1860
    %1862 = vadd.xlane.f32.xlu0 %v1816
    %v1863 = vpop.xlane.xlu0 %1862
    %1864 = vadd.xlane.f32.xlu0 %v1817
    %v1865 = vpop.xlane.xlu0 %1864
    %1866 = vadd.xlane.f32.xlu0 %v1818
    %v1867 = vpop.xlane.xlu0 %1866
    %1868 = vadd.xlane.f32.xlu0 %v1819
    %v1869 = vpop.xlane.xlu0 %1868
    %1870 = vadd.xlane.f32.xlu0 %v1820
    %v1871 = vpop.xlane.xlu0 %1870
    %1872 = vadd.xlane.f32.xlu0 %v1821
    %v1873 = vpop.xlane.xlu0 %1872
    %1874 = vadd.xlane.f32.xlu0 %v1822
    %v1875 = vpop.xlane.xlu0 %1874
    %1876 = vadd.xlane.f32.xlu0 %v1823
    %v1877 = vpop.xlane.xlu0 %1876
    %1878 = vadd.xlane.f32.xlu0 %v1824
    %v1879 = vpop.xlane.xlu0 %1878
    %1880 = vadd.xlane.f32.xlu0 %v1825
    %v1881 = vpop.xlane.xlu0 %1880
    %1882 = vadd.xlane.f32.xlu0 %v1826
    %v1883 = vpop.xlane.xlu0 %1882
    %1884 = vadd.xlane.f32.xlu0 %v1827
    %v1885 = vpop.xlane.xlu0 %1884
    %1886 = vadd.xlane.f32.xlu0 %v1828
    %v1887 = vpop.xlane.xlu0 %1886
    %1888 = vadd.xlane.f32.xlu0 %v1829
    %v1889 = vpop.xlane.xlu0 %1888
    %1890 = vadd.xlane.f32.xlu0 %v1830
    %v1891 = vpop.xlane.xlu0 %1890
    %1892 = vadd.xlane.f32.xlu0 %v1831
    %v1893 = vpop.xlane.xlu0 %1892
    %1894 = vadd.xlane.f32.xlu0 %v1832
    %v1895 = vpop.xlane.xlu0 %1894
    %1896 = vadd.xlane.f32.xlu0 %v1833
    %v1897 = vpop.xlane.xlu0 %1896
    %v1898 = vld [vmem:[#allocation5] sm:$0x1]
    %v1900 = vlaneseq
    %v1901 = vshrl.u32 %v1900, 7
    %v1902 = vsub.s32 0, %v1901
    %v1903 = vrot.slane %v1898, %v1902
    %v1905 = vadd.f32 %v1835, %v1903
    %v1906 = vadd.f32 %v1837, %v1903
    %v1907 = vadd.f32 %v1839, %v1903
    %v1908 = vadd.f32 %v1841, %v1903
    %v1909 = vadd.f32 %v1843, %v1903
    %v1910 = vadd.f32 %v1845, %v1903
    %v1911 = vadd.f32 %v1847, %v1903
    %v1912 = vadd.f32 %v1849, %v1903
    %v1913 = vadd.f32 %v1851, %v1903
    %v1914 = vadd.f32 %v1853, %v1903
    %v1915 = vadd.f32 %v1855, %v1903
    %v1916 = vadd.f32 %v1857, %v1903
    %v1917 = vadd.f32 %v1859, %v1903
    %v1918 = vadd.f32 %v1861, %v1903
    %v1919 = vadd.f32 %v1863, %v1903
    %v1920 = vadd.f32 %v1865, %v1903
    %v1921 = vadd.f32 %v1867, %v1903
    %v1922 = vadd.f32 %v1869, %v1903
    %v1923 = vadd.f32 %v1871, %v1903
    %v1924 = vadd.f32 %v1873, %v1903
    %v1925 = vadd.f32 %v1875, %v1903
    %v1926 = vadd.f32 %v1877, %v1903
    %v1927 = vadd.f32 %v1879, %v1903
    %v1928 = vadd.f32 %v1881, %v1903
    %v1929 = vadd.f32 %v1883, %v1903
    %v1930 = vadd.f32 %v1885, %v1903
    %v1931 = vadd.f32 %v1887, %v1903
    %v1932 = vadd.f32 %v1889, %v1903
    %v1933 = vadd.f32 %v1891, %v1903
    %v1934 = vadd.f32 %v1893, %v1903
    %v1935 = vadd.f32 %v1895, %v1903
    %v1936 = vadd.f32 %v1897, %v1903
    %v1937 = vsel %vm161, %v1905, -1e+30
    %v1938 = vsel %vm162, %v1906, -1e+30
    %v1939 = vsel %vm163, %v1907, -1e+30
    %v1940 = vsel %vm164, %v1908, -1e+30
    %v1941 = vsel %vm165, %v1909, -1e+30
    %v1942 = vsel %vm166, %v1910, -1e+30
    %v1943 = vsel %vm167, %v1911, -1e+30
    %v1944 = vsel %vm168, %v1912, -1e+30
    %v1945 = vsel %vm169, %v1913, -1e+30
    %v1946 = vsel %vm170, %v1914, -1e+30
    %v1947 = vsel %vm171, %v1915, -1e+30
    %v1948 = vsel %vm172, %v1916, -1e+30
    %v1949 = vsel %vm173, %v1917, -1e+30
    %v1950 = vsel %vm174, %v1918, -1e+30
    %v1951 = vsel %vm175, %v1919, -1e+30
    %v1952 = vsel %vm176, %v1920, -1e+30
    %v1953 = vsel %vm177, %v1921, -1e+30
    %v1954 = vsel %vm178, %v1922, -1e+30
    %v1955 = vsel %vm179, %v1923, -1e+30
    %v1956 = vsel %vm180, %v1924, -1e+30
    %v1957 = vsel %vm181, %v1925, -1e+30
    %v1958 = vsel %vm182, %v1926, -1e+30
    %v1959 = vsel %vm183, %v1927, -1e+30
    %v1960 = vsel %vm184, %v1928, -1e+30
    %v1961 = vsel %vm185, %v1929, -1e+30
    %v1962 = vsel %vm186, %v1930, -1e+30
    %v1963 = vsel %vm187, %v1931, -1e+30
    %v1964 = vsel %vm188, %v1932, -1e+30
    %v1965 = vsel %vm189, %v1933, -1e+30
    %v1966 = vsel %vm190, %v1934, -1e+30
    %v1967 = vsel %vm191, %v1935, -1e+30
    %v1968 = vsel %vm192, %v1936, -1e+30
    %v1969 = vld [vmem:[#allocation2] sm:$0x1]
    %vm1970 = vcmask 7168
    %v1971 = vsel %vm1970, %v1937, -inf
    %v1972 = vsel %vm1970, %v1938, -inf
    %v1973 = vsel %vm1970, %v1939, -inf
    %v1974 = vsel %vm1970, %v1940, -inf
    %v1975 = vsel %vm1970, %v1941, -inf
    %v1976 = vmax.f32 %v1971, %v1975
    %v1977 = vsel %vm1970, %v1942, -inf
    %v1978 = vmax.f32 %v1972, %v1977
    %v1979 = vsel %vm1970, %v1943, -inf
    %v1980 = vmax.f32 %v1973, %v1979
    %v1981 = vsel %vm1970, %v1944, -inf
    %v1982 = vmax.f32 %v1974, %v1981
    %v1983 = vsel %vm1970, %v1945, -inf
    %v1984 = vmax.f32 %v1976, %v1983
    %v1985 = vsel %vm1970, %v1946, -inf
    %v1986 = vmax.f32 %v1978, %v1985
    %v1987 = vsel %vm1970, %v1947, -inf
    %v1988 = vmax.f32 %v1980, %v1987
    %v1989 = vsel %vm1970, %v1948, -inf
    %v1990 = vmax.f32 %v1982, %v1989
    %v1991 = vsel %vm1970, %v1949, -inf
    %v1992 = vmax.f32 %v1984, %v1991
    %v1993 = vsel %vm1970, %v1950, -inf
    %v1994 = vmax.f32 %v1986, %v1993
    %v1995 = vsel %vm1970, %v1951, -inf
    %v1996 = vmax.f32 %v1988, %v1995
    %v1997 = vsel %vm1970, %v1952, -inf
    %v1998 = vmax.f32 %v1990, %v1997
    %v1999 = vsel %vm1970, %v1953, -inf
    %v2000 = vmax.f32 %v1992, %v1999
    %v2001 = vsel %vm1970, %v1954, -inf
    %v2002 = vmax.f32 %v1994, %v2001
    %v2003 = vsel %vm1970, %v1955, -inf
    %v2004 = vmax.f32 %v1996, %v2003
    %v2005 = vsel %vm1970, %v1956, -inf
    %v2006 = vmax.f32 %v1998, %v2005
    %v2007 = vsel %vm1970, %v1957, -inf
    %v2008 = vmax.f32 %v2000, %v2007
    %v2009 = vsel %vm1970, %v1958, -inf
    %v2010 = vmax.f32 %v2002, %v2009
    %v2011 = vsel %vm1970, %v1959, -inf
    %v2012 = vmax.f32 %v2004, %v2011
    %v2013 = vsel %vm1970, %v1960, -inf
    %v2014 = vmax.f32 %v2006, %v2013
    %v2015 = vsel %vm1970, %v1961, -inf
    %v2016 = vmax.f32 %v2008, %v2015
    %v2017 = vsel %vm1970, %v1962, -inf
    %v2018 = vmax.f32 %v2010, %v2017
    %v2019 = vsel %vm1970, %v1963, -inf
    %v2020 = vmax.f32 %v2012, %v2019
    %v2021 = vsel %vm1970, %v1964, -inf
    %v2022 = vmax.f32 %v2014, %v2021
    %v2023 = vsel %vm1970, %v1965, -inf
    %v2024 = vmax.f32 %v2016, %v2023
    %v2025 = vsel %vm1970, %v1966, -inf
    %v2026 = vmax.f32 %v2018, %v2025
    %v2027 = vsel %vm1970, %v1967, -inf
    %v2028 = vmax.f32 %v2020, %v2027
    %v2029 = vsel %vm1970, %v1968, -inf
    %v2030 = vmax.f32 %v2022, %v2029
    %v2031 = vmax.f32 %v2024, %v2026
    %v2032 = vmax.f32 %v2028, %v2030
    %v2033 = vmax.f32 %v2031, %v2032
    %v2034 = vrot.slane %v2033, 4
    %v2035 = vmax.f32 %v2033, %v2034
    %v2036 = vrot.slane %v2035, 2
    %v2037 = vmax.f32 %v2035, %v2036
    %v2038 = vrot.slane %v2037, 1
    %v2039 = vmax.f32 %v2037, %v2038
    %v2040 = vmax.f32 %v1969, %v2039
    %v2041 = vsub.f32 %v1969, %v2040
    %v2042 = vmul.f32 %v2041, 1.442695
    %v2043 = vpow.pop %v2042
    %v2045 = vlaneseq
    %v2046 = vshrl.u32 %v2045, 7
    %v2047 = vsub.s32 0, %v2046
    %v2048 = vrot.slane %v2040, %v2047
    %v2050 = vsub.f32 %v1937, %v2048
    %v2051 = vsub.f32 %v1938, %v2048
    %v2052 = vsub.f32 %v1939, %v2048
    %v2053 = vsub.f32 %v1940, %v2048
    %v2054 = vsub.f32 %v1941, %v2048
    %v2055 = vsub.f32 %v1942, %v2048
    %v2056 = vsub.f32 %v1943, %v2048
    %v2057 = vsub.f32 %v1944, %v2048
    %v2058 = vsub.f32 %v1945, %v2048
    %v2059 = vsub.f32 %v1946, %v2048
    %v2060 = vsub.f32 %v1947, %v2048
    %v2061 = vsub.f32 %v1948, %v2048
    %v2062 = vsub.f32 %v1949, %v2048
    %v2063 = vsub.f32 %v1950, %v2048
    %v2064 = vsub.f32 %v1951, %v2048
    %v2065 = vsub.f32 %v1952, %v2048
    %v2066 = vsub.f32 %v1953, %v2048
    %v2067 = vsub.f32 %v1954, %v2048
    %v2068 = vsub.f32 %v1955, %v2048
    %v2069 = vsub.f32 %v1956, %v2048
    %v2070 = vsub.f32 %v1957, %v2048
    %v2071 = vsub.f32 %v1958, %v2048
    %v2072 = vsub.f32 %v1959, %v2048
    %v2073 = vsub.f32 %v1960, %v2048
    %v2074 = vsub.f32 %v1961, %v2048
    %v2075 = vsub.f32 %v1962, %v2048
    %v2076 = vsub.f32 %v1963, %v2048
    %v2077 = vsub.f32 %v1964, %v2048
    %v2078 = vsub.f32 %v1965, %v2048
    %v2079 = vsub.f32 %v1966, %v2048
    %v2080 = vsub.f32 %v1967, %v2048
    %v2081 = vsub.f32 %v1968, %v2048
    %v2082 = vmul.f32 %v2050, 1.442695
    %v2083 = vpow.pop %v2082
    %v2084 = vmul.f32 %v2051, 1.442695
    %v2085 = vpow.pop %v2084
    %v2086 = vmul.f32 %v2052, 1.442695
    %v2087 = vpow.pop %v2086
    %v2088 = vmul.f32 %v2053, 1.442695
    %v2089 = vpow.pop %v2088
    %v2090 = vmul.f32 %v2054, 1.442695
    %v2091 = vpow.pop %v2090
    %v2092 = vmul.f32 %v2055, 1.442695
    %v2093 = vpow.pop %v2092
    %v2094 = vmul.f32 %v2056, 1.442695
    %v2095 = vpow.pop %v2094
    %v2096 = vmul.f32 %v2057, 1.442695
    %v2097 = vpow.pop %v2096
    %v2098 = vmul.f32 %v2058, 1.442695
    %v2099 = vpow.pop %v2098
    %v2100 = vmul.f32 %v2059, 1.442695
    %v2101 = vpow.pop %v2100
    %v2102 = vmul.f32 %v2060, 1.442695
    %v2103 = vpow.pop %v2102
    %v2104 = vmul.f32 %v2061, 1.442695
    %v2105 = vpow.pop %v2104
    %v2106 = vmul.f32 %v2062, 1.442695
    %v2107 = vpow.pop %v2106
    %v2108 = vmul.f32 %v2063, 1.442695
    %v2109 = vpow.pop %v2108
    %v2110 = vmul.f32 %v2064, 1.442695
    %v2111 = vpow.pop %v2110
    %v2112 = vmul.f32 %v2065, 1.442695
    %v2113 = vpow.pop %v2112
    %v2114 = vmul.f32 %v2066, 1.442695
    %v2115 = vpow.pop %v2114
    %v2116 = vmul.f32 %v2067, 1.442695
    %v2117 = vpow.pop %v2116
    %v2118 = vmul.f32 %v2068, 1.442695
    %v2119 = vpow.pop %v2118
    %v2120 = vmul.f32 %v2069, 1.442695
    %v2121 = vpow.pop %v2120
    %v2122 = vmul.f32 %v2070, 1.442695
    %v2123 = vpow.pop %v2122
    %v2124 = vmul.f32 %v2071, 1.442695
    %v2125 = vpow.pop %v2124
    %v2126 = vmul.f32 %v2072, 1.442695
    %v2127 = vpow.pop %v2126
    %v2128 = vmul.f32 %v2073, 1.442695
    %v2129 = vpow.pop %v2128
    %v2130 = vmul.f32 %v2074, 1.442695
    %v2131 = vpow.pop %v2130
    %v2132 = vmul.f32 %v2075, 1.442695
    %v2133 = vpow.pop %v2132
    %v2134 = vmul.f32 %v2076, 1.442695
    %v2135 = vpow.pop %v2134
    %v2136 = vmul.f32 %v2077, 1.442695
    %v2137 = vpow.pop %v2136
    %v2138 = vmul.f32 %v2078, 1.442695
    %v2139 = vpow.pop %v2138
    %v2140 = vmul.f32 %v2079, 1.442695
    %v2141 = vpow.pop %v2140
    %v2142 = vmul.f32 %v2080, 1.442695
    %v2143 = vpow.pop %v2142
    %v2144 = vmul.f32 %v2081, 1.442695
    %v2145 = vpow.pop %v2144
    %v2146 = vld [vmem:[#allocation3] sm:$0x1]
    %v2147 = vmul.f32 %v2043, %v2146
    %v2148 = vsel %vm1970, %v2083, 0.0
    %v2149 = vsel %vm1970, %v2085, 0.0
    %v2150 = vadd.f32 %v2148, %v2149
    %v2151 = vsel %vm1970, %v2087, 0.0
    %v2152 = vadd.f32 %v2150, %v2151
    %v2153 = vsel %vm1970, %v2089, 0.0
    %v2154 = vadd.f32 %v2152, %v2153
    %v2155 = vsel %vm1970, %v2091, 0.0
    %v2156 = vadd.f32 %v2154, %v2155
    %v2157 = vsel %vm1970, %v2093, 0.0
    %v2158 = vadd.f32 %v2156, %v2157
    %v2159 = vsel %vm1970, %v2095, 0.0
    %v2160 = vadd.f32 %v2158, %v2159
    %v2161 = vsel %vm1970, %v2097, 0.0
    %v2162 = vadd.f32 %v2160, %v2161
    %v2163 = vsel %vm1970, %v2099, 0.0
    %v2164 = vadd.f32 %v2162, %v2163
    %v2165 = vsel %vm1970, %v2101, 0.0
    %v2166 = vadd.f32 %v2164, %v2165
    %v2167 = vsel %vm1970, %v2103, 0.0
    %v2168 = vadd.f32 %v2166, %v2167
    %v2169 = vsel %vm1970, %v2105, 0.0
    %v2170 = vadd.f32 %v2168, %v2169
    %v2171 = vsel %vm1970, %v2107, 0.0
    %v2172 = vadd.f32 %v2170, %v2171
    %v2173 = vsel %vm1970, %v2109, 0.0
    %v2174 = vadd.f32 %v2172, %v2173
    %v2175 = vsel %vm1970, %v2111, 0.0
    %v2176 = vadd.f32 %v2174, %v2175
    %v2177 = vsel %vm1970, %v2113, 0.0
    %v2178 = vadd.f32 %v2176, %v2177
    %v2179 = vsel %vm1970, %v2115, 0.0
    %v2180 = vadd.f32 %v2178, %v2179
    %v2181 = vsel %vm1970, %v2117, 0.0
    %v2182 = vadd.f32 %v2180, %v2181
    %v2183 = vsel %vm1970, %v2119, 0.0
    %v2184 = vadd.f32 %v2182, %v2183
    %v2185 = vsel %vm1970, %v2121, 0.0
    %v2186 = vadd.f32 %v2184, %v2185
    %v2187 = vsel %vm1970, %v2123, 0.0
    %v2188 = vadd.f32 %v2186, %v2187
    %v2189 = vsel %vm1970, %v2125, 0.0
    %v2190 = vadd.f32 %v2188, %v2189
    %v2191 = vsel %vm1970, %v2127, 0.0
    %v2192 = vadd.f32 %v2190, %v2191
    %v2193 = vsel %vm1970, %v2129, 0.0
    %v2194 = vadd.f32 %v2192, %v2193
    %v2195 = vsel %vm1970, %v2131, 0.0
    %v2196 = vadd.f32 %v2194, %v2195
    %v2197 = vsel %vm1970, %v2133, 0.0
    %v2198 = vadd.f32 %v2196, %v2197
    %v2199 = vsel %vm1970, %v2135, 0.0
    %v2200 = vadd.f32 %v2198, %v2199
    %v2201 = vsel %vm1970, %v2137, 0.0
    %v2202 = vadd.f32 %v2200, %v2201
    %v2203 = vsel %vm1970, %v2139, 0.0
    %v2204 = vadd.f32 %v2202, %v2203
    %v2205 = vsel %vm1970, %v2141, 0.0
    %v2206 = vadd.f32 %v2204, %v2205
    %v2207 = vsel %vm1970, %v2143, 0.0
    %v2208 = vadd.f32 %v2206, %v2207
    %v2209 = vsel %vm1970, %v2145, 0.0
    %v2210 = vadd.f32 %v2208, %v2209
    %v2211 = vrot.slane %v2210, 4
    %v2212 = vadd.f32 %v2210, %v2211
    %v2213 = vrot.slane %v2212, 2
    %v2214 = vadd.f32 %v2212, %v2213
    %v2215 = vrot.slane %v2214, 1
    %v2216 = vadd.f32 %v2214, %v2215
    %v2217 = vadd.f32 %v2147, %v2216
    %vm2218 = vcmask 0
    %2219 = vst.msk [vmem:[#allocation3] sm:$0x1] %vm2218, %v2217
    %v2220 = vld [vmem:[#allocation4] sm:$0xf]
    %2222 = vset.pattern.permute.xlu0 0
    %2223 = vperm.xlu0 %2222, %v2043
    %v2224 = vpop.permute.xlu0 %2223
    %v2226 = vlaneseq
    %v2227 = vshrl.u32 %v2226, 7
    %v2228 = vsub.s32 0, %v2227
    %v2229 = vrot.slane %v2224, %v2228
    %v2230 = vmul.f32 %v2229, %v2220
    %2232 = vset.pattern.permute.xlu0 0
    %2233 = vperm.xlu0 %2232, %v2083
    %v2234 = vpop.permute.xlu0 %2233
    %2237 = vset.pattern.permute.xlu0 0
    %2238 = vperm.xlu0 %2237, %v2085
    %v2239 = vpop.permute.xlu0 %2238
    %2242 = vset.pattern.permute.xlu0 0
    %2243 = vperm.xlu0 %2242, %v2087
    %v2244 = vpop.permute.xlu0 %2243
    %2247 = vset.pattern.permute.xlu0 0
    %2248 = vperm.xlu0 %2247, %v2089
    %v2249 = vpop.permute.xlu0 %2248
    %2252 = vset.pattern.permute.xlu0 0
    %2253 = vperm.xlu0 %2252, %v2091
    %v2254 = vpop.permute.xlu0 %2253
    %2257 = vset.pattern.permute.xlu0 0
    %2258 = vperm.xlu0 %2257, %v2093
    %v2259 = vpop.permute.xlu0 %2258
    %2262 = vset.pattern.permute.xlu0 0
    %2263 = vperm.xlu0 %2262, %v2095
    %v2264 = vpop.permute.xlu0 %2263
    %2267 = vset.pattern.permute.xlu0 0
    %2268 = vperm.xlu0 %2267, %v2097
    %v2269 = vpop.permute.xlu0 %2268
    %2272 = vset.pattern.permute.xlu0 0
    %2273 = vperm.xlu0 %2272, %v2099
    %v2274 = vpop.permute.xlu0 %2273
    %2277 = vset.pattern.permute.xlu0 0
    %2278 = vperm.xlu0 %2277, %v2101
    %v2279 = vpop.permute.xlu0 %2278
    %2282 = vset.pattern.permute.xlu0 0
    %2283 = vperm.xlu0 %2282, %v2103
    %v2284 = vpop.permute.xlu0 %2283
    %2287 = vset.pattern.permute.xlu0 0
    %2288 = vperm.xlu0 %2287, %v2105
    %v2289 = vpop.permute.xlu0 %2288
    %2292 = vset.pattern.permute.xlu0 0
    %2293 = vperm.xlu0 %2292, %v2107
    %v2294 = vpop.permute.xlu0 %2293
    %2297 = vset.pattern.permute.xlu0 0
    %2298 = vperm.xlu0 %2297, %v2109
    %v2299 = vpop.permute.xlu0 %2298
    %2302 = vset.pattern.permute.xlu0 0
    %2303 = vperm.xlu0 %2302, %v2111
    %v2304 = vpop.permute.xlu0 %2303
    %2307 = vset.pattern.permute.xlu0 0
    %2308 = vperm.xlu0 %2307, %v2113
    %v2309 = vpop.permute.xlu0 %2308
    %2312 = vset.pattern.permute.xlu0 0
    %2313 = vperm.xlu0 %2312, %v2115
    %v2314 = vpop.permute.xlu0 %2313
    %2317 = vset.pattern.permute.xlu0 0
    %2318 = vperm.xlu0 %2317, %v2117
    %v2319 = vpop.permute.xlu0 %2318
    %2322 = vset.pattern.permute.xlu0 0
    %2323 = vperm.xlu0 %2322, %v2119
    %v2324 = vpop.permute.xlu0 %2323
    %2327 = vset.pattern.permute.xlu0 0
    %2328 = vperm.xlu0 %2327, %v2121
    %v2329 = vpop.permute.xlu0 %2328
    %2332 = vset.pattern.permute.xlu0 0
    %2333 = vperm.xlu0 %2332, %v2123
    %v2334 = vpop.permute.xlu0 %2333
    %2337 = vset.pattern.permute.xlu0 0
    %2338 = vperm.xlu0 %2337, %v2125
    %v2339 = vpop.permute.xlu0 %2338
    %2342 = vset.pattern.permute.xlu0 0
    %2343 = vperm.xlu0 %2342, %v2127
    %v2344 = vpop.permute.xlu0 %2343
    %2347 = vset.pattern.permute.xlu0 0
    %2348 = vperm.xlu0 %2347, %v2129
    %v2349 = vpop.permute.xlu0 %2348
    %2352 = vset.pattern.permute.xlu0 0
    %2353 = vperm.xlu0 %2352, %v2131
    %v2354 = vpop.permute.xlu0 %2353
    %2357 = vset.pattern.permute.xlu0 0
    %2358 = vperm.xlu0 %2357, %v2133
    %v2359 = vpop.permute.xlu0 %2358
    %2362 = vset.pattern.permute.xlu0 0
    %2363 = vperm.xlu0 %2362, %v2135
    %v2364 = vpop.permute.xlu0 %2363
    %2367 = vset.pattern.permute.xlu0 0
    %2368 = vperm.xlu0 %2367, %v2137
    %v2369 = vpop.permute.xlu0 %2368
    %2372 = vset.pattern.permute.xlu0 0
    %2373 = vperm.xlu0 %2372, %v2139
    %v2374 = vpop.permute.xlu0 %2373
    %2377 = vset.pattern.permute.xlu0 0
    %2378 = vperm.xlu0 %2377, %v2141
    %v2379 = vpop.permute.xlu0 %2378
    %2382 = vset.pattern.permute.xlu0 0
    %2383 = vperm.xlu0 %2382, %v2143
    %v2384 = vpop.permute.xlu0 %2383
    %2387 = vset.pattern.permute.xlu0 0
    %2388 = vperm.xlu0 %2387, %v2145
    %v2389 = vpop.permute.xlu0 %2388
    %v2391 = vmul.f32 %v2234, %v986
    %v2392 = vmul.f32 %v2234, %v987
    %v2393 = vmul.f32 %v2234, %v988
    %v2394 = vmul.f32 %v2234, %v989
    %v2395 = vmul.f32 %v2239, %v990
    %v2396 = vmul.f32 %v2239, %v991
    %v2397 = vmul.f32 %v2239, %v992
    %v2398 = vmul.f32 %v2239, %v993
    %v2399 = vmul.f32 %v2244, %v994
    %v2400 = vmul.f32 %v2244, %v995
    %v2401 = vmul.f32 %v2244, %v996
    %v2402 = vmul.f32 %v2244, %v997
    %v2403 = vmul.f32 %v2249, %v998
    %v2404 = vmul.f32 %v2249, %v999
    %v2405 = vmul.f32 %v2249, %v1000
    %v2406 = vmul.f32 %v2249, %v1001
    %v2407 = vmul.f32 %v2254, %v1002
    %v2408 = vmul.f32 %v2254, %v1003
    %v2409 = vmul.f32 %v2254, %v1004
    %v2410 = vmul.f32 %v2254, %v1005
    %v2411 = vmul.f32 %v2259, %v1006
    %v2412 = vmul.f32 %v2259, %v1007
    %v2413 = vmul.f32 %v2259, %v1008
    %v2414 = vmul.f32 %v2259, %v1009
    %v2415 = vmul.f32 %v2264, %v1010
    %v2416 = vmul.f32 %v2264, %v1011
    %v2417 = vmul.f32 %v2264, %v1012
    %v2418 = vmul.f32 %v2264, %v1013
    %v2419 = vmul.f32 %v2269, %v1014
    %v2420 = vmul.f32 %v2269, %v1015
    %v2421 = vmul.f32 %v2269, %v1016
    %v2422 = vmul.f32 %v2269, %v1017
    %v2423 = vmul.f32 %v2274, %v1018
    %v2424 = vmul.f32 %v2274, %v1019
    %v2425 = vmul.f32 %v2274, %v1020
    %v2426 = vmul.f32 %v2274, %v1021
    %v2427 = vmul.f32 %v2279, %v1022
    %v2428 = vmul.f32 %v2279, %v1023
    %v2429 = vmul.f32 %v2279, %v1024
    %v2430 = vmul.f32 %v2279, %v1025
    %v2431 = vmul.f32 %v2284, %v1026
    %v2432 = vmul.f32 %v2284, %v1027
    %v2433 = vmul.f32 %v2284, %v1028
    %v2434 = vmul.f32 %v2284, %v1029
    %v2435 = vmul.f32 %v2289, %v1030
    %v2436 = vmul.f32 %v2289, %v1031
    %v2437 = vmul.f32 %v2289, %v1032
    %v2438 = vmul.f32 %v2289, %v1033
    %v2439 = vmul.f32 %v2294, %v1034
    %v2440 = vmul.f32 %v2294, %v1035
    %v2441 = vmul.f32 %v2294, %v1036
    %v2442 = vmul.f32 %v2294, %v1037
    %v2443 = vmul.f32 %v2299, %v1038
    %v2444 = vmul.f32 %v2299, %v1039
    %v2445 = vmul.f32 %v2299, %v1040
    %v2446 = vmul.f32 %v2299, %v1041
    %v2447 = vmul.f32 %v2304, %v1042
    %v2448 = vmul.f32 %v2304, %v1043
    %v2449 = vmul.f32 %v2304, %v1044
    %v2450 = vmul.f32 %v2304, %v1045
    %v2451 = vmul.f32 %v2309, %v1046
    %v2452 = vmul.f32 %v2309, %v1047
    %v2453 = vmul.f32 %v2309, %v1048
    %v2454 = vmul.f32 %v2309, %v1049
    %v2455 = vmul.f32 %v2314, %v1050
    %v2456 = vmul.f32 %v2314, %v1051
    %v2457 = vmul.f32 %v2314, %v1052
    %v2458 = vmul.f32 %v2314, %v1053
    %v2459 = vmul.f32 %v2319, %v1054
    %v2460 = vmul.f32 %v2319, %v1055
    %v2461 = vmul.f32 %v2319, %v1056
    %v2462 = vmul.f32 %v2319, %v1057
    %v2463 = vmul.f32 %v2324, %v1058
    %v2464 = vmul.f32 %v2324, %v1059
    %v2465 = vmul.f32 %v2324, %v1060
    %v2466 = vmul.f32 %v2324, %v1061
    %v2467 = vmul.f32 %v2329, %v1062
    %v2468 = vmul.f32 %v2329, %v1063
    %v2469 = vmul.f32 %v2329, %v1064
    %v2470 = vmul.f32 %v2329, %v1065
    %v2471 = vmul.f32 %v2334, %v1066
    %v2472 = vmul.f32 %v2334, %v1067
    %v2473 = vmul.f32 %v2334, %v1068
    %v2474 = vmul.f32 %v2334, %v1069
    %v2475 = vmul.f32 %v2339, %v1070
    %v2476 = vmul.f32 %v2339, %v1071
    %v2477 = vmul.f32 %v2339, %v1072
    %v2478 = vmul.f32 %v2339, %v1073
    %v2479 = vmul.f32 %v2344, %v1074
    %v2480 = vmul.f32 %v2344, %v1075
    %v2481 = vmul.f32 %v2344, %v1076
    %v2482 = vmul.f32 %v2344, %v1077
    %v2483 = vmul.f32 %v2349, %v1078
    %v2484 = vmul.f32 %v2349, %v1079
    %v2485 = vmul.f32 %v2349, %v1080
    %v2486 = vmul.f32 %v2349, %v1081
    %v2487 = vmul.f32 %v2354, %v1082
    %v2488 = vmul.f32 %v2354, %v1083
    %v2489 = vmul.f32 %v2354, %v1084
    %v2490 = vmul.f32 %v2354, %v1085
    %v2491 = vmul.f32 %v2359, %v1086
    %v2492 = vmul.f32 %v2359, %v1087
    %v2493 = vmul.f32 %v2359, %v1088
    %v2494 = vmul.f32 %v2359, %v1089
    %v2495 = vmul.f32 %v2364, %v1090
    %v2496 = vmul.f32 %v2364, %v1091
    %v2497 = vmul.f32 %v2364, %v1092
    %v2498 = vmul.f32 %v2364, %v1093
    %v2499 = vmul.f32 %v2369, %v1094
    %v2500 = vmul.f32 %v2369, %v1095
    %v2501 = vmul.f32 %v2369, %v1096
    %v2502 = vmul.f32 %v2369, %v1097
    %v2503 = vmul.f32 %v2374, %v1098
    %v2504 = vmul.f32 %v2374, %v1099
    %v2505 = vmul.f32 %v2374, %v1100
    %v2506 = vmul.f32 %v2374, %v1101
    %v2507 = vmul.f32 %v2379, %v1102
    %v2508 = vmul.f32 %v2379, %v1103
    %v2509 = vmul.f32 %v2379, %v1104
    %v2510 = vmul.f32 %v2379, %v1105
    %v2511 = vmul.f32 %v2384, %v1106
    %v2512 = vmul.f32 %v2384, %v1107
    %v2513 = vmul.f32 %v2384, %v1108
    %v2514 = vmul.f32 %v2384, %v1109
    %v2515 = vmul.f32 %v2389, %v1110
    %v2516 = vmul.f32 %v2389, %v1111
    %v2517 = vmul.f32 %v2389, %v1112
    %v2518 = vmul.f32 %v2389, %v1113
    %v2519 = vadd.f32 %v2391, %v2395
    %v2520 = vadd.f32 %v2519, %v2399
    %v2521 = vadd.f32 %v2520, %v2403
    %v2522 = vadd.f32 %v2521, %v2407
    %v2523 = vadd.f32 %v2522, %v2411
    %v2524 = vadd.f32 %v2523, %v2415
    %v2525 = vadd.f32 %v2524, %v2419
    %v2526 = vadd.f32 %v2525, %v2423
    %v2527 = vadd.f32 %v2526, %v2427
    %v2528 = vadd.f32 %v2527, %v2431
    %v2529 = vadd.f32 %v2528, %v2435
    %v2530 = vadd.f32 %v2529, %v2439
    %v2531 = vadd.f32 %v2530, %v2443
    %v2532 = vadd.f32 %v2531, %v2447
    %v2533 = vadd.f32 %v2532, %v2451
    %v2534 = vadd.f32 %v2533, %v2455
    %v2535 = vadd.f32 %v2534, %v2459
    %v2536 = vadd.f32 %v2535, %v2463
    %v2537 = vadd.f32 %v2536, %v2467
    %v2538 = vadd.f32 %v2537, %v2471
    %v2539 = vadd.f32 %v2538, %v2475
    %v2540 = vadd.f32 %v2539, %v2479
    %v2541 = vadd.f32 %v2540, %v2483
    %v2542 = vadd.f32 %v2541, %v2487
    %v2543 = vadd.f32 %v2542, %v2491
    %v2544 = vadd.f32 %v2543, %v2495
    %v2545 = vadd.f32 %v2544, %v2499
    %v2546 = vadd.f32 %v2545, %v2503
    %v2547 = vadd.f32 %v2546, %v2507
    %v2548 = vadd.f32 %v2547, %v2511
    %v2549 = vadd.f32 %v2548, %v2515
    %v2550 = vrot.slane %v2549, 4
    %v2551 = vadd.f32 %v2549, %v2550
    %v2552 = vrot.slane %v2551, 2
    %v2553 = vadd.f32 %v2551, %v2552
    %v2554 = vrot.slane %v2553, 1
    %v2555 = vadd.f32 %v2553, %v2554
    %v2556 = vadd.f32 %v2392, %v2396
    %v2557 = vadd.f32 %v2556, %v2400
    %v2558 = vadd.f32 %v2557, %v2404
    %v2559 = vadd.f32 %v2558, %v2408
    %v2560 = vadd.f32 %v2559, %v2412
    %v2561 = vadd.f32 %v2560, %v2416
    %v2562 = vadd.f32 %v2561, %v2420
    %v2563 = vadd.f32 %v2562, %v2424
    %v2564 = vadd.f32 %v2563, %v2428
    %v2565 = vadd.f32 %v2564, %v2432
    %v2566 = vadd.f32 %v2565, %v2436
    %v2567 = vadd.f32 %v2566, %v2440
    %v2568 = vadd.f32 %v2567, %v2444
    %v2569 = vadd.f32 %v2568, %v2448
    %v2570 = vadd.f32 %v2569, %v2452
    %v2571 = vadd.f32 %v2570, %v2456
    %v2572 = vadd.f32 %v2571, %v2460
    %v2573 = vadd.f32 %v2572, %v2464
    %v2574 = vadd.f32 %v2573, %v2468
    %v2575 = vadd.f32 %v2574, %v2472
    %v2576 = vadd.f32 %v2575, %v2476
    %v2577 = vadd.f32 %v2576, %v2480
    %v2578 = vadd.f32 %v2577, %v2484
    %v2579 = vadd.f32 %v2578, %v2488
    %v2580 = vadd.f32 %v2579, %v2492
    %v2581 = vadd.f32 %v2580, %v2496
    %v2582 = vadd.f32 %v2581, %v2500
    %v2583 = vadd.f32 %v2582, %v2504
    %v2584 = vadd.f32 %v2583, %v2508
    %v2585 = vadd.f32 %v2584, %v2512
    %v2586 = vadd.f32 %v2585, %v2516
    %v2587 = vrot.slane %v2586, 4
    %v2588 = vadd.f32 %v2586, %v2587
    %v2589 = vrot.slane %v2588, 2
    %v2590 = vadd.f32 %v2588, %v2589
    %v2591 = vrot.slane %v2590, 1
    %v2592 = vadd.f32 %v2590, %v2591
    %v2593 = vadd.f32 %v2393, %v2397
    %v2594 = vadd.f32 %v2593, %v2401
    %v2595 = vadd.f32 %v2594, %v2405
    %v2596 = vadd.f32 %v2595, %v2409
    %v2597 = vadd.f32 %v2596, %v2413
    %v2598 = vadd.f32 %v2597, %v2417
    %v2599 = vadd.f32 %v2598, %v2421
    %v2600 = vadd.f32 %v2599, %v2425
    %v2601 = vadd.f32 %v2600, %v2429
    %v2602 = vadd.f32 %v2601, %v2433
    %v2603 = vadd.f32 %v2602, %v2437
    %v2604 = vadd.f32 %v2603, %v2441
    %v2605 = vadd.f32 %v2604, %v2445
    %v2606 = vadd.f32 %v2605, %v2449
    %v2607 = vadd.f32 %v2606, %v2453
    %v2608 = vadd.f32 %v2607, %v2457
    %v2609 = vadd.f32 %v2608, %v2461
    %v2610 = vadd.f32 %v2609, %v2465
    %v2611 = vadd.f32 %v2610, %v2469
    %v2612 = vadd.f32 %v2611, %v2473
    %v2613 = vadd.f32 %v2612, %v2477
    %v2614 = vadd.f32 %v2613, %v2481
    %v2615 = vadd.f32 %v2614, %v2485
    %v2616 = vadd.f32 %v2615, %v2489
    %v2617 = vadd.f32 %v2616, %v2493
    %v2618 = vadd.f32 %v2617, %v2497
    %v2619 = vadd.f32 %v2618, %v2501
    %v2620 = vadd.f32 %v2619, %v2505
    %v2621 = vadd.f32 %v2620, %v2509
    %v2622 = vadd.f32 %v2621, %v2513
    %v2623 = vadd.f32 %v2622, %v2517
    %v2624 = vrot.slane %v2623, 4
    %v2625 = vadd.f32 %v2623, %v2624
    %v2626 = vrot.slane %v2625, 2
    %v2627 = vadd.f32 %v2625, %v2626
    %v2628 = vrot.slane %v2627, 1
    %v2629 = vadd.f32 %v2627, %v2628
    %v2630 = vadd.f32 %v2394, %v2398
    %v2631 = vadd.f32 %v2630, %v2402
    %v2632 = vadd.f32 %v2631, %v2406
    %v2633 = vadd.f32 %v2632, %v2410
    %v2634 = vadd.f32 %v2633, %v2414
    %v2635 = vadd.f32 %v2634, %v2418
    %v2636 = vadd.f32 %v2635, %v2422
    %v2637 = vadd.f32 %v2636, %v2426
    %v2638 = vadd.f32 %v2637, %v2430
    %v2639 = vadd.f32 %v2638, %v2434
    %v2640 = vadd.f32 %v2639, %v2438
    %v2641 = vadd.f32 %v2640, %v2442
    %v2642 = vadd.f32 %v2641, %v2446
    %v2643 = vadd.f32 %v2642, %v2450
    %v2644 = vadd.f32 %v2643, %v2454
    %v2645 = vadd.f32 %v2644, %v2458
    %v2646 = vadd.f32 %v2645, %v2462
    %v2647 = vadd.f32 %v2646, %v2466
    %v2648 = vadd.f32 %v2647, %v2470
    %v2649 = vadd.f32 %v2648, %v2474
    %v2650 = vadd.f32 %v2649, %v2478
    %v2651 = vadd.f32 %v2650, %v2482
    %v2652 = vadd.f32 %v2651, %v2486
    %v2653 = vadd.f32 %v2652, %v2490
    %v2654 = vadd.f32 %v2653, %v2494
    %v2655 = vadd.f32 %v2654, %v2498
    %v2656 = vadd.f32 %v2655, %v2502
    %v2657 = vadd.f32 %v2656, %v2506
    %v2658 = vadd.f32 %v2657, %v2510
    %v2659 = vadd.f32 %v2658, %v2514
    %v2660 = vadd.f32 %v2659, %v2518
    %v2661 = vrot.slane %v2660, 4
    %v2662 = vadd.f32 %v2660, %v2661
    %v2663 = vrot.slane %v2662, 2
    %v2664 = vadd.f32 %v2662, %v2663
    %v2665 = vrot.slane %v2664, 1
    %v2666 = vadd.f32 %v2664, %v2665
    %v2671 = vcombine.low %v2555, %v2592
    %v2672 = vcombine.low %v2629, %v2666
    %v2674 = vunpack.c.l.s4 1966171168
    %v2675 = vunpack.c.0.s8 %v2674
    %v2676 = vlaneseq
    %v2677 = vshrl.u32 %v2676, 7
    %v2678 = vsub.s32 %v2675, %v2677
    %v2679 = vrot.slane %v2671, %v2678
    %v2681 = vunpack.c.l.s4 1966171168
    %v2682 = vunpack.c.0.s8 %v2681
    %v2683 = vlaneseq
    %v2684 = vshrl.u32 %v2683, 7
    %v2685 = vsub.s32 %v2682, %v2684
    %v2686 = vrot.slane %v2672, %v2685
    %v2687 = vcombine.low %v2679, %v2686
    %v2689 = vunpack.c.l.s4 1966171168
    %v2690 = vunpack.c.0.s8 %v2689
    %v2691 = vlaneseq
    %v2692 = vshrl.u32 %v2691, 7
    %v2693 = vsub.s32 %v2690, %v2692
    %v2694 = vrot.slane %v2687, %v2693
    %v2696 = vadd.f32 %v2230, %v2694
    %v2697 = vlaneseq
    %vm2698 = vcmp.ge.s32.totalorder %v2697, 0
    %vm2699 = vcmp.lt.s32.totalorder %v2697, 512
    %vm2700 = vmand %vm2698, %vm2699
    %2701 = vst.msk [vmem:[#allocation4] sm:$0xf] %vm2700, %v2696
    %2702 = vst.msk [vmem:[#allocation2] sm:$0x1] %vm2218, %v2040
    // Predicated region
    $region42: #{dattention_forward.1} parent=1 // pred_check
      %p2703 = pneg %p81
    $region43: #{dattention_forward.1} parent=1 // pred_check_branch
      %2705 = sbr.rel (%p2703) target = $region45
    $region44: #{dattention_forward.1} parent=1 // pred_region
      %v2706 = vld [vmem:[#allocation4] sm:$0xf]
      %v2707 = vld [vmem:[#allocation3] sm:$0x1]
      %v2708 = vrcp.pop %v2707
      %v2709 = vmul.f32 1.0, %v2708
      %2711 = vset.pattern.permute.xlu0 0
      %2712 = vperm.xlu0 %2711, %v2709
      %v2713 = vpop.permute.xlu0 %2712
      %v2715 = vlaneseq
      %v2716 = vshrl.u32 %v2715, 7
      %v2717 = vsub.s32 0, %v2716
      %v2718 = vrot.slane %v2713, %v2717
      %v2719 = vmul.f32 %v2706, %v2718
      %v2720 = vld [vmem:[%s7] sm:$0xff]
      %v2721 = vld [vmem:[%s7 + $0x8] sm:$0xff]
      %v2722 = vld [vmem:[%s7 + $0x10] sm:$0xff]
      %v2723 = vld [vmem:[%s7 + $0x18] sm:$0xff]
      %v2724 = vld [vmem:[%s7 + $0x20] sm:$0xff]
      %v2725 = vld [vmem:[%s7 + $0x28] sm:$0xff]
      %v2726 = vld [vmem:[%s7 + $0x30] sm:$0xff]
      %v2727 = vld [vmem:[%s7 + $0x38] sm:$0xff]
      %v2728 = vld [vmem:[%s7 + $0x40] sm:$0xff]
      %v2729 = vld [vmem:[%s7 + $0x48] sm:$0xff]
      %v2730 = vld [vmem:[%s7 + $0x50] sm:$0xff]
      %v2731 = vld [vmem:[%s7 + $0x58] sm:$0xff]
      %v2732 = vld [vmem:[%s7 + $0x60] sm:$0xff]
      %v2733 = vld [vmem:[%s7 + $0x68] sm:$0xff]
      %v2734 = vld [vmem:[%s7 + $0x70] sm:$0xff]
      %v2735 = vld [vmem:[%s7 + $0x78] sm:$0xff]
      %v2736 = vld [vmem:[%s7 + $0x80] sm:$0xff]
      %v2737 = vld [vmem:[%s7 + $0x88] sm:$0xff]
      %v2738 = vld [vmem:[%s7 + $0x90] sm:$0xff]
      %v2739 = vld [vmem:[%s7 + $0x98] sm:$0xff]
      %v2740 = vld [vmem:[%s7 + $0xa0] sm:$0xff]
      %v2741 = vld [vmem:[%s7 + $0xa8] sm:$0xff]
      %v2742 = vld [vmem:[%s7 + $0xb0] sm:$0xff]
      %v2743 = vld [vmem:[%s7 + $0xb8] sm:$0xff]
      %v2744 = vld [vmem:[%s7 + $0xc0] sm:$0xff]
      %v2745 = vld [vmem:[%s7 + $0xc8] sm:$0xff]
      %v2746 = vld [vmem:[%s7 + $0xd0] sm:$0xff]
      %v2747 = vld [vmem:[%s7 + $0xd8] sm:$0xff]
      %v2748 = vld [vmem:[%s7 + $0xe0] sm:$0xff]
      %v2749 = vld [vmem:[%s7 + $0xe8] sm:$0xff]
      %v2750 = vld [vmem:[%s7 + $0xf0] sm:$0xff]
      %v2751 = vld [vmem:[%s7 + $0xf8] sm:$0xff]
      %v2752 = vld [vmem:[%s7 + $0x100] sm:$0xff]
      %v2753 = vld [vmem:[%s7 + $0x108] sm:$0xff]
      %v2754 = vld [vmem:[%s7 + $0x110] sm:$0xff]
      %v2755 = vld [vmem:[%s7 + $0x118] sm:$0xff]
      %v2756 = vld [vmem:[%s7 + $0x120] sm:$0xff]
      %v2757 = vld [vmem:[%s7 + $0x128] sm:$0xff]
      %v2758 = vld [vmem:[%s7 + $0x130] sm:$0xff]
      %v2759 = vld [vmem:[%s7 + $0x138] sm:$0xff]
      %v2760 = vld [vmem:[%s7 + $0x140] sm:$0xff]
      %v2761 = vld [vmem:[%s7 + $0x148] sm:$0xff]
      %v2762 = vld [vmem:[%s7 + $0x150] sm:$0xff]
      %v2763 = vld [vmem:[%s7 + $0x158] sm:$0xff]
      %v2764 = vld [vmem:[%s7 + $0x160] sm:$0xff]
      %v2765 = vld [vmem:[%s7 + $0x168] sm:$0xff]
      %v2766 = vld [vmem:[%s7 + $0x170] sm:$0xff]
      %v2767 = vld [vmem:[%s7 + $0x178] sm:$0xff]
      %v2768 = vld [vmem:[%s7 + $0x180] sm:$0xff]
      %v2769 = vld [vmem:[%s7 + $0x188] sm:$0xff]
      %v2770 = vld [vmem:[%s7 + $0x190] sm:$0xff]
      %v2771 = vld [vmem:[%s7 + $0x198] sm:$0xff]
      %v2772 = vld [vmem:[%s7 + $0x1a0] sm:$0xff]
      %v2773 = vld [vmem:[%s7 + $0x1a8] sm:$0xff]
      %v2774 = vld [vmem:[%s7 + $0x1b0] sm:$0xff]
      %v2775 = vld [vmem:[%s7 + $0x1b8] sm:$0xff]
      %v2776 = vld [vmem:[%s7 + $0x1c0] sm:$0xff]
      %v2777 = vld [vmem:[%s7 + $0x1c8] sm:$0xff]
      %v2778 = vld [vmem:[%s7 + $0x1d0] sm:$0xff]
      %v2779 = vld [vmem:[%s7 + $0x1d8] sm:$0xff]
      %v2780 = vld [vmem:[%s7 + $0x1e0] sm:$0xff]
      %v2781 = vld [vmem:[%s7 + $0x1e8] sm:$0xff]
      %v2782 = vld [vmem:[%s7 + $0x1f0] sm:$0xff]
      %v2783 = vld [vmem:[%s7 + $0x1f8] sm:$0xff]
      %v2784 = vld [vmem:[%s8] sm:$0x1]
      %v2786 = vlaneseq
      %v2787 = vshrl.u32 %v2786, 7
      %v2788 = vsub.s32 0, %v2787
      %v2789 = vrot.slane %v2719, %v2788
      %v2790 = vlaneseq
      %v2791 = vshrl.u32 %v2790, 7
      %v2792 = vsub.s32 1, %v2791
      %v2793 = vrot.slane %v2719, %v2792
      %v2794 = vlaneseq
      %v2795 = vshrl.u32 %v2794, 7
      %v2796 = vsub.s32 2, %v2795
      %v2797 = vrot.slane %v2719, %v2796
      %v2798 = vlaneseq
      %v2799 = vshrl.u32 %v2798, 7
      %v2800 = vsub.s32 3, %v2799
      %v2801 = vrot.slane %v2719, %v2800
      %2806 = vmatprep.subr.mxu0 0.0
      %2807 = vmatpush1.msra.mxu0 %v2720
      %2808 = vmatprep.subr.mxu0 0.0
      %2809 = vmatpush1.msra.mxu0 %v2721
      %2810 = vmatprep.subr.mxu0 0.0
      %2811 = vmatpush1.msra.mxu0 %v2722
      %2812 = vmatprep.subr.mxu0 0.0
      %2813 = vmatpush1.msra.mxu0 %v2723
      %2814 = vmatprep.subr.mxu0 0.0
      %2815 = vmatpush1.msra.mxu0 %v2724
      %2816 = vmatprep.subr.mxu0 0.0
      %2817 = vmatpush1.msra.mxu0 %v2725
      %2818 = vmatprep.subr.mxu0 0.0
      %2819 = vmatpush1.msra.mxu0 %v2726
      %2820 = vmatprep.subr.mxu0 0.0
      %2821 = vmatpush1.msra.mxu0 %v2727
      %2822 = vmatprep.subr.mxu0 0.0
      %2823 = vmatpush1.msra.mxu0 %v2728
      %2824 = vmatprep.subr.mxu0 0.0
      %2825 = vmatpush1.msra.mxu0 %v2729
      %2826 = vmatprep.subr.mxu0 0.0
      %2827 = vmatpush1.msra.mxu0 %v2730
      %2828 = vmatprep.subr.mxu0 0.0
      %2829 = vmatpush1.msra.mxu0 %v2731
      %2830 = vmatprep.subr.mxu0 0.0
      %2831 = vmatpush1.msra.mxu0 %v2732
      %2832 = vmatprep.subr.mxu0 0.0
      %2833 = vmatpush1.msra.mxu0 %v2733
      %2834 = vmatprep.subr.mxu0 0.0
      %2835 = vmatpush1.msra.mxu0 %v2734
      %2836 = vmatprep.subr.mxu0 0.0
      %2837 = vmatpush1.msra.mxu0 %v2735
      %2838 = vmatprep.subr.mxu0 0.0
      %2839 = vmatpush1.msra.mxu0 %v2736
      %2840 = vmatprep.subr.mxu0 0.0
      %2841 = vmatpush1.msra.mxu0 %v2737
      %2842 = vmatprep.subr.mxu0 0.0
      %2843 = vmatpush1.msra.mxu0 %v2738
      %2844 = vmatprep.subr.mxu0 0.0
      %2845 = vmatpush1.msra.mxu0 %v2739
      %2846 = vmatprep.subr.mxu0 0.0
      %2847 = vmatpush1.msra.mxu0 %v2740
      %2848 = vmatprep.subr.mxu0 0.0
      %2849 = vmatpush1.msra.mxu0 %v2741
      %2850 = vmatprep.subr.mxu0 0.0
      %2851 = vmatpush1.msra.mxu0 %v2742
      %2852 = vmatprep.subr.mxu0 0.0
      %2853 = vmatpush1.msra.mxu0 %v2743
      %2854 = vmatprep.subr.mxu0 0.0
      %2855 = vmatpush1.msra.mxu0 %v2744
      %2856 = vmatprep.subr.mxu0 0.0
      %2857 = vmatpush1.msra.mxu0 %v2745
      %2858 = vmatprep.subr.mxu0 0.0
      %2859 = vmatpush1.msra.mxu0 %v2746
      %2860 = vmatprep.subr.mxu0 0.0
      %2861 = vmatpush1.msra.mxu0 %v2747
      %2862 = vmatprep.subr.mxu0 0.0
      %2863 = vmatpush1.msra.mxu0 %v2748
      %2864 = vmatprep.subr.mxu0 0.0
      %2865 = vmatpush1.msra.mxu0 %v2749
      %2866 = vmatprep.subr.mxu0 0.0
      %2867 = vmatpush1.msra.mxu0 %v2750
      %2868 = vmatprep.subr.mxu0 0.0
      %2869 = vmatpush1.msra.mxu0 %v2751
      %2870 = vmatprep.mubr.f32.mxu0 %v2793
      %2871 = vmatmul.mubr.f32.gmra.mrb[0].mxu0 %v2789
      %v2872 = vpop.f32.mrb[0].mxu0
      %v2873 = vadd.f32 %v2784, %v2872
      %v2874 = vpop.f32.mrb[0].mxu0
      %2875 = vdwg.mxu0
      %2876 = vmatprep.subr.mxu0 0.0
      %2877 = vmatpush1.msra.mxu0 %v2752
      %2878 = vmatprep.subr.mxu0 0.0
      %2879 = vmatpush1.msra.mxu0 %v2753
      %2880 = vmatprep.subr.mxu0 0.0
      %2881 = vmatpush1.msra.mxu0 %v2754
      %2882 = vmatprep.subr.mxu0 0.0
      %2883 = vmatpush1.msra.mxu0 %v2755
      %2884 = vmatprep.subr.mxu0 0.0
      %2885 = vmatpush1.msra.mxu0 %v2756
      %2886 = vmatprep.subr.mxu0 0.0
      %2887 = vmatpush1.msra.mxu0 %v2757
      %2888 = vmatprep.subr.mxu0 0.0
      %2889 = vmatpush1.msra.mxu0 %v2758
      %2890 = vmatprep.subr.mxu0 0.0
      %2891 = vmatpush1.msra.mxu0 %v2759
      %2892 = vmatprep.subr.mxu0 0.0
      %2893 = vmatpush1.msra.mxu0 %v2760
      %2894 = vmatprep.subr.mxu0 0.0
      %2895 = vmatpush1.msra.mxu0 %v2761
      %2896 = vmatprep.subr.mxu0 0.0
      %2897 = vmatpush1.msra.mxu0 %v2762
      %2898 = vmatprep.subr.mxu0 0.0
      %2899 = vmatpush1.msra.mxu0 %v2763
      %2900 = vmatprep.subr.mxu0 0.0
      %2901 = vmatpush1.msra.mxu0 %v2764
      %2902 = vmatprep.subr.mxu0 0.0
      %2903 = vmatpush1.msra.mxu0 %v2765
      %2904 = vmatprep.subr.mxu0 0.0
      %2905 = vmatpush1.msra.mxu0 %v2766
      %2906 = vmatprep.subr.mxu0 0.0
      %2907 = vmatpush1.msra.mxu0 %v2767
      %2908 = vmatprep.subr.mxu0 0.0
      %2909 = vmatpush1.msra.mxu0 %v2768
      %2910 = vmatprep.subr.mxu0 0.0
      %2911 = vmatpush1.msra.mxu0 %v2769
      %2912 = vmatprep.subr.mxu0 0.0
      %2913 = vmatpush1.msra.mxu0 %v2770
      %2914 = vmatprep.subr.mxu0 0.0
      %2915 = vmatpush1.msra.mxu0 %v2771
      %2916 = vmatprep.subr.mxu0 0.0
      %2917 = vmatpush1.msra.mxu0 %v2772
      %2918 = vmatprep.subr.mxu0 0.0
      %2919 = vmatpush1.msra.mxu0 %v2773
      %2920 = vmatprep.subr.mxu0 0.0
      %2921 = vmatpush1.msra.mxu0 %v2774
      %2922 = vmatprep.subr.mxu0 0.0
      %2923 = vmatpush1.msra.mxu0 %v2775
      %2924 = vmatprep.subr.mxu0 0.0
      %2925 = vmatpush1.msra.mxu0 %v2776
      %2926 = vmatprep.subr.mxu0 0.0
      %2927 = vmatpush1.msra.mxu0 %v2777
      %2928 = vmatprep.subr.mxu0 0.0
      %2929 = vmatpush1.msra.mxu0 %v2778
      %2930 = vmatprep.subr.mxu0 0.0
      %2931 = vmatpush1.msra.mxu0 %v2779
      %2932 = vmatprep.subr.mxu0 0.0
      %2933 = vmatpush1.msra.mxu0 %v2780
      %2934 = vmatprep.subr.mxu0 0.0
      %2935 = vmatpush1.msra.mxu0 %v2781
      %2936 = vmatprep.subr.mxu0 0.0
      %2937 = vmatpush1.msra.mxu0 %v2782
      %2938 = vmatprep.subr.mxu0 0.0
      %2939 = vmatpush1.msra.mxu0 %v2783
      %2940 = vmatprep.mubr.f32.mxu0 %v2801
      %2941 = vmatmul.mubr.f32.gmra.mrb[0].mxu0 %v2797
      %v2942 = vpop.f32.mrb[0].mxu0
      %v2943 = vadd.f32 %v2873, %v2942
      %v2944 = vpop.f32.mrb[0].mxu0
      %2945 = vdwg.mxu0
      %v2946 = vxor.u32 %v2943, 2147483648
      %v2947 = vmul.f32 %v2946, 1.442695
      %v2948 = vpow.pop %v2947
      %v2949 = vadd.f32 %v2948, 1.0
      %v2950 = vrcp.pop %v2949
      %v2951 = vmul.f32 1.0, %v2950
      %vm2952 = vcmask 24576
      %2953 = vst.msk [vmem:[#allocation6] sm:$0x1] %vm2952, %v2951
      %v2954 = vsub.f32 1.0, %v2951
      %2956 = vrot.lane.b32.xlu0 %v2954, 127
      %v2957 = vpop.permute.xlu0 %2956
      %v2959 = vmul.f32 %v2954, %v2957
      %2960 = vrot.lane.b32.xlu0 %v2954, 126
      %v2961 = vpop.permute.xlu0 %2960
      %v2963 = vmul.f32 %v2959, %v2961
      %2964 = vrot.lane.b32.xlu0 %v2954, 125
      %v2965 = vpop.permute.xlu0 %2964
      %v2967 = vmul.f32 %v2963, %v2965
      %2969 = vrot.lane.b32.xlu0 %v2959, 1
      %v2970 = vpop.permute.xlu0 %2969
      %2973 = vrot.lane.b32.xlu0 %v2963, 2
      %v2974 = vpop.permute.xlu0 %2973
      %2977 = vrot.lane.b32.xlu0 %v2967, 3
      %v2978 = vpop.permute.xlu0 %2977
      %v2980 = vsel %vm1970, %v2954, %v2970
      %vm2981 = vcmask 15360
      %v2982 = vsel %vm2981, %v2980, %v2974
      %vm2983 = vcmask 23552
      %v2984 = vsel %vm2983, %v2982, %v2978
      %2985 = vst.msk [vmem:[#allocation8] sm:$0x1] %vm2952, %v2984
    $region45: #{dattention_forward.1} parent=1 // pred_fallthru
      _
    // Predicated region
    $region46: #{dattention_forward.1} parent=1 // pred_check
      _
    $region47: #{dattention_forward.1} parent=1 // pred_check_branch
      %2987 = sbr.rel (0) target = $region49
    $region48: #{dattention_forward.1} parent=1 // pred_region
      %s2989 = ssub.s32 16, 16
      %2990 = vsyncadd [#allocation7], %s2989
      %s2992 = sshll.u32 [#allocation6], 4
      %s2993 = int_to_ptr.vmem [resolvable:$true] %s2992
      %2995 = dma.vmem_to_hbm [thread:$0]  %s2993, 16, %s9, [#allocation7]
    $region49: #{dattention_forward.1} parent=1 // pred_fallthru
      _
    // Predicated region
    $region50: #{dattention_forward.1} parent=1 // pred_check
      _
    $region51: #{dattention_forward.1} parent=1 // pred_check_branch
      %2997 = sbr.rel (0) target = $region53
    $region52: #{dattention_forward.1} parent=1 // pred_region
      %s2999 = ssub.s32 16, 16
      %3000 = vsyncadd [#allocation9], %s2999
      %s3002 = sshll.u32 [#allocation8], 4
      %s3003 = int_to_ptr.vmem [resolvable:$true] %s3002
      %3005 = dma.vmem_to_hbm [thread:$0]  %s3003, 16, %s10, [#allocation9]
    $region53: #{dattention_forward.1} parent=1 // pred_fallthru
      _
    // Predicated region
    $region54: #{dattention_forward.1} parent=1 // pred_check
      _
    $region55: #{dattention_forward.1} parent=1 // pred_check_branch
      %3007 = sbr.rel (0) target = $region57
    $region56: #{dattention_forward.1} parent=1 // pred_region
      %3008 = dma.done [#allocation7], 16
    $region57: #{dattention_forward.1} parent=1 // pred_fallthru
      _
    // Predicated region
    $region58: #{dattention_forward.1} parent=1 // pred_check
      _
    $region59: #{dattention_forward.1} parent=1 // pred_check_branch
      %3010 = sbr.rel (0) target = $region61
    $region60: #{dattention_forward.1} parent=1 // pred_region
      %3011 = dma.done [#allocation9], 16
    $region61: #{dattention_forward.1} parent=1 // pred_fallthru
      _
    %3012 = vsyncpa [#allocation7], 1
    %3013 = vsyncpa [#allocation9], 1

</llo_original>
